<compile_context>
chip_gen: v5e
topology: v5e:2x2
jax: 0.10.0
libtpu: 0.0.40
codegen_flags: <defaults>
</compile_context>

<pallas_src>
import functools

import numpy as np
import jax
import jax.numpy as jnp
from jax.experimental import pallas as pl
from jax.experimental.pallas import tpu as pltpu


# ----------------------------------------------------------------------------
# in-kernel helpers
# ----------------------------------------------------------------------------
def _mm(a, b):
    # bf16 x bf16 matmul with f32 accumulation (weights are already bf16).
    return jnp.dot(a.astype(jnp.bfloat16), b, preferred_element_type=jnp.float32)


def _layer_norm(x, gamma, beta, eps=1e-5):
    mu = jnp.mean(x, axis=-1, keepdims=True)
    var = jnp.mean((x - mu) ** 2, axis=-1, keepdims=True)
    return (x - mu) * jax.lax.rsqrt(var + eps) * gamma + beta


_WEIGHT_ORDER = ("emb_w", "wqkv", "bqkv", "wo", "bo", "w1", "b1", "w2", "b2",
                 "g1", "be1", "g2", "be2", "c1w", "c1b", "c2w", "c2b")


# ----------------------------------------------------------------------------
# fused forward kernel: embedding -> nb_layers encoder layers -> classifier
# (one grid step = one batch tile of graphs; weights stay VMEM-resident)
# ----------------------------------------------------------------------------
def _fused_forward_kernel(x_ref, pe_ref, kbias_ref, emb_w_ref,
                          wqkv_ref, bqkv_ref, wo_ref, bo_ref,
                          w1_ref, b1_ref, w2_ref, b2_ref,
                          g1_ref, be1_ref, g2_ref, be2_ref,
                          c1w_ref, c1b_ref, c2w_ref, c2b_ref,
                          out_ref, *, nb_heads, nb_layers):
    Bt, N, _ = x_ref.shape
    D = emb_w_ref.shape[1]
    H = nb_heads
    hd = D // H
    BN = Bt * N

    # GraphiT diffusion kernel & key-padding bias, broadcast to a head-major
    # (H*Bt, N, N) batch ONCE (JAX does not CSE broadcasts; hoist out of layers).
    pe_f = pe_ref[...].astype(jnp.float32)                                  # (Bt,N,N)
    pe_hb = jnp.broadcast_to(pe_f[None], (H, Bt, N, N)).reshape(H * Bt, N, N)
    kb = kbias_ref[...].astype(jnp.float32)                                 # (Bt,1,N)
    kb_hb = jnp.broadcast_to(kb[None], (H, Bt, 1, N)).reshape(H * Bt, 1, N)

    # token embedding (Linear, bias=False) on all Bt*N rows at once
    h = _mm(x_ref[...].reshape(BN, -1), emb_w_ref[...])                     # (BN,D) f32

    def layer_body(li, h):
        # ---- multi-head attention (GraphiT kernel-modulated) ----
        # fused QKV projection; the 1/sqrt(hd) scaling is folded into wq/bq at
        # pack time, so this is a single (BN, D) x (D, 3D) MXU pass + bias.
        qkv = _mm(h, wqkv_ref[li]) + bqkv_ref[li]                           # (BN,3D) f32
        qkv3 = qkv.reshape(Bt, N, 3 * D).astype(jnp.bfloat16)

        # per-head scores, concatenated along the batch axis -> one head-major
        # (H*Bt, N, N) tensor so bias + softmax + renorm run once for all heads.
        s_list, v_list = [], []
        for hh in range(H):
            qh = qkv3[:, :, hh * hd:(hh + 1) * hd]
            kh = qkv3[:, :, D + hh * hd:D + (hh + 1) * hd]
            v_list.append(qkv3[:, :, 2 * D + hh * hd:2 * D + (hh + 1) * hd])
            s_list.append(jnp.einsum('bqd,bkd->bqk', qh, kh,
                                     preferred_element_type=jnp.float32))
        s = jnp.concatenate(s_list, axis=0) + kb_hb                         # (H*Bt,N,N)

        # fused softmax + GraphiT renorm (algebraically identical to
        # softmax -> *pe -> /(rowsum + 1e-6)); statistics stay f32.
        m = jnp.max(s, axis=-1, keepdims=True)
        p = jnp.exp(s - m)
        sum_p = jnp.sum(p, axis=-1, keepdims=True)
        w = p * pe_hb
        denom = jnp.sum(w, axis=-1, keepdims=True) + 1e-6 * sum_p
        attn = (w * pl.reciprocal(denom, approx=True)).astype(jnp.bfloat16)

        # per-head context, re-assembled to (BN, D) so the output projection is a
        # SINGLE full-depth (D x D) matmul (no K=hd micro-matmuls, no f32 carry).
        ctx = jnp.concatenate(
            [jnp.einsum('bqk,bkd->bqd', attn[hh * Bt:(hh + 1) * Bt], v_list[hh],
                        preferred_element_type=jnp.float32) for hh in range(H)],
            axis=-1).reshape(BN, D)
        attn_out = _mm(ctx, wo_ref[li]) + bo_ref[li]

        src = _layer_norm(h + attn_out, g1_ref[li], be1_ref[li])   # dropout1 = id (eval)

        # ---- feed-forward ----
        ff = jnp.maximum(_mm(src, w1_ref[li]) + b1_ref[li], 0.0)
        ff = _mm(ff, w2_ref[li]) + b2_ref[li]
        return _layer_norm(src + ff, g2_ref[li], be2_ref[li])      # dropout2 = id (eval)

    if nb_layers <= 4:
        # short stacks: straight-line code (best for the LLO scheduler)
        for li in range(nb_layers):
            h = layer_body(li, h)
    else:
        # deep stacks: bound live ranges / compile time with a real loop
        h = jax.lax.fori_loop(0, nb_layers, layer_body, h)

    # ---- classifier (Linear -> ReLU -> Linear), lane-dense 128-wide bf16 store ----
    hc = jnp.maximum(_mm(h, c1w_ref[...]) + c1b_ref[...], 0.0)
    out = _mm(hc, c2w_ref[...]) + c2b_ref[...]                              # (BN,CPAD)
    out_ref[...] = out.reshape(Bt, N, -1).astype(out_ref.dtype)


# ----------------------------------------------------------------------------
# VMEM sizing / batch-tile choice (re-derived for v7x's 64 MiB per-TC VMEM)
# ----------------------------------------------------------------------------
_VMEM_TILE_BUDGET = 24 * 1024 * 1024   # conservative: leaves headroom on v7x (64 MiB)


def _estimate_vmem_bytes(bt, N, in_size, D, F, H, cpad, weight_bytes):
    BN = bt * N
    # double-buffered per-step tiles
    io = 2 * (BN * in_size * 2 + bt * N * N * 2 + bt * N * 4 + BN * cpad * 2)
    # live intermediates: pe_hb + a few (H*bt, N, N) f32 softmax temps + activations
    bhnn = bt * H * N * N * 4
    act = 5 * bhnn + BN * (6 * D + F) * 4
    return weight_bytes + io + act


def _choose_batch_tile(B, N, in_size, D, F, H, cpad, weight_bytes):
    # target >=256 rows per program (MXU fill on v6e/v7x), keep >=2 grid steps
    # when possible (pipelined pe DMA + v7x megacore split), respect VMEM budget.
    cap = max(1, min(B, max(1, 256 // max(N, 1))))
    if B >= 2:
        cap = min(cap, max(1, B // 2))
    best = 1
    for bt in range(1, cap + 1):
        if B % bt == 0 and _estimate_vmem_bytes(
                bt, N, in_size, D, F, H, cpad, weight_bytes) <= _VMEM_TILE_BUDGET:
            best = bt
    return best


# ----------------------------------------------------------------------------
# jitted core: preprocessing + single pallas_call, returns padded (B, N, C) logits
# ----------------------------------------------------------------------------
@functools.partial(jax.jit, static_argnames=("nb_heads", "nb_layers", "nb_class", "cpad"))
def _forward_core(weights, x, pe, masks, *, nb_heads, nb_layers, nb_class, cpad):
    B, N, in_size = x.shape
    D = weights["emb_w"].shape[1]
    F = weights["w1"].shape[2]
    H = nb_heads

    # fused (inside jit) preprocessing
    x_b = x.astype(jnp.bfloat16)
    pe_b = pe.astype(jnp.bfloat16)         # dominant HBM traffic halved; upcast in-kernel
    kbias = jnp.where(masks, -1e30, 0.0).astype(jnp.float32).reshape(B, 1, N)

    weight_args = [weights[k] for k in _WEIGHT_ORDER]
    wbytes = sum(int(np.prod(w.shape)) * w.dtype.itemsize for w in weight_args)

    bt = _choose_batch_tile(B, N, in_size, D, F, H, cpad, wbytes)
    est = _estimate_vmem_bytes(bt, N, in_size, D, F, H, cpad, wbytes)
    vmem_limit = int(min(max(2 * est, 16 * 1024 * 1024), 56 * 1024 * 1024))

    # advisory cost estimate for XLA scheduling around the custom call
    flops = 2 * B * N * in_size * D
    flops += nb_layers * (6 * B * N * D * D      # fused QKV
                          + 4 * B * N * N * D    # scores + context
                          + 2 * B * N * D * D    # output projection
                          + 4 * B * N * D * F)   # FFN
    flops += 2 * B * N * D * D + 2 * B * N * D * cpad
    transcendentals = nb_layers * H * B * N * N
    bytes_accessed = (B * N * in_size * 2 + B * N * N * 2 + B * N * 4
                      + B * N * cpad * 2 + wbytes)

    def _resident_spec(arr):
        zeros = (0,) * arr.ndim
        return pl.BlockSpec(arr.shape, lambda b, _z=zeros: _z)

    kernel = functools.partial(_fused_forward_kernel,
                               nb_heads=H, nb_layers=nb_layers)

    out = pl.pallas_call(
        kernel,
        out_shape=jax.ShapeDtypeStruct((B, N, cpad), jnp.bfloat16),
        grid=(B // bt,),
        in_specs=[pl.BlockSpec((bt, N, in_size), lambda b: (b, 0, 0)),
                  pl.BlockSpec((bt, N, N), lambda b: (b, 0, 0)),
                  pl.BlockSpec((bt, 1, N), lambda b: (b, 0, 0))]
                 + [_resident_spec(w) for w in weight_args],
        out_specs=pl.BlockSpec((bt, N, cpad), lambda b: (b, 0, 0)),
        compiler_params=pltpu.CompilerParams(
            dimension_semantics=("parallel",),
            vmem_limit_bytes=vmem_limit),
        cost_estimate=pl.CostEstimate(flops=int(flops),
                                      transcendentals=int(transcendentals),
                                      bytes_accessed=int(bytes_accessed)),
    )(x_b, pe_b, kbias, *weight_args)

    return out[:, :, :nb_class].astype(jnp.float32)    # (B, N, nb_class)


# ----------------------------------------------------------------------------
# parameter init (deterministic, PyTorch-Linear-style uniform) and packing
# ----------------------------------------------------------------------------
def _linear_init(key, out_f, in_f, bias=True):
    kw, kb = jax.random.split(key)
    bound = 1.0 / float(np.sqrt(in_f))
    w = jax.random.uniform(kw, (out_f, in_f), jnp.float32, -bound, bound)
    b = (jax.random.uniform(kb, (out_f,), jnp.float32, -bound, bound)
         if bias else jnp.zeros((out_f,), jnp.float32))
    return w, b


def init_params(key, in_size, nb_class, d_model, nb_heads, dim_feedforward, nb_layers):
    keys = jax.random.split(key, 3 + nb_layers)
    embed_w, _ = _linear_init(keys[0], d_model, in_size, bias=False)
    layers = []
    for li in range(nb_layers):
        lk = jax.random.split(keys[3 + li], 6)
        wq, bq = _linear_init(lk[0], d_model, d_model)
        wk, bk = _linear_init(lk[1], d_model, d_model)
        wv, bv = _linear_init(lk[2], d_model, d_model)
        wo, bo = _linear_init(lk[3], d_model, d_model)
        w1, b1 = _linear_init(lk[4], dim_feedforward, d_model)
        w2, b2 = _linear_init(lk[5], d_model, dim_feedforward)
        layers.append(dict(
            wq=wq, bq=bq, wk=wk, bk=bk, wv=wv, bv=bv, wo=wo, bo=bo,
            w1=w1, b1=b1, w2=w2, b2=b2,
            g1=jnp.ones((d_model,), jnp.float32), be1=jnp.zeros((d_model,), jnp.float32),
            g2=jnp.ones((d_model,), jnp.float32), be2=jnp.zeros((d_model,), jnp.float32)))
    cls1_w, cls1_b = _linear_init(keys[1], d_model, d_model)
    cls2_w, cls2_b = _linear_init(keys[2], nb_class, d_model)
    return dict(embed_w=embed_w, layers=layers,
                cls1_w=cls1_w, cls1_b=cls1_b, cls2_w=cls2_w, cls2_b=cls2_b)


def pack_params(params, nb_heads):
    """Transpose to (in, out), fuse QKV (scaling folded into Q), stack over layers,
    cast matmul weights to bf16, pad classifier output lanes to a multiple of 128."""
    # TODO(synk): optional fp8 weight quantization for the v7x MXU (needs accuracy check).
    bf = jnp.bfloat16
    layers = params["layers"]
    L = len(layers)
    D = params["embed_w"].shape[0]
    hd = D // nb_heads
    scale = 1.0 / float(np.sqrt(hd))

    def stack(fn):
        return jnp.stack([fn(lp) for lp in layers])

    weights = dict(
        emb_w=params["embed_w"].T.astype(bf),                                   # (in, D)
        wqkv=stack(lambda p: jnp.concatenate(
            [p["wq"].T * scale, p["wk"].T, p["wv"].T], axis=1).astype(bf)),     # (L, D, 3D)
        bqkv=stack(lambda p: jnp.concatenate(
            [p["bq"] * scale, p["bk"], p["bv"]]).reshape(1, -1)),               # (L, 1, 3D)
        wo=stack(lambda p: p["wo"].T.astype(bf)),                               # (L, D, D)
        bo=stack(lambda p: p["bo"].reshape(1, -1)),
        w1=stack(lambda p: p["w1"].T.astype(bf)),                               # (L, D, F)
        b1=stack(lambda p: p["b1"].reshape(1, -1)),
        w2=stack(lambda p: p["w2"].T.astype(bf)),                               # (L, F, D)
        b2=stack(lambda p: p["b2"].reshape(1, -1)),
        g1=stack(lambda p: p["g1"].reshape(1, -1)),
        be1=stack(lambda p: p["be1"].reshape(1, -1)),
        g2=stack(lambda p: p["g2"].reshape(1, -1)),
        be2=stack(lambda p: p["be2"].reshape(1, -1)),
        c1w=params["cls1_w"].T.astype(bf),                                      # (D, D)
        c1b=params["cls1_b"].reshape(1, -1),
    )
    nb_class = params["cls2_w"].shape[0]
    cpad = ((nb_class + 127) // 128) * 128
    weights["c2w"] = jnp.pad(params["cls2_w"].T, ((0, 0), (0, cpad - nb_class))).astype(bf)
    weights["c2b"] = jnp.pad(params["cls2_b"], (0, cpad - nb_class)).reshape(1, -1)
    cfg = dict(nb_class=nb_class, cpad=cpad, nb_layers=L, nb_heads=nb_heads)
    return weights, cfg


# ----------------------------------------------------------------------------
# full forward (mirrors DiffGraphTransformerSBM.forward, eval mode)
# ----------------------------------------------------------------------------
def diff_graph_transformer_sbm_forward(weights, cfg, x, edge_index, batch, feature_indices,
                                       masks, pe, x_lap_pos_enc=None, degree=None):
    # edge_index / batch / feature_indices are unused by the reference forward;
    # lap_pos_enc=False and degree=None (defaults) so those branches are skipped.
    del edge_index, batch, feature_indices, x_lap_pos_enc, degree
    logits = _forward_core(weights, x, pe, masks,
                           nb_heads=cfg["nb_heads"], nb_layers=cfg["nb_layers"],
                           nb_class=cfg["nb_class"], cpad=cfg["cpad"])
    # cls_output[~masks]: dynamic-size boolean select on the concrete result
    # (kept outside the jitted hot path, matching the reference semantics).
    return logits[~masks]


# ----------------------------------------------------------------------------
if __name__ == "__main__":
    # small shapes consistent with the module
    B, N, in_size = 4, 8, 4
    d_model, nb_heads, dim_ff, nb_layers, nb_class = 32, 4, 64, 2, 4

    key = jax.random.PRNGKey(0)
    kx, kpe, kp = jax.random.split(key, 3)

    x = jax.random.normal(kx, (B, N, in_size), jnp.float32)
    # positive diffusion kernel per graph (heat-kernel-like), row-normalized
    pe = jax.nn.softmax(jax.random.normal(kpe, (B, N, N), jnp.float32), axis=-1)
    # key-padding masks: True = padded node
    masks = jnp.array([[False] * 6 + [True] * 2,
                       [False] * 8,
                       [False] * 7 + [True],
                       [False] * 8])
    # unused-by-forward placeholders
    edge_index = jnp.zeros((2, 1), jnp.int32)
    batch_vec = jnp.zeros((B * N,), jnp.int32)
    feature_indices = jnp.zeros((B * N,), jnp.int32)

    params = init_params(kp, in_size, nb_class, d_model, nb_heads, dim_ff, nb_layers)
    weights, cfg = pack_params(params, nb_heads)

    out = diff_graph_transformer_sbm_forward(
        weights, cfg, x, edge_index, batch_vec, feature_indices, masks, pe)
    out = jax.block_until_ready(out)
    assert out.shape == (int((~masks).sum()), nb_class)
    assert bool(jnp.all(jnp.isfinite(out)))
    # TODO(synk): dropout layers are identity (eval-mode semantics); training-mode
    # dropout and the lap_pos_enc / degree branches (defaults off) are not modeled.
    print("KERNEL_OK")
</pallas_src>

<mosaic_0001>
module attributes {stable_mosaic.version = 11 : i64} {
  func.func @_fused_forward_kernel(%arg0: i32, %arg1: memref<2x8x4xbf16, #tpu.memory_space<vmem>>, %arg2: memref<2x8x8xbf16, #tpu.memory_space<vmem>>, %arg3: memref<2x1x8xf32, #tpu.memory_space<vmem>>, %arg4: memref<4x32xbf16, #tpu.memory_space<vmem>>, %arg5: memref<2x32x96xbf16, #tpu.memory_space<vmem>>, %arg6: memref<2x1x96xf32, #tpu.memory_space<vmem>>, %arg7: memref<2x32x32xbf16, #tpu.memory_space<vmem>>, %arg8: memref<2x1x32xf32, #tpu.memory_space<vmem>>, %arg9: memref<2x32x64xbf16, #tpu.memory_space<vmem>>, %arg10: memref<2x1x64xf32, #tpu.memory_space<vmem>>, %arg11: memref<2x64x32xbf16, #tpu.memory_space<vmem>>, %arg12: memref<2x1x32xf32, #tpu.memory_space<vmem>>, %arg13: memref<2x1x32xf32, #tpu.memory_space<vmem>>, %arg14: memref<2x1x32xf32, #tpu.memory_space<vmem>>, %arg15: memref<2x1x32xf32, #tpu.memory_space<vmem>>, %arg16: memref<2x1x32xf32, #tpu.memory_space<vmem>>, %arg17: memref<32x32xbf16, #tpu.memory_space<vmem>>, %arg18: memref<1x32xf32, #tpu.memory_space<vmem>>, %arg19: memref<32x128xbf16, #tpu.memory_space<vmem>>, %arg20: memref<1x128xf32, #tpu.memory_space<vmem>>, %arg21: memref<2x8x128xbf16, #tpu.memory_space<vmem>>) attributes {dimension_semantics = [#tpu.dimension_semantics<parallel>], iteration_bounds = array<i64: 2>, scalar_prefetch = 0 : i64, scratch_operands = 0 : i64, tpu.core_type = #tpu.core_type<tc>, window_params = [{transform_indices = @transform_0, window_bounds = array<i64: 2, 8, 4>}, {transform_indices = @transform_1, window_bounds = array<i64: 2, 8, 8>}, {transform_indices = @transform_2, window_bounds = array<i64: 2, 1, 8>}, {pipeline_mode = #tpu.pipeline_mode<synchronous>, transform_indices = @transform_3, window_bounds = array<i64: 4, 32>}, {pipeline_mode = #tpu.pipeline_mode<synchronous>, transform_indices = @transform_4, window_bounds = array<i64: 2, 32, 96>}, {pipeline_mode = #tpu.pipeline_mode<synchronous>, transform_indices = @transform_5, window_bounds = array<i64: 2, 1, 96>}, {pipeline_mode = #tpu.pipeline_mode<synchronous>, transform_indices = @transform_6, window_bounds = array<i64: 2, 32, 32>}, {pipeline_mode = #tpu.pipeline_mode<synchronous>, transform_indices = @transform_7, window_bounds = array<i64: 2, 1, 32>}, {pipeline_mode = #tpu.pipeline_mode<synchronous>, transform_indices = @transform_8, window_bounds = array<i64: 2, 32, 64>}, {pipeline_mode = #tpu.pipeline_mode<synchronous>, transform_indices = @transform_9, window_bounds = array<i64: 2, 1, 64>}, {pipeline_mode = #tpu.pipeline_mode<synchronous>, transform_indices = @transform_10, window_bounds = array<i64: 2, 64, 32>}, {pipeline_mode = #tpu.pipeline_mode<synchronous>, transform_indices = @transform_11, window_bounds = array<i64: 2, 1, 32>}, {pipeline_mode = #tpu.pipeline_mode<synchronous>, transform_indices = @transform_12, window_bounds = array<i64: 2, 1, 32>}, {pipeline_mode = #tpu.pipeline_mode<synchronous>, transform_indices = @transform_13, window_bounds = array<i64: 2, 1, 32>}, {pipeline_mode = #tpu.pipeline_mode<synchronous>, transform_indices = @transform_14, window_bounds = array<i64: 2, 1, 32>}, {pipeline_mode = #tpu.pipeline_mode<synchronous>, transform_indices = @transform_15, window_bounds = array<i64: 2, 1, 32>}, {pipeline_mode = #tpu.pipeline_mode<synchronous>, transform_indices = @transform_16, window_bounds = array<i64: 32, 32>}, {pipeline_mode = #tpu.pipeline_mode<synchronous>, transform_indices = @transform_17, window_bounds = array<i64: 1, 32>}, {pipeline_mode = #tpu.pipeline_mode<synchronous>, transform_indices = @transform_18, window_bounds = array<i64: 32, 128>}, {pipeline_mode = #tpu.pipeline_mode<synchronous>, transform_indices = @transform_19, window_bounds = array<i64: 1, 128>}, {transform_indices = @transform_20, window_bounds = array<i64: 2, 8, 128>}]} {
    %c0 = arith.constant 0 : index
    %c0_0 = arith.constant 0 : index
    %c0_1 = arith.constant 0 : index
    %0 = vector.load %arg2[%c0, %c0_0, %c0_1] : memref<2x8x8xbf16, #tpu.memory_space<vmem>>, vector<2x8x8xbf16>
    %1 = arith.extf %0 : vector<2x8x8xbf16> to vector<2x8x8xf32>
    %2 = vector.shape_cast %1 : vector<2x8x8xf32> to vector<1x2x8x8xf32>
    %3 = vector.shape_cast %2 : vector<1x2x8x8xf32> to vector<1x2x8x8xf32>
    %4 = vector.broadcast %3 : vector<1x2x8x8xf32> to vector<4x2x8x8xf32>
    %5 = vector.shape_cast %4 : vector<4x2x8x8xf32> to vector<8x8x8xf32>
    %c0_2 = arith.constant 0 : index
    %c0_3 = arith.constant 0 : index
    %c0_4 = arith.constant 0 : index
    %6 = vector.load %arg3[%c0_2, %c0_3, %c0_4] : memref<2x1x8xf32, #tpu.memory_space<vmem>>, vector<2x1x8xf32>
    %7 = vector.shape_cast %6 : vector<2x1x8xf32> to vector<1x2x1x8xf32>
    %8 = vector.shape_cast %7 : vector<1x2x1x8xf32> to vector<1x2x1x8xf32>
    %9 = vector.broadcast %8 : vector<1x2x1x8xf32> to vector<4x2x1x8xf32>
    %10 = vector.shape_cast %9 : vector<4x2x1x8xf32> to vector<8x1x8xf32>
    %c0_5 = arith.constant 0 : index
    %c0_6 = arith.constant 0 : index
    %c0_7 = arith.constant 0 : index
    %11 = vector.load %arg1[%c0_5, %c0_6, %c0_7] : memref<2x8x4xbf16, #tpu.memory_space<vmem>>, vector<2x8x4xbf16>
    %12 = vector.shape_cast %11 : vector<2x8x4xbf16> to vector<16x4xbf16>
    %c0_8 = arith.constant 0 : index
    %c0_9 = arith.constant 0 : index
    %13 = vector.load %arg4[%c0_8, %c0_9] : memref<4x32xbf16, #tpu.memory_space<vmem>>, vector<4x32xbf16>
    %cst = arith.constant dense<0.000000e+00> : vector<16x32xf32>
    %14 = tpu.matmul %12, %13, %cst {dimension_numbers = #tpu.dot_dimension_numbers<[1], [0], [0], [1], [0, 0, 1, 1], [], []>} : vector<16x4xbf16>, vector<4x32xbf16>, vector<16x32xf32> -> vector<16x32xf32>
    %c0_10 = arith.constant 0 : index
    %c0_11 = arith.constant 0 : index
    %c0_12 = arith.constant 0 : index
    %15 = vector.load %arg5[%c0_10, %c0_11, %c0_12] : memref<2x32x96xbf16, #tpu.memory_space<vmem>>, vector<1x32x96xbf16>
    %16 = vector.shape_cast %15 : vector<1x32x96xbf16> to vector<32x96xbf16>
    %17 = arith.truncf %14 : vector<16x32xf32> to vector<16x32xbf16>
    %cst_13 = arith.constant dense<0.000000e+00> : vector<16x96xf32>
    %18 = tpu.matmul %17, %16, %cst_13 {dimension_numbers = #tpu.dot_dimension_numbers<[1], [0], [0], [1], [0, 0, 1, 1], [], []>} : vector<16x32xbf16>, vector<32x96xbf16>, vector<16x96xf32> -> vector<16x96xf32>
    %c0_14 = arith.constant 0 : index
    %c0_15 = arith.constant 0 : index
    %c0_16 = arith.constant 0 : index
    %19 = vector.load %arg6[%c0_14, %c0_15, %c0_16] : memref<2x1x96xf32, #tpu.memory_space<vmem>>, vector<1x1x96xf32>
    %20 = vector.shape_cast %19 : vector<1x1x96xf32> to vector<1x96xf32>
    %21 = vector.broadcast %20 : vector<1x96xf32> to vector<16x96xf32>
    %22 = arith.addf %18, %21 : vector<16x96xf32>
    %23 = vector.shape_cast %22 : vector<16x96xf32> to vector<2x8x96xf32>
    %24 = arith.truncf %23 : vector<2x8x96xf32> to vector<2x8x96xbf16>
    %25 = vector.extract_strided_slice %24 {offsets = [0, 0, 0], sizes = [2, 8, 8], strides = [1, 1, 1]} : vector<2x8x96xbf16> to vector<2x8x8xbf16>
    %26 = vector.extract_strided_slice %24 {offsets = [0, 0, 32], sizes = [2, 8, 8], strides = [1, 1, 1]} : vector<2x8x96xbf16> to vector<2x8x8xbf16>
    %27 = vector.extract_strided_slice %24 {offsets = [0, 0, 64], sizes = [2, 8, 8], strides = [1, 1, 1]} : vector<2x8x96xbf16> to vector<2x8x8xbf16>
    "tpu.trace_start"() <{level = 10 : i32, message = "bqd,bkd->bqk"}> : () -> ()
    %cst_17 = arith.constant dense<0.000000e+00> : vector<2x8x8xf32>
    %28 = tpu.matmul %25, %26, %cst_17 {dimension_numbers = #tpu.dot_dimension_numbers<[2], [2], [1], [1], [0, 0, 0, 1, 1, 1], [0], [0]>} : vector<2x8x8xbf16>, vector<2x8x8xbf16>, vector<2x8x8xf32> -> vector<2x8x8xf32>
    "tpu.trace_stop"() : () -> ()
    %29 = vector.extract_strided_slice %24 {offsets = [0, 0, 8], sizes = [2, 8, 8], strides = [1, 1, 1]} : vector<2x8x96xbf16> to vector<2x8x8xbf16>
    %30 = vector.extract_strided_slice %24 {offsets = [0, 0, 40], sizes = [2, 8, 8], strides = [1, 1, 1]} : vector<2x8x96xbf16> to vector<2x8x8xbf16>
    %31 = vector.extract_strided_slice %24 {offsets = [0, 0, 72], sizes = [2, 8, 8], strides = [1, 1, 1]} : vector<2x8x96xbf16> to vector<2x8x8xbf16>
    "tpu.trace_start"() <{level = 10 : i32, message = "bqd,bkd->bqk"}> : () -> ()
    %cst_18 = arith.constant dense<0.000000e+00> : vector<2x8x8xf32>
    %32 = tpu.matmul %29, %30, %cst_18 {dimension_numbers = #tpu.dot_dimension_numbers<[2], [2], [1], [1], [0, 0, 0, 1, 1, 1], [0], [0]>} : vector<2x8x8xbf16>, vector<2x8x8xbf16>, vector<2x8x8xf32> -> vector<2x8x8xf32>
    "tpu.trace_stop"() : () -> ()
    %33 = vector.extract_strided_slice %24 {offsets = [0, 0, 16], sizes = [2, 8, 8], strides = [1, 1, 1]} : vector<2x8x96xbf16> to vector<2x8x8xbf16>
    %34 = vector.extract_strided_slice %24 {offsets = [0, 0, 48], sizes = [2, 8, 8], strides = [1, 1, 1]} : vector<2x8x96xbf16> to vector<2x8x8xbf16>
    %35 = vector.extract_strided_slice %24 {offsets = [0, 0, 80], sizes = [2, 8, 8], strides = [1, 1, 1]} : vector<2x8x96xbf16> to vector<2x8x8xbf16>
    "tpu.trace_start"() <{level = 10 : i32, message = "bqd,bkd->bqk"}> : () -> ()
    %cst_19 = arith.constant dense<0.000000e+00> : vector<2x8x8xf32>
    %36 = tpu.matmul %33, %34, %cst_19 {dimension_numbers = #tpu.dot_dimension_numbers<[2], [2], [1], [1], [0, 0, 0, 1, 1, 1], [0], [0]>} : vector<2x8x8xbf16>, vector<2x8x8xbf16>, vector<2x8x8xf32> -> vector<2x8x8xf32>
    "tpu.trace_stop"() : () -> ()
    %37 = vector.extract_strided_slice %24 {offsets = [0, 0, 24], sizes = [2, 8, 8], strides = [1, 1, 1]} : vector<2x8x96xbf16> to vector<2x8x8xbf16>
    %38 = vector.extract_strided_slice %24 {offsets = [0, 0, 56], sizes = [2, 8, 8], strides = [1, 1, 1]} : vector<2x8x96xbf16> to vector<2x8x8xbf16>
    %39 = vector.extract_strided_slice %24 {offsets = [0, 0, 88], sizes = [2, 8, 8], strides = [1, 1, 1]} : vector<2x8x96xbf16> to vector<2x8x8xbf16>
    "tpu.trace_start"() <{level = 10 : i32, message = "bqd,bkd->bqk"}> : () -> ()
    %cst_20 = arith.constant dense<0.000000e+00> : vector<2x8x8xf32>
    %40 = tpu.matmul %37, %38, %cst_20 {dimension_numbers = #tpu.dot_dimension_numbers<[2], [2], [1], [1], [0, 0, 0, 1, 1, 1], [0], [0]>} : vector<2x8x8xbf16>, vector<2x8x8xbf16>, vector<2x8x8xf32> -> vector<2x8x8xf32>
    "tpu.trace_stop"() : () -> ()
    %41 = tpu.concatenate %28, %32, %36, %40 in 0 : vector<2x8x8xf32>, vector<2x8x8xf32>, vector<2x8x8xf32>, vector<2x8x8xf32> -> vector<8x8x8xf32>
    %42 = vector.broadcast %10 : vector<8x1x8xf32> to vector<8x8x8xf32>
    %43 = arith.addf %41, %42 : vector<8x8x8xf32>
    %cst_21 = arith.constant dense<0xFF800000> : vector<8x8xf32>
    %44 = vector.multi_reduction <maximumf>, %43, %cst_21 [2] : vector<8x8x8xf32> to vector<8x8xf32>
    %45 = vector.shape_cast %44 : vector<8x8xf32> to vector<8x8x1xf32>
    %46 = vector.broadcast %45 : vector<8x8x1xf32> to vector<8x8x8xf32>
    %47 = arith.subf %43, %46 : vector<8x8x8xf32>
    %48 = math.exp %47 : vector<8x8x8xf32>
    %cst_22 = arith.constant dense<0.000000e+00> : vector<8x8xf32>
    %49 = vector.multi_reduction <add>, %48, %cst_22 [2] : vector<8x8x8xf32> to vector<8x8xf32>
    %50 = vector.shape_cast %49 : vector<8x8xf32> to vector<8x8x1xf32>
    %51 = arith.mulf %48, %5 : vector<8x8x8xf32>
    %cst_23 = arith.constant dense<0.000000e+00> : vector<8x8xf32>
    %52 = vector.multi_reduction <add>, %51, %cst_23 [2] : vector<8x8x8xf32> to vector<8x8xf32>
    %53 = vector.shape_cast %52 : vector<8x8xf32> to vector<8x8x1xf32>
    %cst_24 = arith.constant 9.99999997E-7 : f32
    %54 = vector.broadcast %cst_24 : f32 to vector<8x8x1xf32>
    %55 = arith.mulf %54, %50 : vector<8x8x1xf32>
    %56 = arith.addf %53, %55 : vector<8x8x1xf32>
    %57 = tpu.reciprocal %56 {approx = true} : vector<8x8x1xf32> -> vector<8x8x1xf32>
    %58 = vector.broadcast %57 : vector<8x8x1xf32> to vector<8x8x8xf32>
    %59 = arith.mulf %51, %58 : vector<8x8x8xf32>
    %60 = arith.truncf %59 : vector<8x8x8xf32> to vector<8x8x8xbf16>
    %61 = vector.extract_strided_slice %60 {offsets = [0, 0, 0], sizes = [2, 8, 8], strides = [1, 1, 1]} : vector<8x8x8xbf16> to vector<2x8x8xbf16>
    "tpu.trace_start"() <{level = 10 : i32, message = "bqk,bkd->bqd"}> : () -> ()
    %cst_25 = arith.constant dense<0.000000e+00> : vector<2x8x8xf32>
    %62 = tpu.matmul %61, %27, %cst_25 {dimension_numbers = #tpu.dot_dimension_numbers<[2], [1], [1], [2], [0, 0, 0, 1, 1, 2], [0], [0]>} : vector<2x8x8xbf16>, vector<2x8x8xbf16>, vector<2x8x8xf32> -> vector<2x8x8xf32>
    "tpu.trace_stop"() : () -> ()
    %63 = vector.extract_strided_slice %60 {offsets = [2, 0, 0], sizes = [2, 8, 8], strides = [1, 1, 1]} : vector<8x8x8xbf16> to vector<2x8x8xbf16>
    "tpu.trace_start"() <{level = 10 : i32, message = "bqk,bkd->bqd"}> : () -> ()
    %cst_26 = arith.constant dense<0.000000e+00> : vector<2x8x8xf32>
    %64 = tpu.matmul %63, %31, %cst_26 {dimension_numbers = #tpu.dot_dimension_numbers<[2], [1], [1], [2], [0, 0, 0, 1, 1, 2], [0], [0]>} : vector<2x8x8xbf16>, vector<2x8x8xbf16>, vector<2x8x8xf32> -> vector<2x8x8xf32>
    "tpu.trace_stop"() : () -> ()
    %65 = vector.extract_strided_slice %60 {offsets = [4, 0, 0], sizes = [2, 8, 8], strides = [1, 1, 1]} : vector<8x8x8xbf16> to vector<2x8x8xbf16>
    "tpu.trace_start"() <{level = 10 : i32, message = "bqk,bkd->bqd"}> : () -> ()
    %cst_27 = arith.constant dense<0.000000e+00> : vector<2x8x8xf32>
    %66 = tpu.matmul %65, %35, %cst_27 {dimension_numbers = #tpu.dot_dimension_numbers<[2], [1], [1], [2], [0, 0, 0, 1, 1, 2], [0], [0]>} : vector<2x8x8xbf16>, vector<2x8x8xbf16>, vector<2x8x8xf32> -> vector<2x8x8xf32>
    "tpu.trace_stop"() : () -> ()
    %67 = vector.extract_strided_slice %60 {offsets = [6, 0, 0], sizes = [2, 8, 8], strides = [1, 1, 1]} : vector<8x8x8xbf16> to vector<2x8x8xbf16>
    "tpu.trace_start"() <{level = 10 : i32, message = "bqk,bkd->bqd"}> : () -> ()
    %cst_28 = arith.constant dense<0.000000e+00> : vector<2x8x8xf32>
    %68 = tpu.matmul %67, %39, %cst_28 {dimension_numbers = #tpu.dot_dimension_numbers<[2], [1], [1], [2], [0, 0, 0, 1, 1, 2], [0], [0]>} : vector<2x8x8xbf16>, vector<2x8x8xbf16>, vector<2x8x8xf32> -> vector<2x8x8xf32>
    "tpu.trace_stop"() : () -> ()
    %69 = tpu.concatenate %62, %64, %66, %68 in 2 : vector<2x8x8xf32>, vector<2x8x8xf32>, vector<2x8x8xf32>, vector<2x8x8xf32> -> vector<2x8x32xf32>
    %70 = vector.shape_cast %69 : vector<2x8x32xf32> to vector<16x32xf32>
    %c0_29 = arith.constant 0 : index
    %c0_30 = arith.constant 0 : index
    %c0_31 = arith.constant 0 : index
    %71 = vector.load %arg7[%c0_29, %c0_30, %c0_31] : memref<2x32x32xbf16, #tpu.memory_space<vmem>>, vector<1x32x32xbf16>
    %72 = vector.shape_cast %71 : vector<1x32x32xbf16> to vector<32x32xbf16>
    %73 = arith.truncf %70 : vector<16x32xf32> to vector<16x32xbf16>
    %cst_32 = arith.constant dense<0.000000e+00> : vector<16x32xf32>
    %74 = tpu.matmul %73, %72, %cst_32 {dimension_numbers = #tpu.dot_dimension_numbers<[1], [0], [0], [1], [0, 0, 1, 1], [], []>} : vector<16x32xbf16>, vector<32x32xbf16>, vector<16x32xf32> -> vector<16x32xf32>
    %c0_33 = arith.constant 0 : index
    %c0_34 = arith.constant 0 : index
    %c0_35 = arith.constant 0 : index
    %75 = vector.load %arg8[%c0_33, %c0_34, %c0_35] : memref<2x1x32xf32, #tpu.memory_space<vmem>>, vector<1x1x32xf32>
    %76 = vector.shape_cast %75 : vector<1x1x32xf32> to vector<1x32xf32>
    %77 = vector.broadcast %76 : vector<1x32xf32> to vector<16x32xf32>
    %78 = arith.addf %74, %77 : vector<16x32xf32>
    %79 = arith.addf %14, %78 : vector<16x32xf32>
    %c0_36 = arith.constant 0 : index
    %c0_37 = arith.constant 0 : index
    %c0_38 = arith.constant 0 : index
    %80 = vector.load %arg13[%c0_36, %c0_37, %c0_38] : memref<2x1x32xf32, #tpu.memory_space<vmem>>, vector<1x1x32xf32>
    %81 = vector.shape_cast %80 : vector<1x1x32xf32> to vector<1x32xf32>
    %c0_39 = arith.constant 0 : index
    %c0_40 = arith.constant 0 : index
    %c0_41 = arith.constant 0 : index
    %82 = vector.load %arg14[%c0_39, %c0_40, %c0_41] : memref<2x1x32xf32, #tpu.memory_space<vmem>>, vector<1x1x32xf32>
    %83 = vector.shape_cast %82 : vector<1x1x32xf32> to vector<1x32xf32>
    %cst_42 = arith.constant dense<0.000000e+00> : vector<16xf32>
    %84 = vector.multi_reduction <add>, %79, %cst_42 [1] : vector<16x32xf32> to vector<16xf32>
    %85 = vector.shape_cast %84 : vector<16xf32> to vector<16x1xf32>
    %cst_43 = arith.constant 3.200000e+01 : f32
    %86 = vector.broadcast %cst_43 : f32 to vector<16x1xf32>
    %87 = arith.divf %85, %86 : vector<16x1xf32>
    %88 = vector.broadcast %87 : vector<16x1xf32> to vector<16x32xf32>
    %89 = arith.subf %79, %88 : vector<16x32xf32>
    %90 = arith.mulf %89, %89 : vector<16x32xf32>
    %cst_44 = arith.constant dense<0.000000e+00> : vector<16xf32>
    %91 = vector.multi_reduction <add>, %90, %cst_44 [1] : vector<16x32xf32> to vector<16xf32>
    %92 = vector.shape_cast %91 : vector<16xf32> to vector<16x1xf32>
    %cst_45 = arith.constant 3.200000e+01 : f32
    %93 = vector.broadcast %cst_45 : f32 to vector<16x1xf32>
    %94 = arith.divf %92, %93 : vector<16x1xf32>
    %95 = vector.broadcast %87 : vector<16x1xf32> to vector<16x32xf32>
    %96 = arith.subf %79, %95 : vector<16x32xf32>
    %cst_46 = arith.constant 9.99999974E-6 : f32
    %97 = vector.broadcast %cst_46 : f32 to vector<16x1xf32>
    %98 = arith.addf %94, %97 : vector<16x1xf32>
    %99 = math.rsqrt %98 : vector<16x1xf32>
    %100 = vector.broadcast %99 : vector<16x1xf32> to vector<16x32xf32>
    %101 = arith.mulf %96, %100 : vector<16x32xf32>
    %102 = vector.broadcast %81 : vector<1x32xf32> to vector<16x32xf32>
    %103 = arith.mulf %101, %102 : vector<16x32xf32>
    %104 = vector.broadcast %83 : vector<1x32xf32> to vector<16x32xf32>
    %105 = arith.addf %103, %104 : vector<16x32xf32>
    %c0_47 = arith.constant 0 : index
    %c0_48 = arith.constant 0 : index
    %c0_49 = arith.constant 0 : index
    %106 = vector.load %arg9[%c0_47, %c0_48, %c0_49] : memref<2x32x64xbf16, #tpu.memory_space<vmem>>, vector<1x32x64xbf16>
    %107 = vector.shape_cast %106 : vector<1x32x64xbf16> to vector<32x64xbf16>
    %108 = arith.truncf %105 : vector<16x32xf32> to vector<16x32xbf16>
    %cst_50 = arith.constant dense<0.000000e+00> : vector<16x64xf32>
    %109 = tpu.matmul %108, %107, %cst_50 {dimension_numbers = #tpu.dot_dimension_numbers<[1], [0], [0], [1], [0, 0, 1, 1], [], []>} : vector<16x32xbf16>, vector<32x64xbf16>, vector<16x64xf32> -> vector<16x64xf32>
    %c0_51 = arith.constant 0 : index
    %c0_52 = arith.constant 0 : index
    %c0_53 = arith.constant 0 : index
    %110 = vector.load %arg10[%c0_51, %c0_52, %c0_53] : memref<2x1x64xf32, #tpu.memory_space<vmem>>, vector<1x1x64xf32>
    %111 = vector.shape_cast %110 : vector<1x1x64xf32> to vector<1x64xf32>
    %112 = vector.broadcast %111 : vector<1x64xf32> to vector<16x64xf32>
    %113 = arith.addf %109, %112 : vector<16x64xf32>
    %cst_54 = arith.constant 0.000000e+00 : f32
    %114 = vector.broadcast %cst_54 : f32 to vector<16x64xf32>
    %115 = arith.maximumf %113, %114 : vector<16x64xf32>
    %c0_55 = arith.constant 0 : index
    %c0_56 = arith.constant 0 : index
    %c0_57 = arith.constant 0 : index
    %116 = vector.load %arg11[%c0_55, %c0_56, %c0_57] : memref<2x64x32xbf16, #tpu.memory_space<vmem>>, vector<1x64x32xbf16>
    %117 = vector.shape_cast %116 : vector<1x64x32xbf16> to vector<64x32xbf16>
    %118 = arith.truncf %115 : vector<16x64xf32> to vector<16x64xbf16>
    %cst_58 = arith.constant dense<0.000000e+00> : vector<16x32xf32>
    %119 = tpu.matmul %118, %117, %cst_58 {dimension_numbers = #tpu.dot_dimension_numbers<[1], [0], [0], [1], [0, 0, 1, 1], [], []>} : vector<16x64xbf16>, vector<64x32xbf16>, vector<16x32xf32> -> vector<16x32xf32>
    %c0_59 = arith.constant 0 : index
    %c0_60 = arith.constant 0 : index
    %c0_61 = arith.constant 0 : index
    %120 = vector.load %arg12[%c0_59, %c0_60, %c0_61] : memref<2x1x32xf32, #tpu.memory_space<vmem>>, vector<1x1x32xf32>
    %121 = vector.shape_cast %120 : vector<1x1x32xf32> to vector<1x32xf32>
    %122 = vector.broadcast %121 : vector<1x32xf32> to vector<16x32xf32>
    %123 = arith.addf %119, %122 : vector<16x32xf32>
    %124 = arith.addf %105, %123 : vector<16x32xf32>
    %c0_62 = arith.constant 0 : index
    %c0_63 = arith.constant 0 : index
    %c0_64 = arith.constant 0 : index
    %125 = vector.load %arg15[%c0_62, %c0_63, %c0_64] : memref<2x1x32xf32, #tpu.memory_space<vmem>>, vector<1x1x32xf32>
    %126 = vector.shape_cast %125 : vector<1x1x32xf32> to vector<1x32xf32>
    %c0_65 = arith.constant 0 : index
    %c0_66 = arith.constant 0 : index
    %c0_67 = arith.constant 0 : index
    %127 = vector.load %arg16[%c0_65, %c0_66, %c0_67] : memref<2x1x32xf32, #tpu.memory_space<vmem>>, vector<1x1x32xf32>
    %128 = vector.shape_cast %127 : vector<1x1x32xf32> to vector<1x32xf32>
    %cst_68 = arith.constant dense<0.000000e+00> : vector<16xf32>
    %129 = vector.multi_reduction <add>, %124, %cst_68 [1] : vector<16x32xf32> to vector<16xf32>
    %130 = vector.shape_cast %129 : vector<16xf32> to vector<16x1xf32>
    %cst_69 = arith.constant 3.200000e+01 : f32
    %131 = vector.broadcast %cst_69 : f32 to vector<16x1xf32>
    %132 = arith.divf %130, %131 : vector<16x1xf32>
    %133 = vector.broadcast %132 : vector<16x1xf32> to vector<16x32xf32>
    %134 = arith.subf %124, %133 : vector<16x32xf32>
    %135 = arith.mulf %134, %134 : vector<16x32xf32>
    %cst_70 = arith.constant dense<0.000000e+00> : vector<16xf32>
    %136 = vector.multi_reduction <add>, %135, %cst_70 [1] : vector<16x32xf32> to vector<16xf32>
    %137 = vector.shape_cast %136 : vector<16xf32> to vector<16x1xf32>
    %cst_71 = arith.constant 3.200000e+01 : f32
    %138 = vector.broadcast %cst_71 : f32 to vector<16x1xf32>
    %139 = arith.divf %137, %138 : vector<16x1xf32>
    %140 = vector.broadcast %132 : vector<16x1xf32> to vector<16x32xf32>
    %141 = arith.subf %124, %140 : vector<16x32xf32>
    %cst_72 = arith.constant 9.99999974E-6 : f32
    %142 = vector.broadcast %cst_72 : f32 to vector<16x1xf32>
    %143 = arith.addf %139, %142 : vector<16x1xf32>
    %144 = math.rsqrt %143 : vector<16x1xf32>
    %145 = vector.broadcast %144 : vector<16x1xf32> to vector<16x32xf32>
    %146 = arith.mulf %141, %145 : vector<16x32xf32>
    %147 = vector.broadcast %126 : vector<1x32xf32> to vector<16x32xf32>
    %148 = arith.mulf %146, %147 : vector<16x32xf32>
    %149 = vector.broadcast %128 : vector<1x32xf32> to vector<16x32xf32>
    %150 = arith.addf %148, %149 : vector<16x32xf32>
    %c1 = arith.constant 1 : index
    %c0_73 = arith.constant 0 : index
    %c0_74 = arith.constant 0 : index
    %151 = vector.load %arg5[%c1, %c0_73, %c0_74] : memref<2x32x96xbf16, #tpu.memory_space<vmem>>, vector<1x32x96xbf16>
    %152 = vector.shape_cast %151 : vector<1x32x96xbf16> to vector<32x96xbf16>
    %153 = arith.truncf %150 : vector<16x32xf32> to vector<16x32xbf16>
    %cst_75 = arith.constant dense<0.000000e+00> : vector<16x96xf32>
    %154 = tpu.matmul %153, %152, %cst_75 {dimension_numbers = #tpu.dot_dimension_numbers<[1], [0], [0], [1], [0, 0, 1, 1], [], []>} : vector<16x32xbf16>, vector<32x96xbf16>, vector<16x96xf32> -> vector<16x96xf32>
    %c1_76 = arith.constant 1 : index
    %c0_77 = arith.constant 0 : index
    %c0_78 = arith.constant 0 : index
    %155 = vector.load %arg6[%c1_76, %c0_77, %c0_78] : memref<2x1x96xf32, #tpu.memory_space<vmem>>, vector<1x1x96xf32>
    %156 = vector.shape_cast %155 : vector<1x1x96xf32> to vector<1x96xf32>
    %157 = vector.broadcast %156 : vector<1x96xf32> to vector<16x96xf32>
    %158 = arith.addf %154, %157 : vector<16x96xf32>
    %159 = vector.shape_cast %158 : vector<16x96xf32> to vector<2x8x96xf32>
    %160 = arith.truncf %159 : vector<2x8x96xf32> to vector<2x8x96xbf16>
    %161 = vector.extract_strided_slice %160 {offsets = [0, 0, 0], sizes = [2, 8, 8], strides = [1, 1, 1]} : vector<2x8x96xbf16> to vector<2x8x8xbf16>
    %162 = vector.extract_strided_slice %160 {offsets = [0, 0, 32], sizes = [2, 8, 8], strides = [1, 1, 1]} : vector<2x8x96xbf16> to vector<2x8x8xbf16>
    %163 = vector.extract_strided_slice %160 {offsets = [0, 0, 64], sizes = [2, 8, 8], strides = [1, 1, 1]} : vector<2x8x96xbf16> to vector<2x8x8xbf16>
    "tpu.trace_start"() <{level = 10 : i32, message = "bqd,bkd->bqk"}> : () -> ()
    %cst_79 = arith.constant dense<0.000000e+00> : vector<2x8x8xf32>
    %164 = tpu.matmul %161, %162, %cst_79 {dimension_numbers = #tpu.dot_dimension_numbers<[2], [2], [1], [1], [0, 0, 0, 1, 1, 1], [0], [0]>} : vector<2x8x8xbf16>, vector<2x8x8xbf16>, vector<2x8x8xf32> -> vector<2x8x8xf32>
    "tpu.trace_stop"() : () -> ()
    %165 = vector.extract_strided_slice %160 {offsets = [0, 0, 8], sizes = [2, 8, 8], strides = [1, 1, 1]} : vector<2x8x96xbf16> to vector<2x8x8xbf16>
    %166 = vector.extract_strided_slice %160 {offsets = [0, 0, 40], sizes = [2, 8, 8], strides = [1, 1, 1]} : vector<2x8x96xbf16> to vector<2x8x8xbf16>
    %167 = vector.extract_strided_slice %160 {offsets = [0, 0, 72], sizes = [2, 8, 8], strides = [1, 1, 1]} : vector<2x8x96xbf16> to vector<2x8x8xbf16>
    "tpu.trace_start"() <{level = 10 : i32, message = "bqd,bkd->bqk"}> : () -> ()
    %cst_80 = arith.constant dense<0.000000e+00> : vector<2x8x8xf32>
    %168 = tpu.matmul %165, %166, %cst_80 {dimension_numbers = #tpu.dot_dimension_numbers<[2], [2], [1], [1], [0, 0, 0, 1, 1, 1], [0], [0]>} : vector<2x8x8xbf16>, vector<2x8x8xbf16>, vector<2x8x8xf32> -> vector<2x8x8xf32>
    "tpu.trace_stop"() : () -> ()
    %169 = vector.extract_strided_slice %160 {offsets = [0, 0, 16], sizes = [2, 8, 8], strides = [1, 1, 1]} : vector<2x8x96xbf16> to vector<2x8x8xbf16>
    %170 = vector.extract_strided_slice %160 {offsets = [0, 0, 48], sizes = [2, 8, 8], strides = [1, 1, 1]} : vector<2x8x96xbf16> to vector<2x8x8xbf16>
    %171 = vector.extract_strided_slice %160 {offsets = [0, 0, 80], sizes = [2, 8, 8], strides = [1, 1, 1]} : vector<2x8x96xbf16> to vector<2x8x8xbf16>
    "tpu.trace_start"() <{level = 10 : i32, message = "bqd,bkd->bqk"}> : () -> ()
    %cst_81 = arith.constant dense<0.000000e+00> : vector<2x8x8xf32>
    %172 = tpu.matmul %169, %170, %cst_81 {dimension_numbers = #tpu.dot_dimension_numbers<[2], [2], [1], [1], [0, 0, 0, 1, 1, 1], [0], [0]>} : vector<2x8x8xbf16>, vector<2x8x8xbf16>, vector<2x8x8xf32> -> vector<2x8x8xf32>
    "tpu.trace_stop"() : () -> ()
    %173 = vector.extract_strided_slice %160 {offsets = [0, 0, 24], sizes = [2, 8, 8], strides = [1, 1, 1]} : vector<2x8x96xbf16> to vector<2x8x8xbf16>
    %174 = vector.extract_strided_slice %160 {offsets = [0, 0, 56], sizes = [2, 8, 8], strides = [1, 1, 1]} : vector<2x8x96xbf16> to vector<2x8x8xbf16>
    %175 = vector.extract_strided_slice %160 {offsets = [0, 0, 88], sizes = [2, 8, 8], strides = [1, 1, 1]} : vector<2x8x96xbf16> to vector<2x8x8xbf16>
    "tpu.trace_start"() <{level = 10 : i32, message = "bqd,bkd->bqk"}> : () -> ()
    %cst_82 = arith.constant dense<0.000000e+00> : vector<2x8x8xf32>
    %176 = tpu.matmul %173, %174, %cst_82 {dimension_numbers = #tpu.dot_dimension_numbers<[2], [2], [1], [1], [0, 0, 0, 1, 1, 1], [0], [0]>} : vector<2x8x8xbf16>, vector<2x8x8xbf16>, vector<2x8x8xf32> -> vector<2x8x8xf32>
    "tpu.trace_stop"() : () -> ()
    %177 = tpu.concatenate %164, %168, %172, %176 in 0 : vector<2x8x8xf32>, vector<2x8x8xf32>, vector<2x8x8xf32>, vector<2x8x8xf32> -> vector<8x8x8xf32>
    %178 = vector.broadcast %10 : vector<8x1x8xf32> to vector<8x8x8xf32>
    %179 = arith.addf %177, %178 : vector<8x8x8xf32>
    %cst_83 = arith.constant dense<0xFF800000> : vector<8x8xf32>
    %180 = vector.multi_reduction <maximumf>, %179, %cst_83 [2] : vector<8x8x8xf32> to vector<8x8xf32>
    %181 = vector.shape_cast %180 : vector<8x8xf32> to vector<8x8x1xf32>
    %182 = vector.broadcast %181 : vector<8x8x1xf32> to vector<8x8x8xf32>
    %183 = arith.subf %179, %182 : vector<8x8x8xf32>
    %184 = math.exp %183 : vector<8x8x8xf32>
    %cst_84 = arith.constant dense<0.000000e+00> : vector<8x8xf32>
    %185 = vector.multi_reduction <add>, %184, %cst_84 [2] : vector<8x8x8xf32> to vector<8x8xf32>
    %186 = vector.shape_cast %185 : vector<8x8xf32> to vector<8x8x1xf32>
    %187 = arith.mulf %184, %5 : vector<8x8x8xf32>
    %cst_85 = arith.constant dense<0.000000e+00> : vector<8x8xf32>
    %188 = vector.multi_reduction <add>, %187, %cst_85 [2] : vector<8x8x8xf32> to vector<8x8xf32>
    %189 = vector.shape_cast %188 : vector<8x8xf32> to vector<8x8x1xf32>
    %cst_86 = arith.constant 9.99999997E-7 : f32
    %190 = vector.broadcast %cst_86 : f32 to vector<8x8x1xf32>
    %191 = arith.mulf %190, %186 : vector<8x8x1xf32>
    %192 = arith.addf %189, %191 : vector<8x8x1xf32>
    %193 = tpu.reciprocal %192 {approx = true} : vector<8x8x1xf32> -> vector<8x8x1xf32>
    %194 = vector.broadcast %193 : vector<8x8x1xf32> to vector<8x8x8xf32>
    %195 = arith.mulf %187, %194 : vector<8x8x8xf32>
    %196 = arith.truncf %195 : vector<8x8x8xf32> to vector<8x8x8xbf16>
    %197 = vector.extract_strided_slice %196 {offsets = [0, 0, 0], sizes = [2, 8, 8], strides = [1, 1, 1]} : vector<8x8x8xbf16> to vector<2x8x8xbf16>
    "tpu.trace_start"() <{level = 10 : i32, message = "bqk,bkd->bqd"}> : () -> ()
    %cst_87 = arith.constant dense<0.000000e+00> : vector<2x8x8xf32>
    %198 = tpu.matmul %197, %163, %cst_87 {dimension_numbers = #tpu.dot_dimension_numbers<[2], [1], [1], [2], [0, 0, 0, 1, 1, 2], [0], [0]>} : vector<2x8x8xbf16>, vector<2x8x8xbf16>, vector<2x8x8xf32> -> vector<2x8x8xf32>
    "tpu.trace_stop"() : () -> ()
    %199 = vector.extract_strided_slice %196 {offsets = [2, 0, 0], sizes = [2, 8, 8], strides = [1, 1, 1]} : vector<8x8x8xbf16> to vector<2x8x8xbf16>
    "tpu.trace_start"() <{level = 10 : i32, message = "bqk,bkd->bqd"}> : () -> ()
    %cst_88 = arith.constant dense<0.000000e+00> : vector<2x8x8xf32>
    %200 = tpu.matmul %199, %167, %cst_88 {dimension_numbers = #tpu.dot_dimension_numbers<[2], [1], [1], [2], [0, 0, 0, 1, 1, 2], [0], [0]>} : vector<2x8x8xbf16>, vector<2x8x8xbf16>, vector<2x8x8xf32> -> vector<2x8x8xf32>
    "tpu.trace_stop"() : () -> ()
    %201 = vector.extract_strided_slice %196 {offsets = [4, 0, 0], sizes = [2, 8, 8], strides = [1, 1, 1]} : vector<8x8x8xbf16> to vector<2x8x8xbf16>
    "tpu.trace_start"() <{level = 10 : i32, message = "bqk,bkd->bqd"}> : () -> ()
    %cst_89 = arith.constant dense<0.000000e+00> : vector<2x8x8xf32>
    %202 = tpu.matmul %201, %171, %cst_89 {dimension_numbers = #tpu.dot_dimension_numbers<[2], [1], [1], [2], [0, 0, 0, 1, 1, 2], [0], [0]>} : vector<2x8x8xbf16>, vector<2x8x8xbf16>, vector<2x8x8xf32> -> vector<2x8x8xf32>
    "tpu.trace_stop"() : () -> ()
    %203 = vector.extract_strided_slice %196 {offsets = [6, 0, 0], sizes = [2, 8, 8], strides = [1, 1, 1]} : vector<8x8x8xbf16> to vector<2x8x8xbf16>
    "tpu.trace_start"() <{level = 10 : i32, message = "bqk,bkd->bqd"}> : () -> ()
    %cst_90 = arith.constant dense<0.000000e+00> : vector<2x8x8xf32>
    %204 = tpu.matmul %203, %175, %cst_90 {dimension_numbers = #tpu.dot_dimension_numbers<[2], [1], [1], [2], [0, 0, 0, 1, 1, 2], [0], [0]>} : vector<2x8x8xbf16>, vector<2x8x8xbf16>, vector<2x8x8xf32> -> vector<2x8x8xf32>
    "tpu.trace_stop"() : () -> ()
    %205 = tpu.concatenate %198, %200, %202, %204 in 2 : vector<2x8x8xf32>, vector<2x8x8xf32>, vector<2x8x8xf32>, vector<2x8x8xf32> -> vector<2x8x32xf32>
    %206 = vector.shape_cast %205 : vector<2x8x32xf32> to vector<16x32xf32>
    %c1_91 = arith.constant 1 : index
    %c0_92 = arith.constant 0 : index
    %c0_93 = arith.constant 0 : index
    %207 = vector.load %arg7[%c1_91, %c0_92, %c0_93] : memref<2x32x32xbf16, #tpu.memory_space<vmem>>, vector<1x32x32xbf16>
    %208 = vector.shape_cast %207 : vector<1x32x32xbf16> to vector<32x32xbf16>
    %209 = arith.truncf %206 : vector<16x32xf32> to vector<16x32xbf16>
    %cst_94 = arith.constant dense<0.000000e+00> : vector<16x32xf32>
    %210 = tpu.matmul %209, %208, %cst_94 {dimension_numbers = #tpu.dot_dimension_numbers<[1], [0], [0], [1], [0, 0, 1, 1], [], []>} : vector<16x32xbf16>, vector<32x32xbf16>, vector<16x32xf32> -> vector<16x32xf32>
    %c1_95 = arith.constant 1 : index
    %c0_96 = arith.constant 0 : index
    %c0_97 = arith.constant 0 : index
    %211 = vector.load %arg8[%c1_95, %c0_96, %c0_97] : memref<2x1x32xf32, #tpu.memory_space<vmem>>, vector<1x1x32xf32>
    %212 = vector.shape_cast %211 : vector<1x1x32xf32> to vector<1x32xf32>
    %213 = vector.broadcast %212 : vector<1x32xf32> to vector<16x32xf32>
    %214 = arith.addf %210, %213 : vector<16x32xf32>
    %215 = arith.addf %150, %214 : vector<16x32xf32>
    %c1_98 = arith.constant 1 : index
    %c0_99 = arith.constant 0 : index
    %c0_100 = arith.constant 0 : index
    %216 = vector.load %arg13[%c1_98, %c0_99, %c0_100] : memref<2x1x32xf32, #tpu.memory_space<vmem>>, vector<1x1x32xf32>
    %217 = vector.shape_cast %216 : vector<1x1x32xf32> to vector<1x32xf32>
    %c1_101 = arith.constant 1 : index
    %c0_102 = arith.constant 0 : index
    %c0_103 = arith.constant 0 : index
    %218 = vector.load %arg14[%c1_101, %c0_102, %c0_103] : memref<2x1x32xf32, #tpu.memory_space<vmem>>, vector<1x1x32xf32>
    %219 = vector.shape_cast %218 : vector<1x1x32xf32> to vector<1x32xf32>
    %cst_104 = arith.constant dense<0.000000e+00> : vector<16xf32>
    %220 = vector.multi_reduction <add>, %215, %cst_104 [1] : vector<16x32xf32> to vector<16xf32>
    %221 = vector.shape_cast %220 : vector<16xf32> to vector<16x1xf32>
    %cst_105 = arith.constant 3.200000e+01 : f32
    %222 = vector.broadcast %cst_105 : f32 to vector<16x1xf32>
    %223 = arith.divf %221, %222 : vector<16x1xf32>
    %224 = vector.broadcast %223 : vector<16x1xf32> to vector<16x32xf32>
    %225 = arith.subf %215, %224 : vector<16x32xf32>
    %226 = arith.mulf %225, %225 : vector<16x32xf32>
    %cst_106 = arith.constant dense<0.000000e+00> : vector<16xf32>
    %227 = vector.multi_reduction <add>, %226, %cst_106 [1] : vector<16x32xf32> to vector<16xf32>
    %228 = vector.shape_cast %227 : vector<16xf32> to vector<16x1xf32>
    %cst_107 = arith.constant 3.200000e+01 : f32
    %229 = vector.broadcast %cst_107 : f32 to vector<16x1xf32>
    %230 = arith.divf %228, %229 : vector<16x1xf32>
    %231 = vector.broadcast %223 : vector<16x1xf32> to vector<16x32xf32>
    %232 = arith.subf %215, %231 : vector<16x32xf32>
    %cst_108 = arith.constant 9.99999974E-6 : f32
    %233 = vector.broadcast %cst_108 : f32 to vector<16x1xf32>
    %234 = arith.addf %230, %233 : vector<16x1xf32>
    %235 = math.rsqrt %234 : vector<16x1xf32>
    %236 = vector.broadcast %235 : vector<16x1xf32> to vector<16x32xf32>
    %237 = arith.mulf %232, %236 : vector<16x32xf32>
    %238 = vector.broadcast %217 : vector<1x32xf32> to vector<16x32xf32>
    %239 = arith.mulf %237, %238 : vector<16x32xf32>
    %240 = vector.broadcast %219 : vector<1x32xf32> to vector<16x32xf32>
    %241 = arith.addf %239, %240 : vector<16x32xf32>
    %c1_109 = arith.constant 1 : index
    %c0_110 = arith.constant 0 : index
    %c0_111 = arith.constant 0 : index
    %242 = vector.load %arg9[%c1_109, %c0_110, %c0_111] : memref<2x32x64xbf16, #tpu.memory_space<vmem>>, vector<1x32x64xbf16>
    %243 = vector.shape_cast %242 : vector<1x32x64xbf16> to vector<32x64xbf16>
    %244 = arith.truncf %241 : vector<16x32xf32> to vector<16x32xbf16>
    %cst_112 = arith.constant dense<0.000000e+00> : vector<16x64xf32>
    %245 = tpu.matmul %244, %243, %cst_112 {dimension_numbers = #tpu.dot_dimension_numbers<[1], [0], [0], [1], [0, 0, 1, 1], [], []>} : vector<16x32xbf16>, vector<32x64xbf16>, vector<16x64xf32> -> vector<16x64xf32>
    %c1_113 = arith.constant 1 : index
    %c0_114 = arith.constant 0 : index
    %c0_115 = arith.constant 0 : index
    %246 = vector.load %arg10[%c1_113, %c0_114, %c0_115] : memref<2x1x64xf32, #tpu.memory_space<vmem>>, vector<1x1x64xf32>
    %247 = vector.shape_cast %246 : vector<1x1x64xf32> to vector<1x64xf32>
    %248 = vector.broadcast %247 : vector<1x64xf32> to vector<16x64xf32>
    %249 = arith.addf %245, %248 : vector<16x64xf32>
    %cst_116 = arith.constant 0.000000e+00 : f32
    %250 = vector.broadcast %cst_116 : f32 to vector<16x64xf32>
    %251 = arith.maximumf %249, %250 : vector<16x64xf32>
    %c1_117 = arith.constant 1 : index
    %c0_118 = arith.constant 0 : index
    %c0_119 = arith.constant 0 : index
    %252 = vector.load %arg11[%c1_117, %c0_118, %c0_119] : memref<2x64x32xbf16, #tpu.memory_space<vmem>>, vector<1x64x32xbf16>
    %253 = vector.shape_cast %252 : vector<1x64x32xbf16> to vector<64x32xbf16>
    %254 = arith.truncf %251 : vector<16x64xf32> to vector<16x64xbf16>
    %cst_120 = arith.constant dense<0.000000e+00> : vector<16x32xf32>
    %255 = tpu.matmul %254, %253, %cst_120 {dimension_numbers = #tpu.dot_dimension_numbers<[1], [0], [0], [1], [0, 0, 1, 1], [], []>} : vector<16x64xbf16>, vector<64x32xbf16>, vector<16x32xf32> -> vector<16x32xf32>
    %c1_121 = arith.constant 1 : index
    %c0_122 = arith.constant 0 : index
    %c0_123 = arith.constant 0 : index
    %256 = vector.load %arg12[%c1_121, %c0_122, %c0_123] : memref<2x1x32xf32, #tpu.memory_space<vmem>>, vector<1x1x32xf32>
    %257 = vector.shape_cast %256 : vector<1x1x32xf32> to vector<1x32xf32>
    %258 = vector.broadcast %257 : vector<1x32xf32> to vector<16x32xf32>
    %259 = arith.addf %255, %258 : vector<16x32xf32>
    %260 = arith.addf %241, %259 : vector<16x32xf32>
    %c1_124 = arith.constant 1 : index
    %c0_125 = arith.constant 0 : index
    %c0_126 = arith.constant 0 : index
    %261 = vector.load %arg15[%c1_124, %c0_125, %c0_126] : memref<2x1x32xf32, #tpu.memory_space<vmem>>, vector<1x1x32xf32>
    %262 = vector.shape_cast %261 : vector<1x1x32xf32> to vector<1x32xf32>
    %c1_127 = arith.constant 1 : index
    %c0_128 = arith.constant 0 : index
    %c0_129 = arith.constant 0 : index
    %263 = vector.load %arg16[%c1_127, %c0_128, %c0_129] : memref<2x1x32xf32, #tpu.memory_space<vmem>>, vector<1x1x32xf32>
    %264 = vector.shape_cast %263 : vector<1x1x32xf32> to vector<1x32xf32>
    %cst_130 = arith.constant dense<0.000000e+00> : vector<16xf32>
    %265 = vector.multi_reduction <add>, %260, %cst_130 [1] : vector<16x32xf32> to vector<16xf32>
    %266 = vector.shape_cast %265 : vector<16xf32> to vector<16x1xf32>
    %cst_131 = arith.constant 3.200000e+01 : f32
    %267 = vector.broadcast %cst_131 : f32 to vector<16x1xf32>
    %268 = arith.divf %266, %267 : vector<16x1xf32>
    %269 = vector.broadcast %268 : vector<16x1xf32> to vector<16x32xf32>
    %270 = arith.subf %260, %269 : vector<16x32xf32>
    %271 = arith.mulf %270, %270 : vector<16x32xf32>
    %cst_132 = arith.constant dense<0.000000e+00> : vector<16xf32>
    %272 = vector.multi_reduction <add>, %271, %cst_132 [1] : vector<16x32xf32> to vector<16xf32>
    %273 = vector.shape_cast %272 : vector<16xf32> to vector<16x1xf32>
    %cst_133 = arith.constant 3.200000e+01 : f32
    %274 = vector.broadcast %cst_133 : f32 to vector<16x1xf32>
    %275 = arith.divf %273, %274 : vector<16x1xf32>
    %276 = vector.broadcast %268 : vector<16x1xf32> to vector<16x32xf32>
    %277 = arith.subf %260, %276 : vector<16x32xf32>
    %cst_134 = arith.constant 9.99999974E-6 : f32
    %278 = vector.broadcast %cst_134 : f32 to vector<16x1xf32>
    %279 = arith.addf %275, %278 : vector<16x1xf32>
    %280 = math.rsqrt %279 : vector<16x1xf32>
    %281 = vector.broadcast %280 : vector<16x1xf32> to vector<16x32xf32>
    %282 = arith.mulf %277, %281 : vector<16x32xf32>
    %283 = vector.broadcast %262 : vector<1x32xf32> to vector<16x32xf32>
    %284 = arith.mulf %282, %283 : vector<16x32xf32>
    %285 = vector.broadcast %264 : vector<1x32xf32> to vector<16x32xf32>
    %286 = arith.addf %284, %285 : vector<16x32xf32>
    %c0_135 = arith.constant 0 : index
    %c0_136 = arith.constant 0 : index
    %287 = vector.load %arg17[%c0_135, %c0_136] : memref<32x32xbf16, #tpu.memory_space<vmem>>, vector<32x32xbf16>
    %288 = arith.truncf %286 : vector<16x32xf32> to vector<16x32xbf16>
    %cst_137 = arith.constant dense<0.000000e+00> : vector<16x32xf32>
    %289 = tpu.matmul %288, %287, %cst_137 {dimension_numbers = #tpu.dot_dimension_numbers<[1], [0], [0], [1], [0, 0, 1, 1], [], []>} : vector<16x32xbf16>, vector<32x32xbf16>, vector<16x32xf32> -> vector<16x32xf32>
    %c0_138 = arith.constant 0 : index
    %c0_139 = arith.constant 0 : index
    %290 = vector.load %arg18[%c0_138, %c0_139] : memref<1x32xf32, #tpu.memory_space<vmem>>, vector<1x32xf32>
    %291 = vector.broadcast %290 : vector<1x32xf32> to vector<16x32xf32>
    %292 = arith.addf %289, %291 : vector<16x32xf32>
    %cst_140 = arith.constant 0.000000e+00 : f32
    %293 = vector.broadcast %cst_140 : f32 to vector<16x32xf32>
    %294 = arith.maximumf %292, %293 : vector<16x32xf32>
    %c0_141 = arith.constant 0 : index
    %c0_142 = arith.constant 0 : index
    %295 = vector.load %arg19[%c0_141, %c0_142] : memref<32x128xbf16, #tpu.memory_space<vmem>>, vector<32x128xbf16>
    %296 = arith.truncf %294 : vector<16x32xf32> to vector<16x32xbf16>
    %cst_143 = arith.constant dense<0.000000e+00> : vector<16x128xf32>
    %297 = tpu.matmul %296, %295, %cst_143 {dimension_numbers = #tpu.dot_dimension_numbers<[1], [0], [0], [1], [0, 0, 1, 1], [], []>} : vector<16x32xbf16>, vector<32x128xbf16>, vector<16x128xf32> -> vector<16x128xf32>
    %c0_144 = arith.constant 0 : index
    %c0_145 = arith.constant 0 : index
    %298 = vector.load %arg20[%c0_144, %c0_145] : memref<1x128xf32, #tpu.memory_space<vmem>>, vector<1x128xf32>
    %299 = vector.broadcast %298 : vector<1x128xf32> to vector<16x128xf32>
    %300 = arith.addf %297, %299 : vector<16x128xf32>
    %301 = vector.shape_cast %300 : vector<16x128xf32> to vector<2x8x128xf32>
    %302 = arith.truncf %301 : vector<2x8x128xf32> to vector<2x8x128xbf16>
    %c0_146 = arith.constant 0 : index
    %c0_147 = arith.constant 0 : index
    %c0_148 = arith.constant 0 : index
    %303 = vector.load %arg21[%c0_146, %c0_147, %c0_148] : memref<2x8x128xbf16, #tpu.memory_space<vmem>>, vector<2x8x128xbf16>
    tpu.vector_store %arg21[%c0_146, %c0_147, %c0_148], %302 {strides = array<i32>} : memref<2x8x128xbf16, #tpu.memory_space<vmem>>, vector<2x8x128xbf16>,
    return
  }
  func.func @transform_0(%arg0: i32) -> (i32, i32, i32) {
    %c0_i32 = arith.constant 0 : i32
    %c0_i32_0 = arith.constant 0 : i32
    %c0_i32_1 = arith.constant 0 : i32
    return %arg0, %c0_i32, %c0_i32_0 : i32, i32, i32
  }
  func.func @transform_1(%arg0: i32) -> (i32, i32, i32) {
    %c0_i32 = arith.constant 0 : i32
    %c0_i32_0 = arith.constant 0 : i32
    %c0_i32_1 = arith.constant 0 : i32
    return %arg0, %c0_i32, %c0_i32_0 : i32, i32, i32
  }
  func.func @transform_2(%arg0: i32) -> (i32, i32, i32) {
    %c0_i32 = arith.constant 0 : i32
    %c0_i32_0 = arith.constant 0 : i32
    %c0_i32_1 = arith.constant 0 : i32
    return %arg0, %c0_i32, %c0_i32_0 : i32, i32, i32
  }
  func.func @transform_3(%arg0: i32) -> (i32, i32) {
    %c0_i32 = arith.constant 0 : i32
    %c0_i32_0 = arith.constant 0 : i32
    %c0_i32_1 = arith.constant 0 : i32
    return %c0_i32, %c0_i32_0 : i32, i32
  }
  func.func @transform_4(%arg0: i32) -> (i32, i32, i32) {
    %c0_i32 = arith.constant 0 : i32
    %c0_i32_0 = arith.constant 0 : i32
    %c0_i32_1 = arith.constant 0 : i32
    %c0_i32_2 = arith.constant 0 : i32
    return %c0_i32, %c0_i32_0, %c0_i32_1 : i32, i32, i32
  }
  func.func @transform_5(%arg0: i32) -> (i32, i32, i32) {
    %c0_i32 = arith.constant 0 : i32
    %c0_i32_0 = arith.constant 0 : i32
    %c0_i32_1 = arith.constant 0 : i32
    %c0_i32_2 = arith.constant 0 : i32
    return %c0_i32, %c0_i32_0, %c0_i32_1 : i32, i32, i32
  }
  func.func @transform_6(%arg0: i32) -> (i32, i32, i32) {
    %c0_i32 = arith.constant 0 : i32
    %c0_i32_0 = arith.constant 0 : i32
    %c0_i32_1 = arith.constant 0 : i32
    %c0_i32_2 = arith.constant 0 : i32
    return %c0_i32, %c0_i32_0, %c0_i32_1 : i32, i32, i32
  }
  func.func @transform_7(%arg0: i32) -> (i32, i32, i32) {
    %c0_i32 = arith.constant 0 : i32
    %c0_i32_0 = arith.constant 0 : i32
    %c0_i32_1 = arith.constant 0 : i32
    %c0_i32_2 = arith.constant 0 : i32
    return %c0_i32, %c0_i32_0, %c0_i32_1 : i32, i32, i32
  }
  func.func @transform_8(%arg0: i32) -> (i32, i32, i32) {
    %c0_i32 = arith.constant 0 : i32
    %c0_i32_0 = arith.constant 0 : i32
    %c0_i32_1 = arith.constant 0 : i32
    %c0_i32_2 = arith.constant 0 : i32
    return %c0_i32, %c0_i32_0, %c0_i32_1 : i32, i32, i32
  }
  func.func @transform_9(%arg0: i32) -> (i32, i32, i32) {
    %c0_i32 = arith.constant 0 : i32
    %c0_i32_0 = arith.constant 0 : i32
    %c0_i32_1 = arith.constant 0 : i32
    %c0_i32_2 = arith.constant 0 : i32
    return %c0_i32, %c0_i32_0, %c0_i32_1 : i32, i32, i32
  }
  func.func @transform_10(%arg0: i32) -> (i32, i32, i32) {
    %c0_i32 = arith.constant 0 : i32
    %c0_i32_0 = arith.constant 0 : i32
    %c0_i32_1 = arith.constant 0 : i32
    %c0_i32_2 = arith.constant 0 : i32
    return %c0_i32, %c0_i32_0, %c0_i32_1 : i32, i32, i32
  }
  func.func @transform_11(%arg0: i32) -> (i32, i32, i32) {
    %c0_i32 = arith.constant 0 : i32
    %c0_i32_0 = arith.constant 0 : i32
    %c0_i32_1 = arith.constant 0 : i32
    %c0_i32_2 = arith.constant 0 : i32
    return %c0_i32, %c0_i32_0, %c0_i32_1 : i32, i32, i32
  }
  func.func @transform_12(%arg0: i32) -> (i32, i32, i32) {
    %c0_i32 = arith.constant 0 : i32
    %c0_i32_0 = arith.constant 0 : i32
    %c0_i32_1 = arith.constant 0 : i32
    %c0_i32_2 = arith.constant 0 : i32
    return %c0_i32, %c0_i32_0, %c0_i32_1 : i32, i32, i32
  }
  func.func @transform_13(%arg0: i32) -> (i32, i32, i32) {
    %c0_i32 = arith.constant 0 : i32
    %c0_i32_0 = arith.constant 0 : i32
    %c0_i32_1 = arith.constant 0 : i32
    %c0_i32_2 = arith.constant 0 : i32
    return %c0_i32, %c0_i32_0, %c0_i32_1 : i32, i32, i32
  }
  func.func @transform_14(%arg0: i32) -> (i32, i32, i32) {
    %c0_i32 = arith.constant 0 : i32
    %c0_i32_0 = arith.constant 0 : i32
    %c0_i32_1 = arith.constant 0 : i32
    %c0_i32_2 = arith.constant 0 : i32
    return %c0_i32, %c0_i32_0, %c0_i32_1 : i32, i32, i32
  }
  func.func @transform_15(%arg0: i32) -> (i32, i32, i32) {
    %c0_i32 = arith.constant 0 : i32
    %c0_i32_0 = arith.constant 0 : i32
    %c0_i32_1 = arith.constant 0 : i32
    %c0_i32_2 = arith.constant 0 : i32
    return %c0_i32, %c0_i32_0, %c0_i32_1 : i32, i32, i32
  }
  func.func @transform_16(%arg0: i32) -> (i32, i32) {
    %c0_i32 = arith.constant 0 : i32
    %c0_i32_0 = arith.constant 0 : i32
    %c0_i32_1 = arith.constant 0 : i32
    return %c0_i32, %c0_i32_0 : i32, i32
  }
  func.func @transform_17(%arg0: i32) -> (i32, i32) {
    %c0_i32 = arith.constant 0 : i32
    %c0_i32_0 = arith.constant 0 : i32
    %c0_i32_1 = arith.constant 0 : i32
    return %c0_i32, %c0_i32_0 : i32, i32
  }
  func.func @transform_18(%arg0: i32) -> (i32, i32) {
    %c0_i32 = arith.constant 0 : i32
    %c0_i32_0 = arith.constant 0 : i32
    %c0_i32_1 = arith.constant 0 : i32
    return %c0_i32, %c0_i32_0 : i32, i32
  }
  func.func @transform_19(%arg0: i32) -> (i32, i32) {
    %c0_i32 = arith.constant 0 : i32
    %c0_i32_0 = arith.constant 0 : i32
    %c0_i32_1 = arith.constant 0 : i32
    return %c0_i32, %c0_i32_0 : i32, i32
  }
  func.func @transform_20(%arg0: i32) -> (i32, i32, i32) {
    %c0_i32 = arith.constant 0 : i32
    %c0_i32_0 = arith.constant 0 : i32
    %c0_i32_1 = arith.constant 0 : i32
    return %arg0, %c0_i32, %c0_i32_0 : i32, i32, i32
  }
}

</mosaic_0001>

<llo_original>
// kernel: _forward_core.1
$region0: #{_forward_core.1}
  #allocation0 [shape = 'u32[]', space=smem, size = 0x4, offset = 0x4, fixed_abs, tag = 'smem constant byte address 0x4 - core index']
  #allocation1 [shape = 'u32[72,128]{1,0:T(1,128)}', space=vmem, size = 0x9000, scoped, tag = 'internal scratch']
  %s0 = inlined_call_operand.vmem [shape: bf16[4,8,4], index: 0, kind: input, shape index: {}]
  %s1 = inlined_call_operand.vmem [shape: bf16[4,8,8], index: 1, kind: input, shape index: {}]
  %s2 = inlined_call_operand.vmem [shape: f32[4,1,8], index: 2, kind: input, shape index: {}]
  %s3 = inlined_call_operand.vmem [shape: bf16[4,32], index: 3, kind: input, shape index: {}]
  %s4 = inlined_call_operand.vmem [shape: bf16[2,32,96], index: 4, kind: input, shape index: {}]
  %s5 = inlined_call_operand.vmem [shape: f32[2,1,96], index: 5, kind: input, shape index: {}]
  %s6 = inlined_call_operand.vmem [shape: bf16[2,32,32], index: 6, kind: input, shape index: {}]
  %s7 = inlined_call_operand.vmem [shape: f32[2,1,32], index: 7, kind: input, shape index: {}]
  %s8 = inlined_call_operand.vmem [shape: bf16[2,32,64], index: 8, kind: input, shape index: {}]
  %s9 = inlined_call_operand.hbm [shape: f32[2,1,64], index: 9, kind: input, shape index: {}]
  %s10 = inlined_call_operand.vmem [shape: bf16[2,64,32], index: 10, kind: input, shape index: {}]
  %s11 = inlined_call_operand.hbm [shape: f32[2,1,32], index: 11, kind: input, shape index: {}]
  %s12 = inlined_call_operand.hbm [shape: f32[2,1,32], index: 12, kind: input, shape index: {}]
  %s13 = inlined_call_operand.hbm [shape: f32[2,1,32], index: 13, kind: input, shape index: {}]
  %s14 = inlined_call_operand.hbm [shape: f32[2,1,32], index: 14, kind: input, shape index: {}]
  %s15 = inlined_call_operand.hbm [shape: f32[2,1,32], index: 15, kind: input, shape index: {}]
  %s16 = inlined_call_operand.vmem [shape: bf16[32,32], index: 16, kind: input, shape index: {}]
  %s17 = inlined_call_operand.hbm [shape: f32[1,32], index: 17, kind: input, shape index: {}]
  %s18 = inlined_call_operand.vmem [shape: bf16[32,128], index: 18, kind: input, shape index: {}]
  %s19 = inlined_call_operand.hbm [shape: f32[1,128], index: 19, kind: input, shape index: {}]
  %s20 = inlined_call_operand.vmem [shape: bf16[4,8,128], index: 20, kind: output, shape index: {}]
  %s21 = sld [smem:[#allocation0]]
  $region145: #{_forward_core.1} parent=0
    _
  %s23 = ssub.s32 1, %s21
  %s24 = scalar_select 0, %s23, %s21
  $region1: #{_forward_core.1} parent=0
    #allocation2 [shape = 'u8[1024]{0}', space=vmem, size = 0x400, scoped, tag = 'input window, operand 9, single buffered']
    #allocation3 [shape = 's32[2]{0}', space=sflag, size = 0x8, scoped, tag = 'scoped memory for _forward_core.1']
    #allocation4 [shape = 'u8[1024]{0}', space=vmem, size = 0x400, scoped, tag = 'input window, operand 11, single buffered']
    #allocation5 [shape = 's32[1]{0}', space=sflag, size = 0x4, scoped, tag = 'scoped memory for _forward_core.1']
    #allocation6 [shape = 'u8[1024]{0}', space=vmem, size = 0x400, scoped, tag = 'input window, operand 12, single buffered']
    #allocation7 [shape = 'u8[1024]{0}', space=vmem, size = 0x400, scoped, tag = 'input window, operand 13, single buffered']
    #allocation8 [shape = 's32[1]{0}', space=sflag, size = 0x4, scoped, tag = 'scoped memory for _forward_core.1']
    #allocation9 [shape = 'u8[1024]{0}', space=vmem, size = 0x400, scoped, tag = 'input window, operand 14, single buffered']
    #allocation10 [shape = 'u8[1024]{0}', space=vmem, size = 0x400, scoped, tag = 'input window, operand 15, single buffered']
    #allocation11 [shape = 's32[1]{0}', space=sflag, size = 0x4, scoped, tag = 'scoped memory for _forward_core.1']
    #allocation12 [shape = 'u8[512]{0}', space=vmem, size = 0x400, scoped, tag = 'input window, operand 17, single buffered']
    #allocation13 [shape = 'u8[512]{0}', space=vmem, size = 0x400, scoped, tag = 'input window, operand 19, single buffered']
    #allocation14 [shape = 's32[1]{0}', space=sflag, size = 0x4, scoped, tag = 'scoped memory for _forward_core.1']
    %25 = vsyncpa [#allocation3], 0
    %26 = vsyncpa [#allocation5], 0
    %27 = vsyncpa [#allocation8], 0
    %28 = vsyncpa [#allocation11], 0
    %29 = vsyncpa [#allocation14], 0
    loop: start=0, step=1, limit=4
    $region2: #{_forward_core.1} parent=1 // loop_pre_header
      _
    $region3: #{_forward_core.1} parent=1 // loop_header
      %s31 = sphi 0, %s35
      %p32 = scmp.ge.s32.totalorder %s31, 4
      %s41 = sphi 0, %s43
      %s44 = sphi 0, %s41
      %s45 = sphi 0, %s44
      %s61 = sphi 0, %s45
      %s67 = sphi 0, %s69
      %s70 = sphi 0, %s67
      %s71 = sphi 0, %s70
      %s87 = sphi 0, %s71
      %s93 = sphi 0, %s95
      %s96 = sphi 0, %s93
      %s97 = sphi 0, %s96
      %s113 = sphi 0, %s97
      %s117 = sphi 0, %s117
      %s119 = sphi 0, %s117
      %s120 = sphi 0, %s119
      %s134 = sphi 0, %s120
      %s138 = sphi 0, %s138
      %s140 = sphi 0, %s138
      %s141 = sphi 0, %s140
      %s155 = sphi 0, %s141
      %s159 = sphi 0, %s159
      %s161 = sphi 0, %s159
      %s162 = sphi 0, %s161
      %s176 = sphi 0, %s162
      %s180 = sphi 0, %s180
      %s182 = sphi 0, %s180
      %s183 = sphi 0, %s182
      %s197 = sphi 0, %s183
      %s201 = sphi 0, %s201
      %s203 = sphi 0, %s201
      %s204 = sphi 0, %s203
      %s218 = sphi 0, %s204
      %s222 = sphi 0, %s222
      %s224 = sphi 0, %s222
      %s225 = sphi 0, %s224
      %s239 = sphi 0, %s225
      %s243 = sphi 0, %s243
      %s245 = sphi 0, %s243
      %s246 = sphi 0, %s245
      %s260 = sphi 0, %s246
      %s264 = sphi 0, %s264
      %s266 = sphi 0, %s264
      %s267 = sphi 0, %s266
      %s281 = sphi 0, %s267
      %s285 = sphi 0, %s285
      %s287 = sphi 0, %s285
      %s288 = sphi 0, %s287
      %s302 = sphi 0, %s288
      %s306 = sphi 0, %s306
      %s308 = sphi 0, %s306
      %s309 = sphi 0, %s308
      %s323 = sphi 0, %s309
      %s327 = sphi 0, %s327
      %s329 = sphi 0, %s327
      %s330 = sphi 0, %s329
      %s344 = sphi 0, %s330
      %s348 = sphi 0, %s348
      %s350 = sphi 0, %s348
      %s351 = sphi 0, %s350
      %s365 = sphi 0, %s351
      %s369 = sphi 0, %s369
      %s371 = sphi 0, %s369
      %s372 = sphi 0, %s371
      %s386 = sphi 0, %s372
      %s390 = sphi 0, %s390
      %s392 = sphi 0, %s390
      %s393 = sphi 0, %s392
      %s407 = sphi 0, %s393
      %s411 = sphi 0, %s411
      %s413 = sphi 0, %s411
      %s414 = sphi 0, %s413
      %s428 = sphi 0, %s414
      %s432 = sphi 0, %s432
      %s434 = sphi 0, %s432
      %s435 = sphi 0, %s434
      %s449 = sphi 0, %s435
      %s453 = sphi 0, %s453
      %s455 = sphi 0, %s453
      %s456 = sphi 0, %s455
      %s470 = sphi 0, %s456
      %s476 = sphi 0, %s478
      %s479 = sphi 0, %s476
      %s480 = sphi 0, %s479
      %s496 = sphi 0, %s480
    $region4: #{_forward_core.1} parent=1 // loop_header_branch
      %34 = sbr.rel (%p32) target = $region8
    $region5: #{_forward_core.1} parent=1 // loop_body
      %s36 = ssub.s32 %s31, 1
      %s37 = ssub.s32 %s31, 2
      %s38 = sadd.s32 %s31, 1
      %s39 = ssub.s32 %s31, %s38
      %p40 = scmp.eq.s32.totalorder %s39, 0
      %s42 = sadd.s32 %s41, 1
      %s43 = scalar_select %p40, %s41, %s42
      %p46 = pneg %p40
      %p47 = scmp.eq.s32.totalorder %s31, 1
      %p48 = por %p46, %p47
      %p49 = scmp.ne.s32.totalorder %s41, %s44
      %p50 = scmp.eq.s32.totalorder %s31, 0
      %p51 = por %p49, %p50
      %p52 = scmp.ne.s32.totalorder %s41, %s44
      %p53 = scmp.eq.s32.totalorder %s36, 1
      %p54 = por %p52, %p53
      %p55 = scmp.ne.s32.totalorder %s44, %s45
      %p56 = scmp.eq.s32.totalorder %s36, 0
      %p57 = por %p55, %p56
      %p58 = scmp.ne.s32.totalorder %s44, %s45
      %p59 = scmp.eq.s32.totalorder %s37, 1
      %p60 = por %p58, %p59
      %p62 = scmp.ne.s32.totalorder %s45, %s61
      %p63 = scmp.eq.s32.totalorder %s37, 0
      %p64 = por %p62, %p63
      %s65 = ssub.s32 %s31, %s38
      %p66 = scmp.eq.s32.totalorder %s65, 0
      %s68 = sadd.s32 %s67, 1
      %s69 = scalar_select %p66, %s67, %s68
      %p72 = pneg %p66
      %p73 = scmp.eq.s32.totalorder %s31, 1
      %p74 = por %p72, %p73
      %p75 = scmp.ne.s32.totalorder %s67, %s70
      %p76 = scmp.eq.s32.totalorder %s31, 0
      %p77 = por %p75, %p76
      %p78 = scmp.ne.s32.totalorder %s67, %s70
      %p79 = scmp.eq.s32.totalorder %s36, 1
      %p80 = por %p78, %p79
      %p81 = scmp.ne.s32.totalorder %s70, %s71
      %p82 = scmp.eq.s32.totalorder %s36, 0
      %p83 = por %p81, %p82
      %p84 = scmp.ne.s32.totalorder %s70, %s71
      %p85 = scmp.eq.s32.totalorder %s37, 1
      %p86 = por %p84, %p85
      %p88 = scmp.ne.s32.totalorder %s71, %s87
      %p89 = scmp.eq.s32.totalorder %s37, 0
      %p90 = por %p88, %p89
      %s91 = ssub.s32 %s31, %s38
      %p92 = scmp.eq.s32.totalorder %s91, 0
      %s94 = sadd.s32 %s93, 1
      %s95 = scalar_select %p92, %s93, %s94
      %p98 = pneg %p92
      %p99 = scmp.eq.s32.totalorder %s31, 1
      %p100 = por %p98, %p99
      %p101 = scmp.ne.s32.totalorder %s93, %s96
      %p102 = scmp.eq.s32.totalorder %s31, 0
      %p103 = por %p101, %p102
      %p104 = scmp.ne.s32.totalorder %s93, %s96
      %p105 = scmp.eq.s32.totalorder %s36, 1
      %p106 = por %p104, %p105
      %p107 = scmp.ne.s32.totalorder %s96, %s97
      %p108 = scmp.eq.s32.totalorder %s36, 0
      %p109 = por %p107, %p108
      %p110 = scmp.ne.s32.totalorder %s96, %s97
      %p111 = scmp.eq.s32.totalorder %s37, 1
      %p112 = por %p110, %p111
      %p114 = scmp.ne.s32.totalorder %s97, %s113
      %p115 = scmp.eq.s32.totalorder %s37, 0
      %p116 = por %p114, %p115
      %s118 = sadd.s32 %s117, 1
      %p121 = scmp.eq.s32.totalorder %s31, 1
      %p122 = scmp.ne.s32.totalorder %s117, %s119
      %p123 = scmp.eq.s32.totalorder %s31, 0
      %p124 = por %p122, %p123
      %p125 = scmp.ne.s32.totalorder %s117, %s119
      %p126 = scmp.eq.s32.totalorder %s36, 1
      %p127 = por %p125, %p126
      %p128 = scmp.ne.s32.totalorder %s119, %s120
      %p129 = scmp.eq.s32.totalorder %s36, 0
      %p130 = por %p128, %p129
      %p131 = scmp.ne.s32.totalorder %s119, %s120
      %p132 = scmp.eq.s32.totalorder %s37, 1
      %p133 = por %p131, %p132
      %p135 = scmp.ne.s32.totalorder %s120, %s134
      %p136 = scmp.eq.s32.totalorder %s37, 0
      %p137 = por %p135, %p136
      %s139 = sadd.s32 %s138, 1
      %p142 = scmp.eq.s32.totalorder %s31, 1
      %p143 = scmp.ne.s32.totalorder %s138, %s140
      %p144 = scmp.eq.s32.totalorder %s31, 0
      %p145 = por %p143, %p144
      %p146 = scmp.ne.s32.totalorder %s138, %s140
      %p147 = scmp.eq.s32.totalorder %s36, 1
      %p148 = por %p146, %p147
      %p149 = scmp.ne.s32.totalorder %s140, %s141
      %p150 = scmp.eq.s32.totalorder %s36, 0
      %p151 = por %p149, %p150
      %p152 = scmp.ne.s32.totalorder %s140, %s141
      %p153 = scmp.eq.s32.totalorder %s37, 1
      %p154 = por %p152, %p153
      %p156 = scmp.ne.s32.totalorder %s141, %s155
      %p157 = scmp.eq.s32.totalorder %s37, 0
      %p158 = por %p156, %p157
      %s160 = sadd.s32 %s159, 1
      %p163 = scmp.eq.s32.totalorder %s31, 1
      %p164 = scmp.ne.s32.totalorder %s159, %s161
      %p165 = scmp.eq.s32.totalorder %s31, 0
      %p166 = por %p164, %p165
      %p167 = scmp.ne.s32.totalorder %s159, %s161
      %p168 = scmp.eq.s32.totalorder %s36, 1
      %p169 = por %p167, %p168
      %p170 = scmp.ne.s32.totalorder %s161, %s162
      %p171 = scmp.eq.s32.totalorder %s36, 0
      %p172 = por %p170, %p171
      %p173 = scmp.ne.s32.totalorder %s161, %s162
      %p174 = scmp.eq.s32.totalorder %s37, 1
      %p175 = por %p173, %p174
      %p177 = scmp.ne.s32.totalorder %s162, %s176
      %p178 = scmp.eq.s32.totalorder %s37, 0
      %p179 = por %p177, %p178
      %s181 = sadd.s32 %s180, 1
      %p184 = scmp.eq.s32.totalorder %s31, 1
      %p185 = scmp.ne.s32.totalorder %s180, %s182
      %p186 = scmp.eq.s32.totalorder %s31, 0
      %p187 = por %p185, %p186
      %p188 = scmp.ne.s32.totalorder %s180, %s182
      %p189 = scmp.eq.s32.totalorder %s36, 1
      %p190 = por %p188, %p189
      %p191 = scmp.ne.s32.totalorder %s182, %s183
      %p192 = scmp.eq.s32.totalorder %s36, 0
      %p193 = por %p191, %p192
      %p194 = scmp.ne.s32.totalorder %s182, %s183
      %p195 = scmp.eq.s32.totalorder %s37, 1
      %p196 = por %p194, %p195
      %p198 = scmp.ne.s32.totalorder %s183, %s197
      %p199 = scmp.eq.s32.totalorder %s37, 0
      %p200 = por %p198, %p199
      %s202 = sadd.s32 %s201, 1
      %p205 = scmp.eq.s32.totalorder %s31, 1
      %p206 = scmp.ne.s32.totalorder %s201, %s203
      %p207 = scmp.eq.s32.totalorder %s31, 0
      %p208 = por %p206, %p207
      %p209 = scmp.ne.s32.totalorder %s201, %s203
      %p210 = scmp.eq.s32.totalorder %s36, 1
      %p211 = por %p209, %p210
      %p212 = scmp.ne.s32.totalorder %s203, %s204
      %p213 = scmp.eq.s32.totalorder %s36, 0
      %p214 = por %p212, %p213
      %p215 = scmp.ne.s32.totalorder %s203, %s204
      %p216 = scmp.eq.s32.totalorder %s37, 1
      %p217 = por %p215, %p216
      %p219 = scmp.ne.s32.totalorder %s204, %s218
      %p220 = scmp.eq.s32.totalorder %s37, 0
      %p221 = por %p219, %p220
      %s223 = sadd.s32 %s222, 1
      %p226 = scmp.eq.s32.totalorder %s31, 1
      %p227 = scmp.ne.s32.totalorder %s222, %s224
      %p228 = scmp.eq.s32.totalorder %s31, 0
      %p229 = por %p227, %p228
      %p230 = scmp.ne.s32.totalorder %s222, %s224
      %p231 = scmp.eq.s32.totalorder %s36, 1
      %p232 = por %p230, %p231
      %p233 = scmp.ne.s32.totalorder %s224, %s225
      %p234 = scmp.eq.s32.totalorder %s36, 0
      %p235 = por %p233, %p234
      %p236 = scmp.ne.s32.totalorder %s224, %s225
      %p237 = scmp.eq.s32.totalorder %s37, 1
      %p238 = por %p236, %p237
      %p240 = scmp.ne.s32.totalorder %s225, %s239
      %p241 = scmp.eq.s32.totalorder %s37, 0
      %p242 = por %p240, %p241
      %s244 = sadd.s32 %s243, 1
      %p247 = scmp.eq.s32.totalorder %s31, 1
      %p248 = scmp.ne.s32.totalorder %s243, %s245
      %p249 = scmp.eq.s32.totalorder %s31, 0
      %p250 = por %p248, %p249
      %p251 = scmp.ne.s32.totalorder %s243, %s245
      %p252 = scmp.eq.s32.totalorder %s36, 1
      %p253 = por %p251, %p252
      %p254 = scmp.ne.s32.totalorder %s245, %s246
      %p255 = scmp.eq.s32.totalorder %s36, 0
      %p256 = por %p254, %p255
      %p257 = scmp.ne.s32.totalorder %s245, %s246
      %p258 = scmp.eq.s32.totalorder %s37, 1
      %p259 = por %p257, %p258
      %p261 = scmp.ne.s32.totalorder %s246, %s260
      %p262 = scmp.eq.s32.totalorder %s37, 0
      %p263 = por %p261, %p262
      %s265 = sadd.s32 %s264, 1
      %p268 = scmp.eq.s32.totalorder %s31, 1
      %p269 = scmp.ne.s32.totalorder %s264, %s266
      %p270 = scmp.eq.s32.totalorder %s31, 0
      %p271 = por %p269, %p270
      %p272 = scmp.ne.s32.totalorder %s264, %s266
      %p273 = scmp.eq.s32.totalorder %s36, 1
      %p274 = por %p272, %p273
      %p275 = scmp.ne.s32.totalorder %s266, %s267
      %p276 = scmp.eq.s32.totalorder %s36, 0
      %p277 = por %p275, %p276
      %p278 = scmp.ne.s32.totalorder %s266, %s267
      %p279 = scmp.eq.s32.totalorder %s37, 1
      %p280 = por %p278, %p279
      %p282 = scmp.ne.s32.totalorder %s267, %s281
      %p283 = scmp.eq.s32.totalorder %s37, 0
      %p284 = por %p282, %p283
      %s286 = sadd.s32 %s285, 1
      %p289 = scmp.eq.s32.totalorder %s31, 1
      %p290 = scmp.ne.s32.totalorder %s285, %s287
      %p291 = scmp.eq.s32.totalorder %s31, 0
      %p292 = por %p290, %p291
      %p293 = scmp.ne.s32.totalorder %s285, %s287
      %p294 = scmp.eq.s32.totalorder %s36, 1
      %p295 = por %p293, %p294
      %p296 = scmp.ne.s32.totalorder %s287, %s288
      %p297 = scmp.eq.s32.totalorder %s36, 0
      %p298 = por %p296, %p297
      %p299 = scmp.ne.s32.totalorder %s287, %s288
      %p300 = scmp.eq.s32.totalorder %s37, 1
      %p301 = por %p299, %p300
      %p303 = scmp.ne.s32.totalorder %s288, %s302
      %p304 = scmp.eq.s32.totalorder %s37, 0
      %p305 = por %p303, %p304
      %s307 = sadd.s32 %s306, 1
      %p310 = scmp.eq.s32.totalorder %s31, 1
      %p311 = scmp.ne.s32.totalorder %s306, %s308
      %p312 = scmp.eq.s32.totalorder %s31, 0
      %p313 = por %p311, %p312
      %p314 = scmp.ne.s32.totalorder %s306, %s308
      %p315 = scmp.eq.s32.totalorder %s36, 1
      %p316 = por %p314, %p315
      %p317 = scmp.ne.s32.totalorder %s308, %s309
      %p318 = scmp.eq.s32.totalorder %s36, 0
      %p319 = por %p317, %p318
      %p320 = scmp.ne.s32.totalorder %s308, %s309
      %p321 = scmp.eq.s32.totalorder %s37, 1
      %p322 = por %p320, %p321
      %p324 = scmp.ne.s32.totalorder %s309, %s323
      %p325 = scmp.eq.s32.totalorder %s37, 0
      %p326 = por %p324, %p325
      %s328 = sadd.s32 %s327, 1
      %p331 = scmp.eq.s32.totalorder %s31, 1
      %p332 = scmp.ne.s32.totalorder %s327, %s329
      %p333 = scmp.eq.s32.totalorder %s31, 0
      %p334 = por %p332, %p333
      %p335 = scmp.ne.s32.totalorder %s327, %s329
      %p336 = scmp.eq.s32.totalorder %s36, 1
      %p337 = por %p335, %p336
      %p338 = scmp.ne.s32.totalorder %s329, %s330
      %p339 = scmp.eq.s32.totalorder %s36, 0
      %p340 = por %p338, %p339
      %p341 = scmp.ne.s32.totalorder %s329, %s330
      %p342 = scmp.eq.s32.totalorder %s37, 1
      %p343 = por %p341, %p342
      %p345 = scmp.ne.s32.totalorder %s330, %s344
      %p346 = scmp.eq.s32.totalorder %s37, 0
      %p347 = por %p345, %p346
      %s349 = sadd.s32 %s348, 1
      %p352 = scmp.eq.s32.totalorder %s31, 1
      %p353 = scmp.ne.s32.totalorder %s348, %s350
      %p354 = scmp.eq.s32.totalorder %s31, 0
      %p355 = por %p353, %p354
      %p356 = scmp.ne.s32.totalorder %s348, %s350
      %p357 = scmp.eq.s32.totalorder %s36, 1
      %p358 = por %p356, %p357
      %p359 = scmp.ne.s32.totalorder %s350, %s351
      %p360 = scmp.eq.s32.totalorder %s36, 0
      %p361 = por %p359, %p360
      %p362 = scmp.ne.s32.totalorder %s350, %s351
      %p363 = scmp.eq.s32.totalorder %s37, 1
      %p364 = por %p362, %p363
      %p366 = scmp.ne.s32.totalorder %s351, %s365
      %p367 = scmp.eq.s32.totalorder %s37, 0
      %p368 = por %p366, %p367
      %s370 = sadd.s32 %s369, 1
      %p373 = scmp.eq.s32.totalorder %s31, 1
      %p374 = scmp.ne.s32.totalorder %s369, %s371
      %p375 = scmp.eq.s32.totalorder %s31, 0
      %p376 = por %p374, %p375
      %p377 = scmp.ne.s32.totalorder %s369, %s371
      %p378 = scmp.eq.s32.totalorder %s36, 1
      %p379 = por %p377, %p378
      %p380 = scmp.ne.s32.totalorder %s371, %s372
      %p381 = scmp.eq.s32.totalorder %s36, 0
      %p382 = por %p380, %p381
      %p383 = scmp.ne.s32.totalorder %s371, %s372
      %p384 = scmp.eq.s32.totalorder %s37, 1
      %p385 = por %p383, %p384
      %p387 = scmp.ne.s32.totalorder %s372, %s386
      %p388 = scmp.eq.s32.totalorder %s37, 0
      %p389 = por %p387, %p388
      %s391 = sadd.s32 %s390, 1
      %p394 = scmp.eq.s32.totalorder %s31, 1
      %p395 = scmp.ne.s32.totalorder %s390, %s392
      %p396 = scmp.eq.s32.totalorder %s31, 0
      %p397 = por %p395, %p396
      %p398 = scmp.ne.s32.totalorder %s390, %s392
      %p399 = scmp.eq.s32.totalorder %s36, 1
      %p400 = por %p398, %p399
      %p401 = scmp.ne.s32.totalorder %s392, %s393
      %p402 = scmp.eq.s32.totalorder %s36, 0
      %p403 = por %p401, %p402
      %p404 = scmp.ne.s32.totalorder %s392, %s393
      %p405 = scmp.eq.s32.totalorder %s37, 1
      %p406 = por %p404, %p405
      %p408 = scmp.ne.s32.totalorder %s393, %s407
      %p409 = scmp.eq.s32.totalorder %s37, 0
      %p410 = por %p408, %p409
      %s412 = sadd.s32 %s411, 1
      %p415 = scmp.eq.s32.totalorder %s31, 1
      %p416 = scmp.ne.s32.totalorder %s411, %s413
      %p417 = scmp.eq.s32.totalorder %s31, 0
      %p418 = por %p416, %p417
      %p419 = scmp.ne.s32.totalorder %s411, %s413
      %p420 = scmp.eq.s32.totalorder %s36, 1
      %p421 = por %p419, %p420
      %p422 = scmp.ne.s32.totalorder %s413, %s414
      %p423 = scmp.eq.s32.totalorder %s36, 0
      %p424 = por %p422, %p423
      %p425 = scmp.ne.s32.totalorder %s413, %s414
      %p426 = scmp.eq.s32.totalorder %s37, 1
      %p427 = por %p425, %p426
      %p429 = scmp.ne.s32.totalorder %s414, %s428
      %p430 = scmp.eq.s32.totalorder %s37, 0
      %p431 = por %p429, %p430
      %s433 = sadd.s32 %s432, 1
      %p436 = scmp.eq.s32.totalorder %s31, 1
      %p437 = scmp.ne.s32.totalorder %s432, %s434
      %p438 = scmp.eq.s32.totalorder %s31, 0
      %p439 = por %p437, %p438
      %p440 = scmp.ne.s32.totalorder %s432, %s434
      %p441 = scmp.eq.s32.totalorder %s36, 1
      %p442 = por %p440, %p441
      %p443 = scmp.ne.s32.totalorder %s434, %s435
      %p444 = scmp.eq.s32.totalorder %s36, 0
      %p445 = por %p443, %p444
      %p446 = scmp.ne.s32.totalorder %s434, %s435
      %p447 = scmp.eq.s32.totalorder %s37, 1
      %p448 = por %p446, %p447
      %p450 = scmp.ne.s32.totalorder %s435, %s449
      %p451 = scmp.eq.s32.totalorder %s37, 0
      %p452 = por %p450, %p451
      %s454 = sadd.s32 %s453, 1
      %p457 = scmp.eq.s32.totalorder %s31, 1
      %p458 = scmp.ne.s32.totalorder %s453, %s455
      %p459 = scmp.eq.s32.totalorder %s31, 0
      %p460 = por %p458, %p459
      %p461 = scmp.ne.s32.totalorder %s453, %s455
      %p462 = scmp.eq.s32.totalorder %s36, 1
      %p463 = por %p461, %p462
      %p464 = scmp.ne.s32.totalorder %s455, %s456
      %p465 = scmp.eq.s32.totalorder %s36, 0
      %p466 = por %p464, %p465
      %p467 = scmp.ne.s32.totalorder %s455, %s456
      %p468 = scmp.eq.s32.totalorder %s37, 1
      %p469 = por %p467, %p468
      %p471 = scmp.ne.s32.totalorder %s456, %s470
      %p472 = scmp.eq.s32.totalorder %s37, 0
      %p473 = por %p471, %p472
      %s474 = ssub.s32 %s31, %s38
      %p475 = scmp.eq.s32.totalorder %s474, 0
      %s477 = sadd.s32 %s476, 1
      %s478 = scalar_select %p475, %s476, %s477
      %p481 = pneg %p475
      %p482 = scmp.eq.s32.totalorder %s31, 1
      %p483 = por %p481, %p482
      %p484 = scmp.ne.s32.totalorder %s476, %s479
      %p485 = scmp.eq.s32.totalorder %s31, 0
      %p486 = por %p484, %p485
      %p487 = scmp.ne.s32.totalorder %s476, %s479
      %p488 = scmp.eq.s32.totalorder %s36, 1
      %p489 = por %p487, %p488
      %p490 = scmp.ne.s32.totalorder %s479, %s480
      %p491 = scmp.eq.s32.totalorder %s36, 0
      %p492 = por %p490, %p491
      %p493 = scmp.ne.s32.totalorder %s479, %s480
      %p494 = scmp.eq.s32.totalorder %s37, 1
      %p495 = por %p493, %p494
      %p497 = scmp.ne.s32.totalorder %s480, %s496
      %p498 = scmp.eq.s32.totalorder %s37, 0
      %p499 = por %p497, %p498
      %p500 = scmp.le.s32.totalorder 1, %s31
      %p501 = scmp.lt.s32.totalorder %s31, 3
      %p502 = pnand %p500, %p501
      %p503 = pneg %p502
      // Predicated region
      $region9: #{_forward_core.1} parent=5 // pred_check
        _
      $region10: #{_forward_core.1} parent=5 // pred_check_branch
        %505 = sbr.rel (%p502) target = $region12
      $region11: #{_forward_core.1} parent=5 // pred_region
        %s506 = ssub.s32 %s31, 1
        // Predicated region
        $region13: #{_forward_core.1} parent=11 // pred_check
          %p507 = pneg %p130
        $region14: #{_forward_core.1} parent=11 // pred_check_branch
          %509 = sbr.rel (%p507) target = $region16
        $region15: #{_forward_core.1} parent=11 // pred_region
          _
        $region16: #{_forward_core.1} parent=11 // pred_fallthru
          _
        // Predicated region
        $region17: #{_forward_core.1} parent=11 // pred_check
          %p510 = pneg %p151
        $region18: #{_forward_core.1} parent=11 // pred_check_branch
          %512 = sbr.rel (%p510) target = $region20
        $region19: #{_forward_core.1} parent=11 // pred_region
          _
        $region20: #{_forward_core.1} parent=11 // pred_fallthru
          _
        // Predicated region
        $region21: #{_forward_core.1} parent=11 // pred_check
          %p513 = pneg %p172
        $region22: #{_forward_core.1} parent=11 // pred_check_branch
          %515 = sbr.rel (%p513) target = $region24
        $region23: #{_forward_core.1} parent=11 // pred_region
          _
        $region24: #{_forward_core.1} parent=11 // pred_fallthru
          _
        // Predicated region
        $region25: #{_forward_core.1} parent=11 // pred_check
          %p516 = pneg %p193
        $region26: #{_forward_core.1} parent=11 // pred_check_branch
          %518 = sbr.rel (%p516) target = $region28
        $region27: #{_forward_core.1} parent=11 // pred_region
          _
        $region28: #{_forward_core.1} parent=11 // pred_fallthru
          _
        // Predicated region
        $region29: #{_forward_core.1} parent=11 // pred_check
          %p519 = pneg %p214
        $region30: #{_forward_core.1} parent=11 // pred_check_branch
          %521 = sbr.rel (%p519) target = $region32
        $region31: #{_forward_core.1} parent=11 // pred_region
          _
        $region32: #{_forward_core.1} parent=11 // pred_fallthru
          _
        // Predicated region
        $region33: #{_forward_core.1} parent=11 // pred_check
          %p522 = pneg %p235
        $region34: #{_forward_core.1} parent=11 // pred_check_branch
          %524 = sbr.rel (%p522) target = $region36
        $region35: #{_forward_core.1} parent=11 // pred_region
          _
        $region36: #{_forward_core.1} parent=11 // pred_fallthru
          _
        // Predicated region
        $region37: #{_forward_core.1} parent=11 // pred_check
          %p525 = pneg %p256
        $region38: #{_forward_core.1} parent=11 // pred_check_branch
          %527 = sbr.rel (%p525) target = $region40
        $region39: #{_forward_core.1} parent=11 // pred_region
          %529 = vsyncadd [#allocation3], 0
          %s530 = sshll.u32 %s9, 4
          %s531 = int_to_ptr.hbm [resolvable:$true] %s530
          %s532 = sshll.u32 [#allocation2], 4
          %s533 = int_to_ptr.vmem [resolvable:$true] %s532
          %538 = dma.hbm_to_vmem [thread:$0]  %s531, 32, %s533, [#allocation3], 16, 16, 1
        $region40: #{_forward_core.1} parent=11 // pred_fallthru
          _
        // Predicated region
        $region41: #{_forward_core.1} parent=11 // pred_check
          %p539 = pneg %p277
        $region42: #{_forward_core.1} parent=11 // pred_check_branch
          %541 = sbr.rel (%p539) target = $region44
        $region43: #{_forward_core.1} parent=11 // pred_region
          _
        $region44: #{_forward_core.1} parent=11 // pred_fallthru
          _
        // Predicated region
        $region45: #{_forward_core.1} parent=11 // pred_check
          %p542 = pneg %p298
        $region46: #{_forward_core.1} parent=11 // pred_check_branch
          %544 = sbr.rel (%p542) target = $region48
        $region47: #{_forward_core.1} parent=11 // pred_region
          %546 = vsyncadd [#allocation5], 0
          %s547 = sshll.u32 %s11, 4
          %s548 = int_to_ptr.hbm [resolvable:$true] %s547
          %s549 = sshll.u32 [#allocation4], 4
          %s550 = int_to_ptr.vmem [resolvable:$true] %s549
          %555 = dma.hbm_to_vmem [thread:$0]  %s548, 32, %s550, [#allocation5], 16, 16, 1
        $region48: #{_forward_core.1} parent=11 // pred_fallthru
          _
        // Predicated region
        $region49: #{_forward_core.1} parent=11 // pred_check
          %p556 = pneg %p319
        $region50: #{_forward_core.1} parent=11 // pred_check_branch
          %558 = sbr.rel (%p556) target = $region52
        $region51: #{_forward_core.1} parent=11 // pred_region
          %560 = vsyncadd [#allocation5], 0
          %s561 = sshll.u32 %s12, 4
          %s562 = int_to_ptr.hbm [resolvable:$true] %s561
          %s563 = sshll.u32 [#allocation6], 4
          %s564 = int_to_ptr.vmem [resolvable:$true] %s563
          %569 = dma.hbm_to_vmem [thread:$0]  %s562, 32, %s564, [#allocation5], 16, 16, 1
        $region52: #{_forward_core.1} parent=11 // pred_fallthru
          _
        // Predicated region
        $region53: #{_forward_core.1} parent=11 // pred_check
          %p570 = pneg %p340
        $region54: #{_forward_core.1} parent=11 // pred_check_branch
          %572 = sbr.rel (%p570) target = $region56
        $region55: #{_forward_core.1} parent=11 // pred_region
          %574 = vsyncadd [#allocation8], 0
          %s575 = sshll.u32 %s13, 4
          %s576 = int_to_ptr.hbm [resolvable:$true] %s575
          %s577 = sshll.u32 [#allocation7], 4
          %s578 = int_to_ptr.vmem [resolvable:$true] %s577
          %583 = dma.hbm_to_vmem [thread:$0]  %s576, 32, %s578, [#allocation8], 16, 16, 1
        $region56: #{_forward_core.1} parent=11 // pred_fallthru
          _
        // Predicated region
        $region57: #{_forward_core.1} parent=11 // pred_check
          %p584 = pneg %p361
        $region58: #{_forward_core.1} parent=11 // pred_check_branch
          %586 = sbr.rel (%p584) target = $region60
        $region59: #{_forward_core.1} parent=11 // pred_region
          %588 = vsyncadd [#allocation8], 0
          %s589 = sshll.u32 %s14, 4
          %s590 = int_to_ptr.hbm [resolvable:$true] %s589
          %s591 = sshll.u32 [#allocation9], 4
          %s592 = int_to_ptr.vmem [resolvable:$true] %s591
          %597 = dma.hbm_to_vmem [thread:$0]  %s590, 32, %s592, [#allocation8], 16, 16, 1
        $region60: #{_forward_core.1} parent=11 // pred_fallthru
          _
        // Predicated region
        $region61: #{_forward_core.1} parent=11 // pred_check
          %p598 = pneg %p382
        $region62: #{_forward_core.1} parent=11 // pred_check_branch
          %600 = sbr.rel (%p598) target = $region64
        $region63: #{_forward_core.1} parent=11 // pred_region
          %602 = vsyncadd [#allocation11], 0
          %s603 = sshll.u32 %s15, 4
          %s604 = int_to_ptr.hbm [resolvable:$true] %s603
          %s605 = sshll.u32 [#allocation10], 4
          %s606 = int_to_ptr.vmem [resolvable:$true] %s605
          %611 = dma.hbm_to_vmem [thread:$0]  %s604, 32, %s606, [#allocation11], 16, 16, 1
        $region64: #{_forward_core.1} parent=11 // pred_fallthru
          _
        // Predicated region
        $region65: #{_forward_core.1} parent=11 // pred_check
          %p612 = pneg %p403
        $region66: #{_forward_core.1} parent=11 // pred_check_branch
          %614 = sbr.rel (%p612) target = $region68
        $region67: #{_forward_core.1} parent=11 // pred_region
          _
        $region68: #{_forward_core.1} parent=11 // pred_fallthru
          _
        // Predicated region
        $region69: #{_forward_core.1} parent=11 // pred_check
          %p615 = pneg %p424
        $region70: #{_forward_core.1} parent=11 // pred_check_branch
          %617 = sbr.rel (%p615) target = $region72
        $region71: #{_forward_core.1} parent=11 // pred_region
          %619 = vsyncadd [#allocation11], 0
          %s621 = sshll.u32 %s17, 4
          %s622 = int_to_ptr.hbm [resolvable:$true] %s621
          %s623 = sshll.u32 [#allocation12], 4
          %s624 = int_to_ptr.vmem [resolvable:$true] %s623
          %626 = dma.hbm_to_vmem [thread:$0]  %s622, 16, %s624, [#allocation11]
        $region72: #{_forward_core.1} parent=11 // pred_fallthru
          _
        // Predicated region
        $region73: #{_forward_core.1} parent=11 // pred_check
          %p627 = pneg %p445
        $region74: #{_forward_core.1} parent=11 // pred_check_branch
          %629 = sbr.rel (%p627) target = $region76
        $region75: #{_forward_core.1} parent=11 // pred_region
          _
        $region76: #{_forward_core.1} parent=11 // pred_fallthru
          _
        // Predicated region
        $region77: #{_forward_core.1} parent=11 // pred_check
          %p630 = pneg %p466
        $region78: #{_forward_core.1} parent=11 // pred_check_branch
          %632 = sbr.rel (%p630) target = $region80
        $region79: #{_forward_core.1} parent=11 // pred_region
          %634 = vsyncadd [#allocation14], 0
          %s636 = sshll.u32 %s19, 4
          %s637 = int_to_ptr.hbm [resolvable:$true] %s636
          %s638 = sshll.u32 [#allocation13], 4
          %s639 = int_to_ptr.vmem [resolvable:$true] %s638
          %641 = dma.hbm_to_vmem [thread:$0]  %s637, 16, %s639, [#allocation14]
        $region80: #{_forward_core.1} parent=11 // pred_fallthru
          _
      $region12: #{_forward_core.1} parent=5 // pred_fallthru
        _
      %p642 = scmp.lt.s32.totalorder %s31, 2
      // Predicated region
      $region81: #{_forward_core.1} parent=5 // pred_check
        %p643 = pneg %p642
      $region82: #{_forward_core.1} parent=5 // pred_check_branch
        %645 = sbr.rel (%p643) target = $region84
      $region83: #{_forward_core.1} parent=5 // pred_region
        // Predicated region
        $region85: #{_forward_core.1} parent=83 // pred_check
          %p646 = pneg %p51
        $region86: #{_forward_core.1} parent=83 // pred_check_branch
          %648 = sbr.rel (%p646) target = $region88
        $region87: #{_forward_core.1} parent=83 // pred_region
          %s649 = smul.u32 2, %s31
          %p650 = scmp.lt.s32.totalorder %s649, 3
          %s651 = scalar_select %p650, %s649, 3
          %s652 = smul.addr %s651, 4
          %s653 = scalar_lea.vmem %s0, %s652
          %s654 = smul.u32 2, %s31
        $region88: #{_forward_core.1} parent=83 // pred_fallthru
          _
        // Predicated region
        $region89: #{_forward_core.1} parent=83 // pred_check
          %p655 = pneg %p77
        $region90: #{_forward_core.1} parent=83 // pred_check_branch
          %657 = sbr.rel (%p655) target = $region92
        $region91: #{_forward_core.1} parent=83 // pred_region
          %s658 = smul.u32 2, %s31
          %p659 = scmp.lt.s32.totalorder %s658, 3
          %s660 = scalar_select %p659, %s658, 3
          %s661 = smul.addr %s660, 4
          %s662 = scalar_lea.vmem %s1, %s661
          %s663 = smul.u32 2, %s31
        $region92: #{_forward_core.1} parent=83 // pred_fallthru
          _
        // Predicated region
        $region93: #{_forward_core.1} parent=83 // pred_check
          %p664 = pneg %p103
        $region94: #{_forward_core.1} parent=83 // pred_check_branch
          %666 = sbr.rel (%p664) target = $region96
        $region95: #{_forward_core.1} parent=83 // pred_region
          %s667 = smul.u32 2, %s31
          %p668 = scmp.lt.s32.totalorder %s667, 3
          %s669 = scalar_select %p668, %s667, 3
          %s670 = scalar_lea.vmem %s2, %s669
          %s671 = smul.u32 2, %s31
        $region96: #{_forward_core.1} parent=83 // pred_fallthru
          _
      $region84: #{_forward_core.1} parent=5 // pred_fallthru
        _
      %p672 = scmp.le.s32.totalorder 1, %s31
      %p673 = scmp.lt.s32.totalorder %s31, 3
      %p674 = pnand %p672, %p673
      %p675 = pneg %p674
      // Predicated region
      $region97: #{_forward_core.1} parent=5 // pred_check
        _
      $region98: #{_forward_core.1} parent=5 // pred_check_branch
        %677 = sbr.rel (%p674) target = $region100
      $region99: #{_forward_core.1} parent=5 // pred_region
        %s678 = ssub.s32 %s31, 1
        // Predicated region
        $region101: #{_forward_core.1} parent=99 // pred_check
          %p679 = pneg %p256
        $region102: #{_forward_core.1} parent=99 // pred_check_branch
          %681 = sbr.rel (%p679) target = $region104
        $region103: #{_forward_core.1} parent=99 // pred_region
          %683 = dma.done [#allocation3], 32
        $region104: #{_forward_core.1} parent=99 // pred_fallthru
          _
        // Predicated region
        $region105: #{_forward_core.1} parent=99 // pred_check
          %p684 = pneg %p298
        $region106: #{_forward_core.1} parent=99 // pred_check_branch
          %686 = sbr.rel (%p684) target = $region108
        $region107: #{_forward_core.1} parent=99 // pred_region
          %688 = dma.done [#allocation5], 32
        $region108: #{_forward_core.1} parent=99 // pred_fallthru
          _
        // Predicated region
        $region109: #{_forward_core.1} parent=99 // pred_check
          %p689 = pneg %p319
        $region110: #{_forward_core.1} parent=99 // pred_check_branch
          %691 = sbr.rel (%p689) target = $region112
        $region111: #{_forward_core.1} parent=99 // pred_region
          %693 = dma.done [#allocation5], 32
        $region112: #{_forward_core.1} parent=99 // pred_fallthru
          _
        // Predicated region
        $region113: #{_forward_core.1} parent=99 // pred_check
          %p694 = pneg %p340
        $region114: #{_forward_core.1} parent=99 // pred_check_branch
          %696 = sbr.rel (%p694) target = $region116
        $region115: #{_forward_core.1} parent=99 // pred_region
          %698 = dma.done [#allocation8], 32
        $region116: #{_forward_core.1} parent=99 // pred_fallthru
          _
        // Predicated region
        $region117: #{_forward_core.1} parent=99 // pred_check
          %p699 = pneg %p361
        $region118: #{_forward_core.1} parent=99 // pred_check_branch
          %701 = sbr.rel (%p699) target = $region120
        $region119: #{_forward_core.1} parent=99 // pred_region
          %703 = dma.done [#allocation8], 32
        $region120: #{_forward_core.1} parent=99 // pred_fallthru
          _
        // Predicated region
        $region121: #{_forward_core.1} parent=99 // pred_check
          %p704 = pneg %p382
        $region122: #{_forward_core.1} parent=99 // pred_check_branch
          %706 = sbr.rel (%p704) target = $region124
        $region123: #{_forward_core.1} parent=99 // pred_region
          %708 = dma.done [#allocation11], 32
        $region124: #{_forward_core.1} parent=99 // pred_fallthru
          _
        // Predicated region
        $region125: #{_forward_core.1} parent=99 // pred_check
          %p709 = pneg %p424
        $region126: #{_forward_core.1} parent=99 // pred_check_branch
          %711 = sbr.rel (%p709) target = $region128
        $region127: #{_forward_core.1} parent=99 // pred_region
          %713 = dma.done [#allocation11], 16
        $region128: #{_forward_core.1} parent=99 // pred_fallthru
          _
        // Predicated region
        $region129: #{_forward_core.1} parent=99 // pred_check
          %p714 = pneg %p466
        $region130: #{_forward_core.1} parent=99 // pred_check_branch
          %716 = sbr.rel (%p714) target = $region132
        $region131: #{_forward_core.1} parent=99 // pred_region
          %718 = dma.done [#allocation14], 16
        $region132: #{_forward_core.1} parent=99 // pred_fallthru
          _
        %s719 = smul.u32 2, %s36
        %p720 = scmp.lt.s32.totalorder %s719, 3
        %s721 = scalar_select %p720, %s719, 3
        %s722 = smul.addr %s721, 4
        %s723 = scalar_lea.vmem %s0, %s722
        %p724 = pneg %p57
        %p725 = pneg %p54
        %s726 = smul.u32 2, %s36
        %p727 = scmp.lt.s32.totalorder %s726, 3
        %s728 = scalar_select %p727, %s726, 3
        %s729 = smul.addr %s728, 4
        %s730 = scalar_lea.vmem %s1, %s729
        %p731 = pneg %p83
        %p732 = pneg %p80
        %s733 = smul.u32 2, %s36
        %p734 = scmp.lt.s32.totalorder %s733, 3
        %s735 = scalar_select %p734, %s733, 3
        %s736 = scalar_lea.vmem %s2, %s735
        %p737 = pneg %p109
        %p738 = pneg %p106
        %p739 = pneg %p130
        %p740 = pneg %p127
        %p741 = pneg %p151
        %p742 = pneg %p148
        %p743 = pneg %p172
        %p744 = pneg %p169
        %p745 = pneg %p193
        %p746 = pneg %p190
        %p747 = pneg %p214
        %p748 = pneg %p211
        %p749 = pneg %p235
        %p750 = pneg %p232
        %p751 = pneg %p256
        %p752 = pneg %p253
        %p753 = pneg %p277
        %p754 = pneg %p274
        %p755 = pneg %p298
        %p756 = pneg %p295
        %p757 = pneg %p319
        %p758 = pneg %p316
        %p759 = pneg %p340
        %p760 = pneg %p337
        %p761 = pneg %p361
        %p762 = pneg %p358
        %p763 = pneg %p382
        %p764 = pneg %p379
        %p765 = pneg %p403
        %p766 = pneg %p400
        %p767 = pneg %p424
        %p768 = pneg %p421
        %p769 = pneg %p445
        %p770 = pneg %p442
        %p771 = pneg %p466
        %p772 = pneg %p463
        %p773 = pneg %p492
        %p774 = pneg %p489
        %s775 = smul.u32 2, %s36
        %p776 = scmp.lt.s32.totalorder %s775, 3
        %s777 = scalar_select %p776, %s775, 3
        %s778 = smul.addr %s777, 4
        %s779 = scalar_lea.vmem %s20, %s778
        %s780 = smul.u32 2, %s36
        %p781 = scmp.lt.s32.totalorder %s780, 3
        %s782 = scalar_select %p781, %s780, 3
        %s783 = smul.addr %s782, 4
        %s784 = scalar_lea.vmem %s0, %s783
        %s785 = smul.u32 2, %s36
        %s786 = smul.u32 2, %s36
        %p787 = scmp.lt.s32.totalorder %s786, 3
        %s788 = scalar_select %p787, %s786, 3
        %s789 = smul.addr %s788, 4
        %s790 = scalar_lea.vmem %s1, %s789
        %s791 = smul.u32 2, %s36
        %s792 = smul.u32 2, %s36
        %p793 = scmp.lt.s32.totalorder %s792, 3
        %s794 = scalar_select %p793, %s792, 3
        %s795 = scalar_lea.vmem %s2, %s794
        %s796 = smul.u32 2, %s36
        %s797 = smul.u32 2, %s36
        %p798 = scmp.lt.s32.totalorder %s797, 3
        %s799 = scalar_select %p798, %s797, 3
        %s800 = smul.addr %s799, 4
        %s801 = scalar_lea.vmem %s20, %s800
        %s802 = smul.u32 2, %s36
        %v804 = vld [vmem:[%s790] sm:$0xf]
        %v805 = vld [vmem:[%s790 + $0x4] sm:$0xf]
        %v806 = vunpack.c.l.bf16 %v804
        %v807 = vunpack.c.l.bf16 %v805
        %v808 = vld [vmem:[%s795] sm:$0x1]
        %v809 = vld [vmem:[%s795 + $0x1] sm:$0x1]
        %v810 = vld [vmem:[%s784] sm:$0xf]
        %v811 = vld [vmem:[%s784 + $0x4] sm:$0xf]
        %v812 = vld [vmem:[%s3] sm:$0x3]
        %v815 = vunpack.c.l.b16 %v810
        %v816 = vunpack.c.l.b16 %v811
        %v817 = vpack.c.b16 %v816, %v815
        %vm818 = vcmask 31744
        %v820 = vsel %vm818, %v817, 0
        %vm822 = vcmask 1041408
        %v824 = vsel %vm822, %v812, 0
        %826 = vmatpush.bf16.msra.mxu0 0
        %827 = vmatpush.bf16.msra.mxu0 0
        %828 = vmatpush.bf16.msra.mxu0 0
        %829 = vmatpush.bf16.msra.mxu0 0
        %830 = vmatpush.bf16.msra.mxu0 0
        %831 = vmatpush.bf16.msra.mxu0 0
        %832 = vmatpush.bf16.msra.mxu0 0
        %833 = vmatpush.bf16.msra.mxu0 %v824
        %834 = vmatmul.bf16.gmra.mxu0 %v820
        %v835 = vpop.f32.mrf.mxu0
        %v836 = vadd.f32 0.0, %v835
        %v837 = vpop.f32.mrf.mxu0
        %v838 = vadd.f32 0.0, %v837
        %839 = vdwg.mxu0
        %v840 = vld [vmem:[%s4] sm:$0xf]
        %v841 = vld [vmem:[%s4 + $0x4] sm:$0xf]
        %v842 = vld [vmem:[%s4 + $0x8] sm:$0xf]
        %v843 = vld [vmem:[%s4 + $0xc] sm:$0xf]
        %v844 = vpack.c.bf16 %v838, %v836
        %v845 = vld [vmem:[%s5] sm:$0x1]
        %v847 = vperm.slane %v845, 0
        %v853 = vunpack.c.l.b16 %v840
        %v854 = vunpack.c.l.b16 %v841
        %v855 = vunpack.c.l.b16 %v842
        %v856 = vunpack.c.l.b16 %v843
        %v857 = vpack.c.b16 %v854, %v853
        %v858 = vpack.c.b16 %v856, %v855
        %vm861 = vcmask 261120
        %v863 = vsel %vm861, %v844, 0
        %865 = vmatpush.bf16.msra.mxu0 0
        %866 = vmatpush.bf16.msra.mxu0 0
        %867 = vmatpush.bf16.msra.mxu0 0
        %868 = vmatpush.bf16.msra.mxu0 0
        %869 = vmatpush.bf16.msra.mxu0 0
        %870 = vmatpush.bf16.msra.mxu0 0
        %871 = vmatpush.bf16.msra.mxu0 %v858
        %872 = vmatpush.bf16.msra.mxu0 %v857
        %873 = vmatmul.bf16.gmra.mxu0 %v863
        %v874 = vpop.f32.mrf.mxu0
        %v875 = vadd.f32 %v847, %v874
        %v876 = vpop.f32.mrf.mxu0
        %v877 = vadd.f32 %v847, %v876
        %878 = vdwg.mxu0
        %v879 = vpack.c.bf16 %v875, %v875
        %v880 = vpack.c.bf16 %v877, %v877
        %v882 = vunpack.c.l.b16 %v879
        %v883 = vpack.c.b16 %v882, %v882
        %884 = vrot.lane.b32.xlu0 %v883, 96
        %v885 = vpop.permute.xlu0 %884
        %vm886 = vcmask 64512
        %v888 = vsel %vm886, %v879, 0
        %v891 = vsel %vm886, %v885, 0
        %893 = vmatpush.bf16.xpose.msra.mxu0 0
        %894 = vmatpush.bf16.xpose.msra.mxu0 0
        %895 = vmatpush.bf16.xpose.msra.mxu0 0
        %896 = vmatpush.bf16.xpose.msra.mxu0 0
        %897 = vmatpush.bf16.xpose.msra.mxu0 0
        %898 = vmatpush.bf16.xpose.msra.mxu0 0
        %899 = vmatpush.bf16.xpose.msra.mxu0 0
        %900 = vmatpush.bf16.xpose.msra.mxu0 %v891
        %901 = vmatmul.bf16.gmra.mxu0 %v888
        %v902 = vpop.f32.mrf.mxu0
        %v903 = vadd.f32 0.0, %v902
        %v904 = vpop.f32.mrf.mxu0
        %905 = vdwg.mxu0
        %v907 = vunpack.c.l.b16 %v880
        %v908 = vpack.c.b16 %v907, %v907
        %909 = vrot.lane.b32.xlu0 %v908, 96
        %v910 = vpop.permute.xlu0 %909
        %v912 = vsel %vm886, %v880, 0
        %v915 = vsel %vm886, %v910, 0
        %917 = vmatpush.bf16.xpose.msra.mxu0 0
        %918 = vmatpush.bf16.xpose.msra.mxu0 0
        %919 = vmatpush.bf16.xpose.msra.mxu0 0
        %920 = vmatpush.bf16.xpose.msra.mxu0 0
        %921 = vmatpush.bf16.xpose.msra.mxu0 0
        %922 = vmatpush.bf16.xpose.msra.mxu0 0
        %923 = vmatpush.bf16.xpose.msra.mxu0 0
        %924 = vmatpush.bf16.xpose.msra.mxu0 %v915
        %925 = vmatmul.bf16.gmra.mxu0 %v912
        %v926 = vpop.f32.mrf.mxu0
        %v927 = vadd.f32 0.0, %v926
        %v928 = vpop.f32.mrf.mxu0
        %929 = vdwg.mxu0
        %930 = vrot.lane.b32.xlu0 %v883, 120
        %v931 = vpop.permute.xlu0 %930
        %932 = vrot.lane.b32.xlu0 %v883, 88
        %v933 = vpop.permute.xlu0 %932
        %v935 = vsel %vm886, %v931, 0
        %v938 = vsel %vm886, %v933, 0
        %940 = vmatpush.bf16.xpose.msra.mxu0 0
        %941 = vmatpush.bf16.xpose.msra.mxu0 0
        %942 = vmatpush.bf16.xpose.msra.mxu0 0
        %943 = vmatpush.bf16.xpose.msra.mxu0 0
        %944 = vmatpush.bf16.xpose.msra.mxu0 0
        %945 = vmatpush.bf16.xpose.msra.mxu0 0
        %946 = vmatpush.bf16.xpose.msra.mxu0 0
        %947 = vmatpush.bf16.xpose.msra.mxu0 %v938
        %948 = vmatmul.bf16.gmra.mxu0 %v935
        %v949 = vpop.f32.mrf.mxu0
        %v950 = vadd.f32 0.0, %v949
        %v951 = vpop.f32.mrf.mxu0
        %952 = vdwg.mxu0
        %953 = vrot.lane.b32.xlu0 %v908, 120
        %v954 = vpop.permute.xlu0 %953
        %955 = vrot.lane.b32.xlu0 %v908, 88
        %v956 = vpop.permute.xlu0 %955
        %v958 = vsel %vm886, %v954, 0
        %v961 = vsel %vm886, %v956, 0
        %963 = vmatpush.bf16.xpose.msra.mxu0 0
        %964 = vmatpush.bf16.xpose.msra.mxu0 0
        %965 = vmatpush.bf16.xpose.msra.mxu0 0
        %966 = vmatpush.bf16.xpose.msra.mxu0 0
        %967 = vmatpush.bf16.xpose.msra.mxu0 0
        %968 = vmatpush.bf16.xpose.msra.mxu0 0
        %969 = vmatpush.bf16.xpose.msra.mxu0 0
        %970 = vmatpush.bf16.xpose.msra.mxu0 %v961
        %971 = vmatmul.bf16.gmra.mxu0 %v958
        %v972 = vpop.f32.mrf.mxu0
        %v973 = vadd.f32 0.0, %v972
        %v974 = vpop.f32.mrf.mxu0
        %975 = vdwg.mxu0
        %976 = vrot.lane.b32.xlu0 %v883, 112
        %v977 = vpop.permute.xlu0 %976
        %978 = vrot.lane.b32.xlu0 %v883, 80
        %v979 = vpop.permute.xlu0 %978
        %v981 = vsel %vm886, %v977, 0
        %v984 = vsel %vm886, %v979, 0
        %986 = vmatpush.bf16.xpose.msra.mxu0 0
        %987 = vmatpush.bf16.xpose.msra.mxu0 0
        %988 = vmatpush.bf16.xpose.msra.mxu0 0
        %989 = vmatpush.bf16.xpose.msra.mxu0 0
        %990 = vmatpush.bf16.xpose.msra.mxu0 0
        %991 = vmatpush.bf16.xpose.msra.mxu0 0
        %992 = vmatpush.bf16.xpose.msra.mxu0 0
        %993 = vmatpush.bf16.xpose.msra.mxu0 %v984
        %994 = vmatmul.bf16.gmra.mxu0 %v981
        %v995 = vpop.f32.mrf.mxu0
        %v996 = vadd.f32 0.0, %v995
        %v997 = vpop.f32.mrf.mxu0
        %998 = vdwg.mxu0
        %999 = vrot.lane.b32.xlu0 %v908, 112
        %v1000 = vpop.permute.xlu0 %999
        %1001 = vrot.lane.b32.xlu0 %v908, 80
        %v1002 = vpop.permute.xlu0 %1001
        %v1004 = vsel %vm886, %v1000, 0
        %v1007 = vsel %vm886, %v1002, 0
        %1009 = vmatpush.bf16.xpose.msra.mxu0 0
        %1010 = vmatpush.bf16.xpose.msra.mxu0 0
        %1011 = vmatpush.bf16.xpose.msra.mxu0 0
        %1012 = vmatpush.bf16.xpose.msra.mxu0 0
        %1013 = vmatpush.bf16.xpose.msra.mxu0 0
        %1014 = vmatpush.bf16.xpose.msra.mxu0 0
        %1015 = vmatpush.bf16.xpose.msra.mxu0 0
        %1016 = vmatpush.bf16.xpose.msra.mxu0 %v1007
        %1017 = vmatmul.bf16.gmra.mxu0 %v1004
        %v1018 = vpop.f32.mrf.mxu0
        %v1019 = vadd.f32 0.0, %v1018
        %v1020 = vpop.f32.mrf.mxu0
        %1021 = vdwg.mxu0
        %1022 = vrot.lane.b32.xlu0 %v883, 104
        %v1023 = vpop.permute.xlu0 %1022
        %1024 = vrot.lane.b32.xlu0 %v883, 72
        %v1025 = vpop.permute.xlu0 %1024
        %v1027 = vsel %vm886, %v1023, 0
        %v1030 = vsel %vm886, %v1025, 0
        %1032 = vmatpush.bf16.xpose.msra.mxu0 0
        %1033 = vmatpush.bf16.xpose.msra.mxu0 0
        %1034 = vmatpush.bf16.xpose.msra.mxu0 0
        %1035 = vmatpush.bf16.xpose.msra.mxu0 0
        %1036 = vmatpush.bf16.xpose.msra.mxu0 0
        %1037 = vmatpush.bf16.xpose.msra.mxu0 0
        %1038 = vmatpush.bf16.xpose.msra.mxu0 0
        %1039 = vmatpush.bf16.xpose.msra.mxu0 %v1030
        %1040 = vmatmul.bf16.gmra.mxu0 %v1027
        %v1041 = vpop.f32.mrf.mxu0
        %v1042 = vadd.f32 0.0, %v1041
        %v1043 = vpop.f32.mrf.mxu0
        %1044 = vdwg.mxu0
        %1045 = vrot.lane.b32.xlu0 %v908, 104
        %v1046 = vpop.permute.xlu0 %1045
        %1047 = vrot.lane.b32.xlu0 %v908, 72
        %v1048 = vpop.permute.xlu0 %1047
        %v1050 = vsel %vm886, %v1046, 0
        %v1053 = vsel %vm886, %v1048, 0
        %1055 = vmatpush.bf16.xpose.msra.mxu0 0
        %1056 = vmatpush.bf16.xpose.msra.mxu0 0
        %1057 = vmatpush.bf16.xpose.msra.mxu0 0
        %1058 = vmatpush.bf16.xpose.msra.mxu0 0
        %1059 = vmatpush.bf16.xpose.msra.mxu0 0
        %1060 = vmatpush.bf16.xpose.msra.mxu0 0
        %1061 = vmatpush.bf16.xpose.msra.mxu0 0
        %1062 = vmatpush.bf16.xpose.msra.mxu0 %v1053
        %1063 = vmatmul.bf16.gmra.mxu0 %v1050
        %v1064 = vpop.f32.mrf.mxu0
        %v1065 = vadd.f32 0.0, %v1064
        %v1066 = vpop.f32.mrf.mxu0
        %1067 = vdwg.mxu0
        %v1070 = vperm.slane %v808, 0
        %v1071 = vperm.slane %v809, 0
        %v1074 = vadd.f32 %v903, %v1070
        %v1075 = vadd.f32 %v927, %v1071
        %v1076 = vadd.f32 %v950, %v1070
        %v1077 = vadd.f32 %v973, %v1071
        %v1078 = vadd.f32 %v996, %v1070
        %v1079 = vadd.f32 %v1019, %v1071
        %v1080 = vadd.f32 %v1042, %v1070
        %v1081 = vadd.f32 %v1065, %v1071
        %v1082 = vsel %vm886, %v1074, -inf
        %1083 = vmax.xlane.f32.xlu0 %v1082
        %v1084 = vpop.xlane.xlu0 %1083
        %v1085 = vsel %vm886, %v1075, -inf
        %1086 = vmax.xlane.f32.xlu0 %v1085
        %v1087 = vpop.xlane.xlu0 %1086
        %v1088 = vsel %vm886, %v1076, -inf
        %1089 = vmax.xlane.f32.xlu0 %v1088
        %v1090 = vpop.xlane.xlu0 %1089
        %v1091 = vsel %vm886, %v1077, -inf
        %1092 = vmax.xlane.f32.xlu0 %v1091
        %v1093 = vpop.xlane.xlu0 %1092
        %v1094 = vsel %vm886, %v1078, -inf
        %1095 = vmax.xlane.f32.xlu0 %v1094
        %v1096 = vpop.xlane.xlu0 %1095
        %v1097 = vsel %vm886, %v1079, -inf
        %1098 = vmax.xlane.f32.xlu0 %v1097
        %v1099 = vpop.xlane.xlu0 %1098
        %v1100 = vsel %vm886, %v1080, -inf
        %1101 = vmax.xlane.f32.xlu0 %v1100
        %v1102 = vpop.xlane.xlu0 %1101
        %v1103 = vsel %vm886, %v1081, -inf
        %1104 = vmax.xlane.f32.xlu0 %v1103
        %v1105 = vpop.xlane.xlu0 %1104
        %v1106 = vsub.f32 %v1074, %v1084
        %v1107 = vsub.f32 %v1075, %v1087
        %v1108 = vsub.f32 %v1076, %v1090
        %v1109 = vsub.f32 %v1077, %v1093
        %v1110 = vsub.f32 %v1078, %v1096
        %v1111 = vsub.f32 %v1079, %v1099
        %v1112 = vsub.f32 %v1080, %v1102
        %v1113 = vsub.f32 %v1081, %v1105
        %v1114 = vmul.f32 %v1106, 1.442695
        %v1115 = vpow.pop %v1114
        %v1116 = vmul.f32 %v1107, 1.442695
        %v1117 = vpow.pop %v1116
        %v1118 = vmul.f32 %v1108, 1.442695
        %v1119 = vpow.pop %v1118
        %v1120 = vmul.f32 %v1109, 1.442695
        %v1121 = vpow.pop %v1120
        %v1122 = vmul.f32 %v1110, 1.442695
        %v1123 = vpow.pop %v1122
        %v1124 = vmul.f32 %v1111, 1.442695
        %v1125 = vpow.pop %v1124
        %v1126 = vmul.f32 %v1112, 1.442695
        %v1127 = vpow.pop %v1126
        %v1128 = vmul.f32 %v1113, 1.442695
        %v1129 = vpow.pop %v1128
        %v1130 = vsel %vm886, %v1115, 0.0
        %1131 = vadd.xlane.f32.xlu0 %v1130
        %v1132 = vpop.xlane.xlu0 %1131
        %v1133 = vsel %vm886, %v1117, 0.0
        %1134 = vadd.xlane.f32.xlu0 %v1133
        %v1135 = vpop.xlane.xlu0 %1134
        %v1136 = vsel %vm886, %v1119, 0.0
        %1137 = vadd.xlane.f32.xlu0 %v1136
        %v1138 = vpop.xlane.xlu0 %1137
        %v1139 = vsel %vm886, %v1121, 0.0
        %1140 = vadd.xlane.f32.xlu0 %v1139
        %v1141 = vpop.xlane.xlu0 %1140
        %v1142 = vsel %vm886, %v1123, 0.0
        %1143 = vadd.xlane.f32.xlu0 %v1142
        %v1144 = vpop.xlane.xlu0 %1143
        %v1145 = vsel %vm886, %v1125, 0.0
        %1146 = vadd.xlane.f32.xlu0 %v1145
        %v1147 = vpop.xlane.xlu0 %1146
        %v1148 = vsel %vm886, %v1127, 0.0
        %1149 = vadd.xlane.f32.xlu0 %v1148
        %v1150 = vpop.xlane.xlu0 %1149
        %v1151 = vsel %vm886, %v1129, 0.0
        %1152 = vadd.xlane.f32.xlu0 %v1151
        %v1153 = vpop.xlane.xlu0 %1152
        %v1154 = vmul.f32 %v1115, %v806
        %v1155 = vmul.f32 %v1117, %v807
        %v1156 = vmul.f32 %v1119, %v806
        %v1157 = vmul.f32 %v1121, %v807
        %v1158 = vmul.f32 %v1123, %v806
        %v1159 = vmul.f32 %v1125, %v807
        %v1160 = vmul.f32 %v1127, %v806
        %v1161 = vmul.f32 %v1129, %v807
        %v1162 = vsel %vm886, %v1154, 0.0
        %1163 = vadd.xlane.f32.xlu0 %v1162
        %v1164 = vpop.xlane.xlu0 %1163
        %v1165 = vsel %vm886, %v1155, 0.0
        %1166 = vadd.xlane.f32.xlu0 %v1165
        %v1167 = vpop.xlane.xlu0 %1166
        %v1168 = vsel %vm886, %v1156, 0.0
        %1169 = vadd.xlane.f32.xlu0 %v1168
        %v1170 = vpop.xlane.xlu0 %1169
        %v1171 = vsel %vm886, %v1157, 0.0
        %1172 = vadd.xlane.f32.xlu0 %v1171
        %v1173 = vpop.xlane.xlu0 %1172
        %v1174 = vsel %vm886, %v1158, 0.0
        %1175 = vadd.xlane.f32.xlu0 %v1174
        %v1176 = vpop.xlane.xlu0 %1175
        %v1177 = vsel %vm886, %v1159, 0.0
        %1178 = vadd.xlane.f32.xlu0 %v1177
        %v1179 = vpop.xlane.xlu0 %1178
        %v1180 = vsel %vm886, %v1160, 0.0
        %1181 = vadd.xlane.f32.xlu0 %v1180
        %v1182 = vpop.xlane.xlu0 %1181
        %v1183 = vsel %vm886, %v1161, 0.0
        %1184 = vadd.xlane.f32.xlu0 %v1183
        %v1185 = vpop.xlane.xlu0 %1184
        %v1186 = vmul.f32 %v1132, 1e-06
        %v1187 = vmul.f32 %v1135, 1e-06
        %v1188 = vmul.f32 %v1138, 1e-06
        %v1189 = vmul.f32 %v1141, 1e-06
        %v1190 = vmul.f32 %v1144, 1e-06
        %v1191 = vmul.f32 %v1147, 1e-06
        %v1192 = vmul.f32 %v1150, 1e-06
        %v1193 = vmul.f32 %v1153, 1e-06
        %v1194 = vadd.f32 %v1164, %v1186
        %v1195 = vadd.f32 %v1167, %v1187
        %v1196 = vadd.f32 %v1170, %v1188
        %v1197 = vadd.f32 %v1173, %v1189
        %v1198 = vadd.f32 %v1176, %v1190
        %v1199 = vadd.f32 %v1179, %v1191
        %v1200 = vadd.f32 %v1182, %v1192
        %v1201 = vadd.f32 %v1185, %v1193
        %v1202 = vrcp.pop %v1194
        %v1203 = vrcp.pop %v1195
        %v1204 = vrcp.pop %v1196
        %v1205 = vrcp.pop %v1197
        %v1206 = vrcp.pop %v1198
        %v1207 = vrcp.pop %v1199
        %v1208 = vrcp.pop %v1200
        %v1209 = vrcp.pop %v1201
        %v1210 = vmul.f32 %v1154, %v1202
        %v1211 = vmul.f32 %v1155, %v1203
        %v1212 = vmul.f32 %v1156, %v1204
        %v1213 = vmul.f32 %v1157, %v1205
        %v1214 = vmul.f32 %v1158, %v1206
        %v1215 = vmul.f32 %v1159, %v1207
        %v1216 = vmul.f32 %v1160, %v1208
        %v1217 = vmul.f32 %v1161, %v1209
        %v1218 = vpack.c.bf16 %v1210, %v1210
        %v1219 = vpack.c.bf16 %v1211, %v1211
        %v1220 = vpack.c.bf16 %v1212, %v1212
        %v1221 = vpack.c.bf16 %v1213, %v1213
        %v1222 = vpack.c.bf16 %v1214, %v1214
        %v1223 = vpack.c.bf16 %v1215, %v1215
        %v1224 = vpack.c.bf16 %v1216, %v1216
        %v1225 = vpack.c.bf16 %v1217, %v1217
        %1226 = vrot.lane.b32.xlu0 %v883, 64
        %v1227 = vpop.permute.xlu0 %1226
        %v1229 = vsel %vm886, %v1218, 0
        %vm1231 = vcmask 1043456
        %v1233 = vsel %vm1231, %v1227, 0
        %1235 = vmatpush.bf16.msra.mxu0 0
        %1236 = vmatpush.bf16.msra.mxu0 0
        %1237 = vmatpush.bf16.msra.mxu0 0
        %1238 = vmatpush.bf16.msra.mxu0 0
        %1239 = vmatpush.bf16.msra.mxu0 0
        %1240 = vmatpush.bf16.msra.mxu0 0
        %1241 = vmatpush.bf16.msra.mxu0 0
        %1242 = vmatpush.bf16.msra.mxu0 %v1233
        %1243 = vmatmul.bf16.gmra.mxu0 %v1229
        %v1244 = vpop.f32.mrf.mxu0
        %v1245 = vadd.f32 0.0, %v1244
        %v1246 = vpop.f32.mrf.mxu0
        %1247 = vdwg.mxu0
        %1248 = vrot.lane.b32.xlu0 %v908, 64
        %v1249 = vpop.permute.xlu0 %1248
        %v1251 = vsel %vm886, %v1219, 0
        %v1254 = vsel %vm1231, %v1249, 0
        %1256 = vmatpush.bf16.msra.mxu0 0
        %1257 = vmatpush.bf16.msra.mxu0 0
        %1258 = vmatpush.bf16.msra.mxu0 0
        %1259 = vmatpush.bf16.msra.mxu0 0
        %1260 = vmatpush.bf16.msra.mxu0 0
        %1261 = vmatpush.bf16.msra.mxu0 0
        %1262 = vmatpush.bf16.msra.mxu0 0
        %1263 = vmatpush.bf16.msra.mxu0 %v1254
        %1264 = vmatmul.bf16.gmra.mxu0 %v1251
        %v1265 = vpop.f32.mrf.mxu0
        %v1266 = vadd.f32 0.0, %v1265
        %v1267 = vpop.f32.mrf.mxu0
        %1268 = vdwg.mxu0
        %1269 = vrot.lane.b32.xlu0 %v883, 56
        %v1270 = vpop.permute.xlu0 %1269
        %v1272 = vsel %vm886, %v1220, 0
        %v1275 = vsel %vm1231, %v1270, 0
        %1277 = vmatpush.bf16.msra.mxu0 0
        %1278 = vmatpush.bf16.msra.mxu0 0
        %1279 = vmatpush.bf16.msra.mxu0 0
        %1280 = vmatpush.bf16.msra.mxu0 0
        %1281 = vmatpush.bf16.msra.mxu0 0
        %1282 = vmatpush.bf16.msra.mxu0 0
        %1283 = vmatpush.bf16.msra.mxu0 0
        %1284 = vmatpush.bf16.msra.mxu0 %v1275
        %1285 = vmatmul.bf16.gmra.mxu0 %v1272
        %v1286 = vpop.f32.mrf.mxu0
        %v1287 = vadd.f32 0.0, %v1286
        %v1288 = vpop.f32.mrf.mxu0
        %1289 = vdwg.mxu0
        %1290 = vrot.lane.b32.xlu0 %v908, 56
        %v1291 = vpop.permute.xlu0 %1290
        %v1293 = vsel %vm886, %v1221, 0
        %v1296 = vsel %vm1231, %v1291, 0
        %1298 = vmatpush.bf16.msra.mxu0 0
        %1299 = vmatpush.bf16.msra.mxu0 0
        %1300 = vmatpush.bf16.msra.mxu0 0
        %1301 = vmatpush.bf16.msra.mxu0 0
        %1302 = vmatpush.bf16.msra.mxu0 0
        %1303 = vmatpush.bf16.msra.mxu0 0
        %1304 = vmatpush.bf16.msra.mxu0 0
        %1305 = vmatpush.bf16.msra.mxu0 %v1296
        %1306 = vmatmul.bf16.gmra.mxu0 %v1293
        %v1307 = vpop.f32.mrf.mxu0
        %v1308 = vadd.f32 0.0, %v1307
        %v1309 = vpop.f32.mrf.mxu0
        %1310 = vdwg.mxu0
        %1311 = vrot.lane.b32.xlu0 %v883, 48
        %v1312 = vpop.permute.xlu0 %1311
        %v1314 = vsel %vm886, %v1222, 0
        %v1317 = vsel %vm1231, %v1312, 0
        %1319 = vmatpush.bf16.msra.mxu0 0
        %1320 = vmatpush.bf16.msra.mxu0 0
        %1321 = vmatpush.bf16.msra.mxu0 0
        %1322 = vmatpush.bf16.msra.mxu0 0
        %1323 = vmatpush.bf16.msra.mxu0 0
        %1324 = vmatpush.bf16.msra.mxu0 0
        %1325 = vmatpush.bf16.msra.mxu0 0
        %1326 = vmatpush.bf16.msra.mxu0 %v1317
        %1327 = vmatmul.bf16.gmra.mxu0 %v1314
        %v1328 = vpop.f32.mrf.mxu0
        %v1329 = vadd.f32 0.0, %v1328
        %v1330 = vpop.f32.mrf.mxu0
        %1331 = vdwg.mxu0
        %1332 = vrot.lane.b32.xlu0 %v908, 48
        %v1333 = vpop.permute.xlu0 %1332
        %v1335 = vsel %vm886, %v1223, 0
        %v1338 = vsel %vm1231, %v1333, 0
        %1340 = vmatpush.bf16.msra.mxu0 0
        %1341 = vmatpush.bf16.msra.mxu0 0
        %1342 = vmatpush.bf16.msra.mxu0 0
        %1343 = vmatpush.bf16.msra.mxu0 0
        %1344 = vmatpush.bf16.msra.mxu0 0
        %1345 = vmatpush.bf16.msra.mxu0 0
        %1346 = vmatpush.bf16.msra.mxu0 0
        %1347 = vmatpush.bf16.msra.mxu0 %v1338
        %1348 = vmatmul.bf16.gmra.mxu0 %v1335
        %v1349 = vpop.f32.mrf.mxu0
        %v1350 = vadd.f32 0.0, %v1349
        %v1351 = vpop.f32.mrf.mxu0
        %1352 = vdwg.mxu0
        %1353 = vrot.lane.b32.xlu0 %v883, 40
        %v1354 = vpop.permute.xlu0 %1353
        %v1356 = vsel %vm886, %v1224, 0
        %v1359 = vsel %vm1231, %v1354, 0
        %1361 = vmatpush.bf16.msra.mxu0 0
        %1362 = vmatpush.bf16.msra.mxu0 0
        %1363 = vmatpush.bf16.msra.mxu0 0
        %1364 = vmatpush.bf16.msra.mxu0 0
        %1365 = vmatpush.bf16.msra.mxu0 0
        %1366 = vmatpush.bf16.msra.mxu0 0
        %1367 = vmatpush.bf16.msra.mxu0 0
        %1368 = vmatpush.bf16.msra.mxu0 %v1359
        %1369 = vmatmul.bf16.gmra.mxu0 %v1356
        %v1370 = vpop.f32.mrf.mxu0
        %v1371 = vadd.f32 0.0, %v1370
        %v1372 = vpop.f32.mrf.mxu0
        %1373 = vdwg.mxu0
        %1374 = vrot.lane.b32.xlu0 %v908, 40
        %v1375 = vpop.permute.xlu0 %1374
        %v1377 = vsel %vm886, %v1225, 0
        %v1380 = vsel %vm1231, %v1375, 0
        %1382 = vmatpush.bf16.msra.mxu0 0
        %1383 = vmatpush.bf16.msra.mxu0 0
        %1384 = vmatpush.bf16.msra.mxu0 0
        %1385 = vmatpush.bf16.msra.mxu0 0
        %1386 = vmatpush.bf16.msra.mxu0 0
        %1387 = vmatpush.bf16.msra.mxu0 0
        %1388 = vmatpush.bf16.msra.mxu0 0
        %1389 = vmatpush.bf16.msra.mxu0 %v1380
        %1390 = vmatmul.bf16.gmra.mxu0 %v1377
        %v1391 = vpop.f32.mrf.mxu0
        %v1392 = vadd.f32 0.0, %v1391
        %v1393 = vpop.f32.mrf.mxu0
        %1394 = vdwg.mxu0
        %1397 = vrot.lane.b32.xlu0 %v1287, 8
        %v1398 = vpop.permute.xlu0 %1397
        %1399 = vrot.lane.b32.xlu0 %v1308, 8
        %v1400 = vpop.permute.xlu0 %1399
        %1405 = vrot.lane.b32.xlu0 %v1329, 16
        %v1406 = vpop.permute.xlu0 %1405
        %1407 = vrot.lane.b32.xlu0 %v1350, 16
        %v1408 = vpop.permute.xlu0 %1407
        %1413 = vrot.lane.b32.xlu0 %v1371, 24
        %v1414 = vpop.permute.xlu0 %1413
        %1415 = vrot.lane.b32.xlu0 %v1392, 24
        %v1416 = vpop.permute.xlu0 %1415
        %v1419 = vsel %vm886, %v1245, %v1398
        %v1420 = vsel %vm886, %v1266, %v1400
        %vm1421 = vcmask 130048
        %v1422 = vsel %vm1421, %v1419, %v1406
        %v1423 = vsel %vm1421, %v1420, %v1408
        %vm1424 = vcmask 195584
        %v1425 = vsel %vm1424, %v1422, %v1414
        %v1426 = vsel %vm1424, %v1423, %v1416
        %v1427 = vld [vmem:[%s6] sm:$0xf]
        %v1428 = vld [vmem:[%s6 + $0x4] sm:$0xf]
        %v1429 = vld [vmem:[%s6 + $0x8] sm:$0xf]
        %v1430 = vld [vmem:[%s6 + $0xc] sm:$0xf]
        %v1431 = vpack.c.bf16 %v1426, %v1425
        %v1432 = vld [vmem:[%s7] sm:$0x1]
        %v1434 = vperm.slane %v1432, 0
        %v1440 = vunpack.c.l.b16 %v1427
        %v1441 = vunpack.c.l.b16 %v1428
        %v1442 = vunpack.c.l.b16 %v1429
        %v1443 = vunpack.c.l.b16 %v1430
        %v1444 = vpack.c.b16 %v1441, %v1440
        %v1445 = vpack.c.b16 %v1443, %v1442
        %v1449 = vsel %vm861, %v1431, 0
        %1451 = vmatpush.bf16.msra.mxu0 0
        %1452 = vmatpush.bf16.msra.mxu0 0
        %1453 = vmatpush.bf16.msra.mxu0 0
        %1454 = vmatpush.bf16.msra.mxu0 0
        %1455 = vmatpush.bf16.msra.mxu0 0
        %1456 = vmatpush.bf16.msra.mxu0 0
        %1457 = vmatpush.bf16.msra.mxu0 %v1445
        %1458 = vmatpush.bf16.msra.mxu0 %v1444
        %1459 = vmatmul.bf16.gmra.mxu0 %v1449
        %v1460 = vpop.f32.mrf.mxu0
        %v1461 = vadd.f32 %v1434, %v1460
        %v1462 = vpop.f32.mrf.mxu0
        %v1463 = vadd.f32 %v1434, %v1462
        %1464 = vdwg.mxu0
        %v1465 = vadd.f32 %v836, %v1461
        %v1466 = vadd.f32 %v838, %v1463
        %v1467 = vld [vmem:[#allocation6] sm:$0x1]
        %v1468 = vld [vmem:[#allocation7] sm:$0x1]
        %v1469 = vsel %vm861, %v1465, 0.0
        %1470 = vadd.xlane.f32.xlu0 %v1469
        %v1471 = vpop.xlane.xlu0 %1470
        %v1472 = vsel %vm861, %v1466, 0.0
        %1473 = vadd.xlane.f32.xlu0 %v1472
        %v1474 = vpop.xlane.xlu0 %1473
        %v1475 = vrcp.pop 32.0
        %v1476 = vmul.f32 32.0, %v1475
        %v1477 = vsub.f32 1.0, %v1476
        %v1478 = vmul.f32 %v1475, %v1477
        %v1479 = vadd.f32 %v1475, %v1478
        %vm1480 = vweird.f32 %v1475
        %v1481 = vsel %vm1480, %v1475, %v1479
        %v1482 = vmul.f32 %v1471, %v1481
        %v1483 = vmul.f32 %v1474, %v1481
        %v1484 = vsub.f32 %v1465, %v1482
        %v1485 = vsub.f32 %v1466, %v1483
        %v1486 = vmul.f32 %v1484, %v1484
        %v1487 = vmul.f32 %v1485, %v1485
        %v1488 = vsel %vm861, %v1486, 0.0
        %1489 = vadd.xlane.f32.xlu0 %v1488
        %v1490 = vpop.xlane.xlu0 %1489
        %v1491 = vsel %vm861, %v1487, 0.0
        %1492 = vadd.xlane.f32.xlu0 %v1491
        %v1493 = vpop.xlane.xlu0 %1492
        %v1494 = vmul.f32 %v1490, %v1481
        %v1495 = vmul.f32 %v1493, %v1481
        %v1496 = vadd.f32 %v1494, 1e-05
        %v1497 = vadd.f32 %v1495, 1e-05
        %v1498 = vrsqrt.pop %v1496
        %v1499 = vmul.f32 %v1498, %v1496
        %v1500 = vmul.f32 %v1499, %v1498
        %v1501 = vmul.f32 0.5, %v1500
        %v1502 = vsub.f32 1.5, %v1501
        %v1503 = vmul.f32 %v1498, %v1502
        %vm1504 = vweird.f32 %v1496
        %vm1505 = vweird.f32 %v1498
        %vm1506 = vmor %vm1504, %vm1505
        %v1507 = vsel %vm1506, %v1498, %v1503
        %v1508 = vrsqrt.pop %v1497
        %v1509 = vmul.f32 %v1508, %v1497
        %v1510 = vmul.f32 %v1509, %v1508
        %v1511 = vmul.f32 0.5, %v1510
        %v1512 = vsub.f32 1.5, %v1511
        %v1513 = vmul.f32 %v1508, %v1512
        %vm1514 = vweird.f32 %v1497
        %vm1515 = vweird.f32 %v1508
        %vm1516 = vmor %vm1514, %vm1515
        %v1517 = vsel %vm1516, %v1508, %v1513
        %v1518 = vmul.f32 %v1484, %v1507
        %v1519 = vmul.f32 %v1485, %v1517
        %v1521 = vperm.slane %v1467, 0
        %v1523 = vmul.f32 %v1518, %v1521
        %v1524 = vmul.f32 %v1519, %v1521
        %v1526 = vperm.slane %v1468, 0
        %v1528 = vadd.f32 %v1523, %v1526
        %v1529 = vadd.f32 %v1524, %v1526
        %v1530 = vld [vmem:[%s8] sm:$0xf]
        %v1531 = vld [vmem:[%s8 + $0x4] sm:$0xf]
        %v1532 = vld [vmem:[%s8 + $0x8] sm:$0xf]
        %v1533 = vld [vmem:[%s8 + $0xc] sm:$0xf]
        %v1534 = vpack.c.bf16 %v1529, %v1528
        %v1535 = vld [vmem:[#allocation2] sm:$0x1]
        %v1537 = vperm.slane %v1535, 0
        %v1543 = vunpack.c.l.b16 %v1530
        %v1544 = vunpack.c.l.b16 %v1531
        %v1545 = vunpack.c.l.b16 %v1532
        %v1546 = vunpack.c.l.b16 %v1533
        %v1547 = vpack.c.b16 %v1544, %v1543
        %v1548 = vpack.c.b16 %v1546, %v1545
        %v1552 = vsel %vm861, %v1534, 0
        %1554 = vmatpush.bf16.msra.mxu0 0
        %1555 = vmatpush.bf16.msra.mxu0 0
        %1556 = vmatpush.bf16.msra.mxu0 0
        %1557 = vmatpush.bf16.msra.mxu0 0
        %1558 = vmatpush.bf16.msra.mxu0 0
        %1559 = vmatpush.bf16.msra.mxu0 0
        %1560 = vmatpush.bf16.msra.mxu0 %v1548
        %1561 = vmatpush.bf16.msra.mxu0 %v1547
        %1562 = vmatmul.bf16.gmra.mxu0 %v1552
        %v1563 = vpop.f32.mrf.mxu0
        %v1564 = vadd.f32 %v1537, %v1563
        %v1565 = vpop.f32.mrf.mxu0
        %v1566 = vadd.f32 %v1537, %v1565
        %1567 = vdwg.mxu0
        %v1568 = vmax.f32 %v1564, 0.0
        %v1569 = vmax.f32 %v1566, 0.0
        %v1570 = vld [vmem:[%s10] sm:$0xf]
        %v1571 = vld [vmem:[%s10 + $0x4] sm:$0xf]
        %v1572 = vld [vmem:[%s10 + $0x8] sm:$0xf]
        %v1573 = vld [vmem:[%s10 + $0xc] sm:$0xf]
        %v1574 = vld [vmem:[%s10 + $0x10] sm:$0xf]
        %v1575 = vld [vmem:[%s10 + $0x14] sm:$0xf]
        %v1576 = vld [vmem:[%s10 + $0x18] sm:$0xf]
        %v1577 = vld [vmem:[%s10 + $0x1c] sm:$0xf]
        %v1578 = vpack.c.bf16 %v1569, %v1568
        %v1579 = vld [vmem:[#allocation4] sm:$0x1]
        %v1581 = vperm.slane %v1579, 0
        %v1591 = vunpack.c.l.b16 %v1570
        %v1592 = vunpack.c.l.b16 %v1571
        %v1593 = vunpack.c.l.b16 %v1572
        %v1594 = vunpack.c.l.b16 %v1573
        %v1595 = vunpack.c.l.b16 %v1574
        %v1596 = vunpack.c.l.b16 %v1575
        %v1597 = vunpack.c.l.b16 %v1576
        %v1598 = vunpack.c.l.b16 %v1577
        %v1599 = vpack.c.b16 %v1592, %v1591
        %v1600 = vpack.c.b16 %v1594, %v1593
        %v1601 = vpack.c.b16 %v1596, %v1595
        %v1602 = vpack.c.b16 %v1598, %v1597
        %vm1607 = vcmask 523264
        %v1609 = vsel %vm1607, %v1578, 0
        %1611 = vmatpush.bf16.msra.mxu0 0
        %1612 = vmatpush.bf16.msra.mxu0 0
        %1613 = vmatpush.bf16.msra.mxu0 0
        %1614 = vmatpush.bf16.msra.mxu0 0
        %1615 = vmatpush.bf16.msra.mxu0 %v1602
        %1616 = vmatpush.bf16.msra.mxu0 %v1601
        %1617 = vmatpush.bf16.msra.mxu0 %v1600
        %1618 = vmatpush.bf16.msra.mxu0 %v1599
        %1619 = vmatmul.bf16.gmra.mxu0 %v1609
        %v1620 = vpop.f32.mrf.mxu0
        %v1621 = vadd.f32 %v1581, %v1620
        %v1622 = vpop.f32.mrf.mxu0
        %v1623 = vadd.f32 %v1581, %v1622
        %1624 = vdwg.mxu0
        %v1625 = vadd.f32 %v1528, %v1621
        %v1626 = vadd.f32 %v1529, %v1623
        %v1627 = vld [vmem:[#allocation9] sm:$0x1]
        %v1628 = vld [vmem:[#allocation10] sm:$0x1]
        %v1629 = vsel %vm861, %v1625, 0.0
        %1630 = vadd.xlane.f32.xlu0 %v1629
        %v1631 = vpop.xlane.xlu0 %1630
        %v1632 = vsel %vm861, %v1626, 0.0
        %1633 = vadd.xlane.f32.xlu0 %v1632
        %v1634 = vpop.xlane.xlu0 %1633
        %v1635 = vmul.f32 %v1631, %v1481
        %v1636 = vmul.f32 %v1634, %v1481
        %v1637 = vsub.f32 %v1625, %v1635
        %v1638 = vsub.f32 %v1626, %v1636
        %v1639 = vmul.f32 %v1637, %v1637
        %v1640 = vmul.f32 %v1638, %v1638
        %v1641 = vsel %vm861, %v1639, 0.0
        %1642 = vadd.xlane.f32.xlu0 %v1641
        %v1643 = vpop.xlane.xlu0 %1642
        %v1644 = vsel %vm861, %v1640, 0.0
        %1645 = vadd.xlane.f32.xlu0 %v1644
        %v1646 = vpop.xlane.xlu0 %1645
        %v1647 = vmul.f32 %v1643, %v1481
        %v1648 = vmul.f32 %v1646, %v1481
        %v1649 = vadd.f32 %v1647, 1e-05
        %v1650 = vadd.f32 %v1648, 1e-05
        %v1651 = vrsqrt.pop %v1649
        %v1652 = vmul.f32 %v1651, %v1649
        %v1653 = vmul.f32 %v1652, %v1651
        %v1654 = vmul.f32 0.5, %v1653
        %v1655 = vsub.f32 1.5, %v1654
        %v1656 = vmul.f32 %v1651, %v1655
        %vm1657 = vweird.f32 %v1649
        %vm1658 = vweird.f32 %v1651
        %vm1659 = vmor %vm1657, %vm1658
        %v1660 = vsel %vm1659, %v1651, %v1656
        %v1661 = vrsqrt.pop %v1650
        %v1662 = vmul.f32 %v1661, %v1650
        %v1663 = vmul.f32 %v1662, %v1661
        %v1664 = vmul.f32 0.5, %v1663
        %v1665 = vsub.f32 1.5, %v1664
        %v1666 = vmul.f32 %v1661, %v1665
        %vm1667 = vweird.f32 %v1650
        %vm1668 = vweird.f32 %v1661
        %vm1669 = vmor %vm1667, %vm1668
        %v1670 = vsel %vm1669, %v1661, %v1666
        %v1671 = vmul.f32 %v1637, %v1660
        %v1672 = vmul.f32 %v1638, %v1670
        %v1674 = vperm.slane %v1627, 0
        %v1676 = vmul.f32 %v1671, %v1674
        %v1677 = vmul.f32 %v1672, %v1674
        %v1679 = vperm.slane %v1628, 0
        %v1681 = vadd.f32 %v1676, %v1679
        %v1682 = vadd.f32 %v1677, %v1679
        %s1683 = scalar_lea.vmem %s4, 16
        %v1684 = vld [vmem:[%s1683] sm:$0xf]
        %v1685 = vld [vmem:[%s1683 + $0x4] sm:$0xf]
        %v1686 = vld [vmem:[%s1683 + $0x8] sm:$0xf]
        %v1687 = vld [vmem:[%s1683 + $0xc] sm:$0xf]
        %v1688 = vpack.c.bf16 %v1682, %v1681
        %s1689 = scalar_lea.vmem %s5, 1
        %v1690 = vld [vmem:[%s1689] sm:$0x1]
        %v1692 = vperm.slane %v1690, 0
        %v1698 = vunpack.c.l.b16 %v1684
        %v1699 = vunpack.c.l.b16 %v1685
        %v1700 = vunpack.c.l.b16 %v1686
        %v1701 = vunpack.c.l.b16 %v1687
        %v1702 = vpack.c.b16 %v1699, %v1698
        %v1703 = vpack.c.b16 %v1701, %v1700
        %v1707 = vsel %vm861, %v1688, 0
        %1709 = vmatpush.bf16.msra.mxu0 0
        %1710 = vmatpush.bf16.msra.mxu0 0
        %1711 = vmatpush.bf16.msra.mxu0 0
        %1712 = vmatpush.bf16.msra.mxu0 0
        %1713 = vmatpush.bf16.msra.mxu0 0
        %1714 = vmatpush.bf16.msra.mxu0 0
        %1715 = vmatpush.bf16.msra.mxu0 %v1703
        %1716 = vmatpush.bf16.msra.mxu0 %v1702
        %1717 = vmatmul.bf16.gmra.mxu0 %v1707
        %v1718 = vpop.f32.mrf.mxu0
        %v1719 = vadd.f32 %v1692, %v1718
        %v1720 = vpop.f32.mrf.mxu0
        %v1721 = vadd.f32 %v1692, %v1720
        %1722 = vdwg.mxu0
        %v1723 = vpack.c.bf16 %v1719, %v1719
        %v1724 = vpack.c.bf16 %v1721, %v1721
        %v1726 = vunpack.c.l.b16 %v1723
        %v1727 = vpack.c.b16 %v1726, %v1726
        %1728 = vrot.lane.b32.xlu0 %v1727, 96
        %v1729 = vpop.permute.xlu0 %1728
        %v1731 = vsel %vm886, %v1723, 0
        %v1734 = vsel %vm886, %v1729, 0
        %1736 = vmatpush.bf16.xpose.msra.mxu0 0
        %1737 = vmatpush.bf16.xpose.msra.mxu0 0
        %1738 = vmatpush.bf16.xpose.msra.mxu0 0
        %1739 = vmatpush.bf16.xpose.msra.mxu0 0
        %1740 = vmatpush.bf16.xpose.msra.mxu0 0
        %1741 = vmatpush.bf16.xpose.msra.mxu0 0
        %1742 = vmatpush.bf16.xpose.msra.mxu0 0
        %1743 = vmatpush.bf16.xpose.msra.mxu0 %v1734
        %1744 = vmatmul.bf16.gmra.mxu0 %v1731
        %v1745 = vpop.f32.mrf.mxu0
        %v1746 = vadd.f32 0.0, %v1745
        %v1747 = vpop.f32.mrf.mxu0
        %1748 = vdwg.mxu0
        %v1750 = vunpack.c.l.b16 %v1724
        %v1751 = vpack.c.b16 %v1750, %v1750
        %1752 = vrot.lane.b32.xlu0 %v1751, 96
        %v1753 = vpop.permute.xlu0 %1752
        %v1755 = vsel %vm886, %v1724, 0
        %v1758 = vsel %vm886, %v1753, 0
        %1760 = vmatpush.bf16.xpose.msra.mxu0 0
        %1761 = vmatpush.bf16.xpose.msra.mxu0 0
        %1762 = vmatpush.bf16.xpose.msra.mxu0 0
        %1763 = vmatpush.bf16.xpose.msra.mxu0 0
        %1764 = vmatpush.bf16.xpose.msra.mxu0 0
        %1765 = vmatpush.bf16.xpose.msra.mxu0 0
        %1766 = vmatpush.bf16.xpose.msra.mxu0 0
        %1767 = vmatpush.bf16.xpose.msra.mxu0 %v1758
        %1768 = vmatmul.bf16.gmra.mxu0 %v1755
        %v1769 = vpop.f32.mrf.mxu0
        %v1770 = vadd.f32 0.0, %v1769
        %v1771 = vpop.f32.mrf.mxu0
        %1772 = vdwg.mxu0
        %1773 = vrot.lane.b32.xlu0 %v1727, 120
        %v1774 = vpop.permute.xlu0 %1773
        %1775 = vrot.lane.b32.xlu0 %v1727, 88
        %v1776 = vpop.permute.xlu0 %1775
        %v1778 = vsel %vm886, %v1774, 0
        %v1781 = vsel %vm886, %v1776, 0
        %1783 = vmatpush.bf16.xpose.msra.mxu0 0
        %1784 = vmatpush.bf16.xpose.msra.mxu0 0
        %1785 = vmatpush.bf16.xpose.msra.mxu0 0
        %1786 = vmatpush.bf16.xpose.msra.mxu0 0
        %1787 = vmatpush.bf16.xpose.msra.mxu0 0
        %1788 = vmatpush.bf16.xpose.msra.mxu0 0
        %1789 = vmatpush.bf16.xpose.msra.mxu0 0
        %1790 = vmatpush.bf16.xpose.msra.mxu0 %v1781
        %1791 = vmatmul.bf16.gmra.mxu0 %v1778
        %v1792 = vpop.f32.mrf.mxu0
        %v1793 = vadd.f32 0.0, %v1792
        %v1794 = vpop.f32.mrf.mxu0
        %1795 = vdwg.mxu0
        %1796 = vrot.lane.b32.xlu0 %v1751, 120
        %v1797 = vpop.permute.xlu0 %1796
        %1798 = vrot.lane.b32.xlu0 %v1751, 88
        %v1799 = vpop.permute.xlu0 %1798
        %v1801 = vsel %vm886, %v1797, 0
        %v1804 = vsel %vm886, %v1799, 0
        %1806 = vmatpush.bf16.xpose.msra.mxu0 0
        %1807 = vmatpush.bf16.xpose.msra.mxu0 0
        %1808 = vmatpush.bf16.xpose.msra.mxu0 0
        %1809 = vmatpush.bf16.xpose.msra.mxu0 0
        %1810 = vmatpush.bf16.xpose.msra.mxu0 0
        %1811 = vmatpush.bf16.xpose.msra.mxu0 0
        %1812 = vmatpush.bf16.xpose.msra.mxu0 0
        %1813 = vmatpush.bf16.xpose.msra.mxu0 %v1804
        %1814 = vmatmul.bf16.gmra.mxu0 %v1801
        %v1815 = vpop.f32.mrf.mxu0
        %v1816 = vadd.f32 0.0, %v1815
        %v1817 = vpop.f32.mrf.mxu0
        %1818 = vdwg.mxu0
        %1819 = vrot.lane.b32.xlu0 %v1727, 112
        %v1820 = vpop.permute.xlu0 %1819
        %1821 = vrot.lane.b32.xlu0 %v1727, 80
        %v1822 = vpop.permute.xlu0 %1821
        %v1824 = vsel %vm886, %v1820, 0
        %v1827 = vsel %vm886, %v1822, 0
        %1829 = vmatpush.bf16.xpose.msra.mxu0 0
        %1830 = vmatpush.bf16.xpose.msra.mxu0 0
        %1831 = vmatpush.bf16.xpose.msra.mxu0 0
        %1832 = vmatpush.bf16.xpose.msra.mxu0 0
        %1833 = vmatpush.bf16.xpose.msra.mxu0 0
        %1834 = vmatpush.bf16.xpose.msra.mxu0 0
        %1835 = vmatpush.bf16.xpose.msra.mxu0 0
        %1836 = vmatpush.bf16.xpose.msra.mxu0 %v1827
        %1837 = vmatmul.bf16.gmra.mxu0 %v1824
        %v1838 = vpop.f32.mrf.mxu0
        %v1839 = vadd.f32 0.0, %v1838
        %v1840 = vpop.f32.mrf.mxu0
        %1841 = vdwg.mxu0
        %1842 = vrot.lane.b32.xlu0 %v1751, 112
        %v1843 = vpop.permute.xlu0 %1842
        %1844 = vrot.lane.b32.xlu0 %v1751, 80
        %v1845 = vpop.permute.xlu0 %1844
        %v1847 = vsel %vm886, %v1843, 0
        %v1850 = vsel %vm886, %v1845, 0
        %1852 = vmatpush.bf16.xpose.msra.mxu0 0
        %1853 = vmatpush.bf16.xpose.msra.mxu0 0
        %1854 = vmatpush.bf16.xpose.msra.mxu0 0
        %1855 = vmatpush.bf16.xpose.msra.mxu0 0
        %1856 = vmatpush.bf16.xpose.msra.mxu0 0
        %1857 = vmatpush.bf16.xpose.msra.mxu0 0
        %1858 = vmatpush.bf16.xpose.msra.mxu0 0
        %1859 = vmatpush.bf16.xpose.msra.mxu0 %v1850
        %1860 = vmatmul.bf16.gmra.mxu0 %v1847
        %v1861 = vpop.f32.mrf.mxu0
        %v1862 = vadd.f32 0.0, %v1861
        %v1863 = vpop.f32.mrf.mxu0
        %1864 = vdwg.mxu0
        %1865 = vrot.lane.b32.xlu0 %v1727, 104
        %v1866 = vpop.permute.xlu0 %1865
        %1867 = vrot.lane.b32.xlu0 %v1727, 72
        %v1868 = vpop.permute.xlu0 %1867
        %v1870 = vsel %vm886, %v1866, 0
        %v1873 = vsel %vm886, %v1868, 0
        %1875 = vmatpush.bf16.xpose.msra.mxu0 0
        %1876 = vmatpush.bf16.xpose.msra.mxu0 0
        %1877 = vmatpush.bf16.xpose.msra.mxu0 0
        %1878 = vmatpush.bf16.xpose.msra.mxu0 0
        %1879 = vmatpush.bf16.xpose.msra.mxu0 0
        %1880 = vmatpush.bf16.xpose.msra.mxu0 0
        %1881 = vmatpush.bf16.xpose.msra.mxu0 0
        %1882 = vmatpush.bf16.xpose.msra.mxu0 %v1873
        %1883 = vmatmul.bf16.gmra.mxu0 %v1870
        %v1884 = vpop.f32.mrf.mxu0
        %v1885 = vadd.f32 0.0, %v1884
        %v1886 = vpop.f32.mrf.mxu0
        %1887 = vdwg.mxu0
        %1888 = vrot.lane.b32.xlu0 %v1751, 104
        %v1889 = vpop.permute.xlu0 %1888
        %1890 = vrot.lane.b32.xlu0 %v1751, 72
        %v1891 = vpop.permute.xlu0 %1890
        %v1893 = vsel %vm886, %v1889, 0
        %v1896 = vsel %vm886, %v1891, 0
        %1898 = vmatpush.bf16.xpose.msra.mxu0 0
        %1899 = vmatpush.bf16.xpose.msra.mxu0 0
        %1900 = vmatpush.bf16.xpose.msra.mxu0 0
        %1901 = vmatpush.bf16.xpose.msra.mxu0 0
        %1902 = vmatpush.bf16.xpose.msra.mxu0 0
        %1903 = vmatpush.bf16.xpose.msra.mxu0 0
        %1904 = vmatpush.bf16.xpose.msra.mxu0 0
        %1905 = vmatpush.bf16.xpose.msra.mxu0 %v1896
        %1906 = vmatmul.bf16.gmra.mxu0 %v1893
        %v1907 = vpop.f32.mrf.mxu0
        %v1908 = vadd.f32 0.0, %v1907
        %v1909 = vpop.f32.mrf.mxu0
        %1910 = vdwg.mxu0
        %v1911 = vadd.f32 %v1746, %v1070
        %v1912 = vadd.f32 %v1770, %v1071
        %v1913 = vadd.f32 %v1793, %v1070
        %v1914 = vadd.f32 %v1816, %v1071
        %v1915 = vadd.f32 %v1839, %v1070
        %v1916 = vadd.f32 %v1862, %v1071
        %v1917 = vadd.f32 %v1885, %v1070
        %v1918 = vadd.f32 %v1908, %v1071
        %v1919 = vsel %vm886, %v1911, -inf
        %1920 = vmax.xlane.f32.xlu0 %v1919
        %v1921 = vpop.xlane.xlu0 %1920
        %v1922 = vsel %vm886, %v1912, -inf
        %1923 = vmax.xlane.f32.xlu0 %v1922
        %v1924 = vpop.xlane.xlu0 %1923
        %v1925 = vsel %vm886, %v1913, -inf
        %1926 = vmax.xlane.f32.xlu0 %v1925
        %v1927 = vpop.xlane.xlu0 %1926
        %v1928 = vsel %vm886, %v1914, -inf
        %1929 = vmax.xlane.f32.xlu0 %v1928
        %v1930 = vpop.xlane.xlu0 %1929
        %v1931 = vsel %vm886, %v1915, -inf
        %1932 = vmax.xlane.f32.xlu0 %v1931
        %v1933 = vpop.xlane.xlu0 %1932
        %v1934 = vsel %vm886, %v1916, -inf
        %1935 = vmax.xlane.f32.xlu0 %v1934
        %v1936 = vpop.xlane.xlu0 %1935
        %v1937 = vsel %vm886, %v1917, -inf
        %1938 = vmax.xlane.f32.xlu0 %v1937
        %v1939 = vpop.xlane.xlu0 %1938
        %v1940 = vsel %vm886, %v1918, -inf
        %1941 = vmax.xlane.f32.xlu0 %v1940
        %v1942 = vpop.xlane.xlu0 %1941
        %v1943 = vsub.f32 %v1911, %v1921
        %v1944 = vsub.f32 %v1912, %v1924
        %v1945 = vsub.f32 %v1913, %v1927
        %v1946 = vsub.f32 %v1914, %v1930
        %v1947 = vsub.f32 %v1915, %v1933
        %v1948 = vsub.f32 %v1916, %v1936
        %v1949 = vsub.f32 %v1917, %v1939
        %v1950 = vsub.f32 %v1918, %v1942
        %v1951 = vmul.f32 %v1943, 1.442695
        %v1952 = vpow.pop %v1951
        %v1953 = vmul.f32 %v1944, 1.442695
        %v1954 = vpow.pop %v1953
        %v1955 = vmul.f32 %v1945, 1.442695
        %v1956 = vpow.pop %v1955
        %v1957 = vmul.f32 %v1946, 1.442695
        %v1958 = vpow.pop %v1957
        %v1959 = vmul.f32 %v1947, 1.442695
        %v1960 = vpow.pop %v1959
        %v1961 = vmul.f32 %v1948, 1.442695
        %v1962 = vpow.pop %v1961
        %v1963 = vmul.f32 %v1949, 1.442695
        %v1964 = vpow.pop %v1963
        %v1965 = vmul.f32 %v1950, 1.442695
        %v1966 = vpow.pop %v1965
        %v1967 = vsel %vm886, %v1952, 0.0
        %1968 = vadd.xlane.f32.xlu0 %v1967
        %v1969 = vpop.xlane.xlu0 %1968
        %v1970 = vsel %vm886, %v1954, 0.0
        %1971 = vadd.xlane.f32.xlu0 %v1970
        %v1972 = vpop.xlane.xlu0 %1971
        %v1973 = vsel %vm886, %v1956, 0.0
        %1974 = vadd.xlane.f32.xlu0 %v1973
        %v1975 = vpop.xlane.xlu0 %1974
        %v1976 = vsel %vm886, %v1958, 0.0
        %1977 = vadd.xlane.f32.xlu0 %v1976
        %v1978 = vpop.xlane.xlu0 %1977
        %v1979 = vsel %vm886, %v1960, 0.0
        %1980 = vadd.xlane.f32.xlu0 %v1979
        %v1981 = vpop.xlane.xlu0 %1980
        %v1982 = vsel %vm886, %v1962, 0.0
        %1983 = vadd.xlane.f32.xlu0 %v1982
        %v1984 = vpop.xlane.xlu0 %1983
        %v1985 = vsel %vm886, %v1964, 0.0
        %1986 = vadd.xlane.f32.xlu0 %v1985
        %v1987 = vpop.xlane.xlu0 %1986
        %v1988 = vsel %vm886, %v1966, 0.0
        %1989 = vadd.xlane.f32.xlu0 %v1988
        %v1990 = vpop.xlane.xlu0 %1989
        %v1991 = vmul.f32 %v1952, %v806
        %v1992 = vmul.f32 %v1954, %v807
        %v1993 = vmul.f32 %v1956, %v806
        %v1994 = vmul.f32 %v1958, %v807
        %v1995 = vmul.f32 %v1960, %v806
        %v1996 = vmul.f32 %v1962, %v807
        %v1997 = vmul.f32 %v1964, %v806
        %v1998 = vmul.f32 %v1966, %v807
        %v1999 = vsel %vm886, %v1991, 0.0
        %2000 = vadd.xlane.f32.xlu0 %v1999
        %v2001 = vpop.xlane.xlu0 %2000
        %v2002 = vsel %vm886, %v1992, 0.0
        %2003 = vadd.xlane.f32.xlu0 %v2002
        %v2004 = vpop.xlane.xlu0 %2003
        %v2005 = vsel %vm886, %v1993, 0.0
        %2006 = vadd.xlane.f32.xlu0 %v2005
        %v2007 = vpop.xlane.xlu0 %2006
        %v2008 = vsel %vm886, %v1994, 0.0
        %2009 = vadd.xlane.f32.xlu0 %v2008
        %v2010 = vpop.xlane.xlu0 %2009
        %v2011 = vsel %vm886, %v1995, 0.0
        %2012 = vadd.xlane.f32.xlu0 %v2011
        %v2013 = vpop.xlane.xlu0 %2012
        %v2014 = vsel %vm886, %v1996, 0.0
        %2015 = vadd.xlane.f32.xlu0 %v2014
        %v2016 = vpop.xlane.xlu0 %2015
        %v2017 = vsel %vm886, %v1997, 0.0
        %2018 = vadd.xlane.f32.xlu0 %v2017
        %v2019 = vpop.xlane.xlu0 %2018
        %v2020 = vsel %vm886, %v1998, 0.0
        %2021 = vadd.xlane.f32.xlu0 %v2020
        %v2022 = vpop.xlane.xlu0 %2021
        %v2023 = vmul.f32 %v1969, 1e-06
        %v2024 = vmul.f32 %v1972, 1e-06
        %v2025 = vmul.f32 %v1975, 1e-06
        %v2026 = vmul.f32 %v1978, 1e-06
        %v2027 = vmul.f32 %v1981, 1e-06
        %v2028 = vmul.f32 %v1984, 1e-06
        %v2029 = vmul.f32 %v1987, 1e-06
        %v2030 = vmul.f32 %v1990, 1e-06
        %v2031 = vadd.f32 %v2001, %v2023
        %v2032 = vadd.f32 %v2004, %v2024
        %v2033 = vadd.f32 %v2007, %v2025
        %v2034 = vadd.f32 %v2010, %v2026
        %v2035 = vadd.f32 %v2013, %v2027
        %v2036 = vadd.f32 %v2016, %v2028
        %v2037 = vadd.f32 %v2019, %v2029
        %v2038 = vadd.f32 %v2022, %v2030
        %v2039 = vrcp.pop %v2031
        %v2040 = vrcp.pop %v2032
        %v2041 = vrcp.pop %v2033
        %v2042 = vrcp.pop %v2034
        %v2043 = vrcp.pop %v2035
        %v2044 = vrcp.pop %v2036
        %v2045 = vrcp.pop %v2037
        %v2046 = vrcp.pop %v2038
        %v2047 = vmul.f32 %v1991, %v2039
        %v2048 = vmul.f32 %v1992, %v2040
        %v2049 = vmul.f32 %v1993, %v2041
        %v2050 = vmul.f32 %v1994, %v2042
        %v2051 = vmul.f32 %v1995, %v2043
        %v2052 = vmul.f32 %v1996, %v2044
        %v2053 = vmul.f32 %v1997, %v2045
        %v2054 = vmul.f32 %v1998, %v2046
        %v2055 = vpack.c.bf16 %v2047, %v2047
        %v2056 = vpack.c.bf16 %v2048, %v2048
        %v2057 = vpack.c.bf16 %v2049, %v2049
        %v2058 = vpack.c.bf16 %v2050, %v2050
        %v2059 = vpack.c.bf16 %v2051, %v2051
        %v2060 = vpack.c.bf16 %v2052, %v2052
        %v2061 = vpack.c.bf16 %v2053, %v2053
        %v2062 = vpack.c.bf16 %v2054, %v2054
        %2063 = vrot.lane.b32.xlu0 %v1727, 64
        %v2064 = vpop.permute.xlu0 %2063
        %v2066 = vsel %vm886, %v2055, 0
        %v2069 = vsel %vm1231, %v2064, 0
        %2071 = vmatpush.bf16.msra.mxu0 0
        %2072 = vmatpush.bf16.msra.mxu0 0
        %2073 = vmatpush.bf16.msra.mxu0 0
        %2074 = vmatpush.bf16.msra.mxu0 0
        %2075 = vmatpush.bf16.msra.mxu0 0
        %2076 = vmatpush.bf16.msra.mxu0 0
        %2077 = vmatpush.bf16.msra.mxu0 0
        %2078 = vmatpush.bf16.msra.mxu0 %v2069
        %2079 = vmatmul.bf16.gmra.mxu0 %v2066
        %v2080 = vpop.f32.mrf.mxu0
        %v2081 = vadd.f32 0.0, %v2080
        %v2082 = vpop.f32.mrf.mxu0
        %2083 = vdwg.mxu0
        %2084 = vrot.lane.b32.xlu0 %v1751, 64
        %v2085 = vpop.permute.xlu0 %2084
        %v2087 = vsel %vm886, %v2056, 0
        %v2090 = vsel %vm1231, %v2085, 0
        %2092 = vmatpush.bf16.msra.mxu0 0
        %2093 = vmatpush.bf16.msra.mxu0 0
        %2094 = vmatpush.bf16.msra.mxu0 0
        %2095 = vmatpush.bf16.msra.mxu0 0
        %2096 = vmatpush.bf16.msra.mxu0 0
        %2097 = vmatpush.bf16.msra.mxu0 0
        %2098 = vmatpush.bf16.msra.mxu0 0
        %2099 = vmatpush.bf16.msra.mxu0 %v2090
        %2100 = vmatmul.bf16.gmra.mxu0 %v2087
        %v2101 = vpop.f32.mrf.mxu0
        %v2102 = vadd.f32 0.0, %v2101
        %v2103 = vpop.f32.mrf.mxu0
        %2104 = vdwg.mxu0
        %2105 = vrot.lane.b32.xlu0 %v1727, 56
        %v2106 = vpop.permute.xlu0 %2105
        %v2108 = vsel %vm886, %v2057, 0
        %v2111 = vsel %vm1231, %v2106, 0
        %2113 = vmatpush.bf16.msra.mxu0 0
        %2114 = vmatpush.bf16.msra.mxu0 0
        %2115 = vmatpush.bf16.msra.mxu0 0
        %2116 = vmatpush.bf16.msra.mxu0 0
        %2117 = vmatpush.bf16.msra.mxu0 0
        %2118 = vmatpush.bf16.msra.mxu0 0
        %2119 = vmatpush.bf16.msra.mxu0 0
        %2120 = vmatpush.bf16.msra.mxu0 %v2111
        %2121 = vmatmul.bf16.gmra.mxu0 %v2108
        %v2122 = vpop.f32.mrf.mxu0
        %v2123 = vadd.f32 0.0, %v2122
        %v2124 = vpop.f32.mrf.mxu0
        %2125 = vdwg.mxu0
        %2126 = vrot.lane.b32.xlu0 %v1751, 56
        %v2127 = vpop.permute.xlu0 %2126
        %v2129 = vsel %vm886, %v2058, 0
        %v2132 = vsel %vm1231, %v2127, 0
        %2134 = vmatpush.bf16.msra.mxu0 0
        %2135 = vmatpush.bf16.msra.mxu0 0
        %2136 = vmatpush.bf16.msra.mxu0 0
        %2137 = vmatpush.bf16.msra.mxu0 0
        %2138 = vmatpush.bf16.msra.mxu0 0
        %2139 = vmatpush.bf16.msra.mxu0 0
        %2140 = vmatpush.bf16.msra.mxu0 0
        %2141 = vmatpush.bf16.msra.mxu0 %v2132
        %2142 = vmatmul.bf16.gmra.mxu0 %v2129
        %v2143 = vpop.f32.mrf.mxu0
        %v2144 = vadd.f32 0.0, %v2143
        %v2145 = vpop.f32.mrf.mxu0
        %2146 = vdwg.mxu0
        %2147 = vrot.lane.b32.xlu0 %v1727, 48
        %v2148 = vpop.permute.xlu0 %2147
        %v2150 = vsel %vm886, %v2059, 0
        %v2153 = vsel %vm1231, %v2148, 0
        %2155 = vmatpush.bf16.msra.mxu0 0
        %2156 = vmatpush.bf16.msra.mxu0 0
        %2157 = vmatpush.bf16.msra.mxu0 0
        %2158 = vmatpush.bf16.msra.mxu0 0
        %2159 = vmatpush.bf16.msra.mxu0 0
        %2160 = vmatpush.bf16.msra.mxu0 0
        %2161 = vmatpush.bf16.msra.mxu0 0
        %2162 = vmatpush.bf16.msra.mxu0 %v2153
        %2163 = vmatmul.bf16.gmra.mxu0 %v2150
        %v2164 = vpop.f32.mrf.mxu0
        %v2165 = vadd.f32 0.0, %v2164
        %v2166 = vpop.f32.mrf.mxu0
        %2167 = vdwg.mxu0
        %2168 = vrot.lane.b32.xlu0 %v1751, 48
        %v2169 = vpop.permute.xlu0 %2168
        %v2171 = vsel %vm886, %v2060, 0
        %v2174 = vsel %vm1231, %v2169, 0
        %2176 = vmatpush.bf16.msra.mxu0 0
        %2177 = vmatpush.bf16.msra.mxu0 0
        %2178 = vmatpush.bf16.msra.mxu0 0
        %2179 = vmatpush.bf16.msra.mxu0 0
        %2180 = vmatpush.bf16.msra.mxu0 0
        %2181 = vmatpush.bf16.msra.mxu0 0
        %2182 = vmatpush.bf16.msra.mxu0 0
        %2183 = vmatpush.bf16.msra.mxu0 %v2174
        %2184 = vmatmul.bf16.gmra.mxu0 %v2171
        %v2185 = vpop.f32.mrf.mxu0
        %v2186 = vadd.f32 0.0, %v2185
        %v2187 = vpop.f32.mrf.mxu0
        %2188 = vdwg.mxu0
        %2189 = vrot.lane.b32.xlu0 %v1727, 40
        %v2190 = vpop.permute.xlu0 %2189
        %v2192 = vsel %vm886, %v2061, 0
        %v2195 = vsel %vm1231, %v2190, 0
        %2197 = vmatpush.bf16.msra.mxu0 0
        %2198 = vmatpush.bf16.msra.mxu0 0
        %2199 = vmatpush.bf16.msra.mxu0 0
        %2200 = vmatpush.bf16.msra.mxu0 0
        %2201 = vmatpush.bf16.msra.mxu0 0
        %2202 = vmatpush.bf16.msra.mxu0 0
        %2203 = vmatpush.bf16.msra.mxu0 0
        %2204 = vmatpush.bf16.msra.mxu0 %v2195
        %2205 = vmatmul.bf16.gmra.mxu0 %v2192
        %v2206 = vpop.f32.mrf.mxu0
        %v2207 = vadd.f32 0.0, %v2206
        %v2208 = vpop.f32.mrf.mxu0
        %2209 = vdwg.mxu0
        %2210 = vrot.lane.b32.xlu0 %v1751, 40
        %v2211 = vpop.permute.xlu0 %2210
        %v2213 = vsel %vm886, %v2062, 0
        %v2216 = vsel %vm1231, %v2211, 0
        %2218 = vmatpush.bf16.msra.mxu0 0
        %2219 = vmatpush.bf16.msra.mxu0 0
        %2220 = vmatpush.bf16.msra.mxu0 0
        %2221 = vmatpush.bf16.msra.mxu0 0
        %2222 = vmatpush.bf16.msra.mxu0 0
        %2223 = vmatpush.bf16.msra.mxu0 0
        %2224 = vmatpush.bf16.msra.mxu0 0
        %2225 = vmatpush.bf16.msra.mxu0 %v2216
        %2226 = vmatmul.bf16.gmra.mxu0 %v2213
        %v2227 = vpop.f32.mrf.mxu0
        %v2228 = vadd.f32 0.0, %v2227
        %v2229 = vpop.f32.mrf.mxu0
        %2230 = vdwg.mxu0
        %2233 = vrot.lane.b32.xlu0 %v2123, 8
        %v2234 = vpop.permute.xlu0 %2233
        %2235 = vrot.lane.b32.xlu0 %v2144, 8
        %v2236 = vpop.permute.xlu0 %2235
        %2241 = vrot.lane.b32.xlu0 %v2165, 16
        %v2242 = vpop.permute.xlu0 %2241
        %2243 = vrot.lane.b32.xlu0 %v2186, 16
        %v2244 = vpop.permute.xlu0 %2243
        %2249 = vrot.lane.b32.xlu0 %v2207, 24
        %v2250 = vpop.permute.xlu0 %2249
        %2251 = vrot.lane.b32.xlu0 %v2228, 24
        %v2252 = vpop.permute.xlu0 %2251
        %v2255 = vsel %vm886, %v2081, %v2234
        %v2256 = vsel %vm886, %v2102, %v2236
        %v2257 = vsel %vm1421, %v2255, %v2242
        %v2258 = vsel %vm1421, %v2256, %v2244
        %v2259 = vsel %vm1424, %v2257, %v2250
        %v2260 = vsel %vm1424, %v2258, %v2252
        %s2261 = scalar_lea.vmem %s6, 16
        %v2262 = vld [vmem:[%s2261] sm:$0xf]
        %v2263 = vld [vmem:[%s2261 + $0x4] sm:$0xf]
        %v2264 = vld [vmem:[%s2261 + $0x8] sm:$0xf]
        %v2265 = vld [vmem:[%s2261 + $0xc] sm:$0xf]
        %v2266 = vpack.c.bf16 %v2260, %v2259
        %s2267 = scalar_lea.vmem %s7, 1
        %v2268 = vld [vmem:[%s2267] sm:$0x1]
        %v2270 = vperm.slane %v2268, 0
        %v2276 = vunpack.c.l.b16 %v2262
        %v2277 = vunpack.c.l.b16 %v2263
        %v2278 = vunpack.c.l.b16 %v2264
        %v2279 = vunpack.c.l.b16 %v2265
        %v2280 = vpack.c.b16 %v2277, %v2276
        %v2281 = vpack.c.b16 %v2279, %v2278
        %v2285 = vsel %vm861, %v2266, 0
        %2287 = vmatpush.bf16.msra.mxu0 0
        %2288 = vmatpush.bf16.msra.mxu0 0
        %2289 = vmatpush.bf16.msra.mxu0 0
        %2290 = vmatpush.bf16.msra.mxu0 0
        %2291 = vmatpush.bf16.msra.mxu0 0
        %2292 = vmatpush.bf16.msra.mxu0 0
        %2293 = vmatpush.bf16.msra.mxu0 %v2281
        %2294 = vmatpush.bf16.msra.mxu0 %v2280
        %2295 = vmatmul.bf16.gmra.mxu0 %v2285
        %v2296 = vpop.f32.mrf.mxu0
        %v2297 = vadd.f32 %v2270, %v2296
        %v2298 = vpop.f32.mrf.mxu0
        %v2299 = vadd.f32 %v2270, %v2298
        %2300 = vdwg.mxu0
        %v2301 = vadd.f32 %v1681, %v2297
        %v2302 = vadd.f32 %v1682, %v2299
        %s2303 = scalar_lea.vmem [#allocation6], 1
        %v2304 = vld [vmem:[%s2303] sm:$0x1]
        %s2305 = scalar_lea.vmem [#allocation7], 1
        %v2306 = vld [vmem:[%s2305] sm:$0x1]
        %v2307 = vsel %vm861, %v2301, 0.0
        %2308 = vadd.xlane.f32.xlu0 %v2307
        %v2309 = vpop.xlane.xlu0 %2308
        %v2310 = vsel %vm861, %v2302, 0.0
        %2311 = vadd.xlane.f32.xlu0 %v2310
        %v2312 = vpop.xlane.xlu0 %2311
        %v2313 = vmul.f32 %v2309, %v1481
        %v2314 = vmul.f32 %v2312, %v1481
        %v2315 = vsub.f32 %v2301, %v2313
        %v2316 = vsub.f32 %v2302, %v2314
        %v2317 = vmul.f32 %v2315, %v2315
        %v2318 = vmul.f32 %v2316, %v2316
        %v2319 = vsel %vm861, %v2317, 0.0
        %2320 = vadd.xlane.f32.xlu0 %v2319
        %v2321 = vpop.xlane.xlu0 %2320
        %v2322 = vsel %vm861, %v2318, 0.0
        %2323 = vadd.xlane.f32.xlu0 %v2322
        %v2324 = vpop.xlane.xlu0 %2323
        %v2325 = vmul.f32 %v2321, %v1481
        %v2326 = vmul.f32 %v2324, %v1481
        %v2327 = vadd.f32 %v2325, 1e-05
        %v2328 = vadd.f32 %v2326, 1e-05
        %v2329 = vrsqrt.pop %v2327
        %v2330 = vmul.f32 %v2329, %v2327
        %v2331 = vmul.f32 %v2330, %v2329
        %v2332 = vmul.f32 0.5, %v2331
        %v2333 = vsub.f32 1.5, %v2332
        %v2334 = vmul.f32 %v2329, %v2333
        %vm2335 = vweird.f32 %v2327
        %vm2336 = vweird.f32 %v2329
        %vm2337 = vmor %vm2335, %vm2336
        %v2338 = vsel %vm2337, %v2329, %v2334
        %v2339 = vrsqrt.pop %v2328
        %v2340 = vmul.f32 %v2339, %v2328
        %v2341 = vmul.f32 %v2340, %v2339
        %v2342 = vmul.f32 0.5, %v2341
        %v2343 = vsub.f32 1.5, %v2342
        %v2344 = vmul.f32 %v2339, %v2343
        %vm2345 = vweird.f32 %v2328
        %vm2346 = vweird.f32 %v2339
        %vm2347 = vmor %vm2345, %vm2346
        %v2348 = vsel %vm2347, %v2339, %v2344
        %v2349 = vmul.f32 %v2315, %v2338
        %v2350 = vmul.f32 %v2316, %v2348
        %v2352 = vperm.slane %v2304, 0
        %v2354 = vmul.f32 %v2349, %v2352
        %v2355 = vmul.f32 %v2350, %v2352
        %v2357 = vperm.slane %v2306, 0
        %v2359 = vadd.f32 %v2354, %v2357
        %v2360 = vadd.f32 %v2355, %v2357
        %s2361 = scalar_lea.vmem %s8, 16
        %v2362 = vld [vmem:[%s2361] sm:$0xf]
        %v2363 = vld [vmem:[%s2361 + $0x4] sm:$0xf]
        %v2364 = vld [vmem:[%s2361 + $0x8] sm:$0xf]
        %v2365 = vld [vmem:[%s2361 + $0xc] sm:$0xf]
        %v2366 = vpack.c.bf16 %v2360, %v2359
        %s2367 = scalar_lea.vmem [#allocation2], 1
        %v2368 = vld [vmem:[%s2367] sm:$0x1]
        %v2370 = vperm.slane %v2368, 0
        %v2376 = vunpack.c.l.b16 %v2362
        %v2377 = vunpack.c.l.b16 %v2363
        %v2378 = vunpack.c.l.b16 %v2364
        %v2379 = vunpack.c.l.b16 %v2365
        %v2380 = vpack.c.b16 %v2377, %v2376
        %v2381 = vpack.c.b16 %v2379, %v2378
        %v2385 = vsel %vm861, %v2366, 0
        %2387 = vmatpush.bf16.msra.mxu0 0
        %2388 = vmatpush.bf16.msra.mxu0 0
        %2389 = vmatpush.bf16.msra.mxu0 0
        %2390 = vmatpush.bf16.msra.mxu0 0
        %2391 = vmatpush.bf16.msra.mxu0 0
        %2392 = vmatpush.bf16.msra.mxu0 0
        %2393 = vmatpush.bf16.msra.mxu0 %v2381
        %2394 = vmatpush.bf16.msra.mxu0 %v2380
        %2395 = vmatmul.bf16.gmra.mxu0 %v2385
        %v2396 = vpop.f32.mrf.mxu0
        %v2397 = vadd.f32 %v2370, %v2396
        %v2398 = vpop.f32.mrf.mxu0
        %v2399 = vadd.f32 %v2370, %v2398
        %2400 = vdwg.mxu0
        %v2401 = vmax.f32 %v2397, 0.0
        %v2402 = vmax.f32 %v2399, 0.0
        %s2403 = scalar_lea.vmem %s10, 32
        %v2404 = vld [vmem:[%s2403] sm:$0xf]
        %v2405 = vld [vmem:[%s2403 + $0x4] sm:$0xf]
        %v2406 = vld [vmem:[%s2403 + $0x8] sm:$0xf]
        %v2407 = vld [vmem:[%s2403 + $0xc] sm:$0xf]
        %v2408 = vld [vmem:[%s2403 + $0x10] sm:$0xf]
        %v2409 = vld [vmem:[%s2403 + $0x14] sm:$0xf]
        %v2410 = vld [vmem:[%s2403 + $0x18] sm:$0xf]
        %v2411 = vld [vmem:[%s2403 + $0x1c] sm:$0xf]
        %v2412 = vpack.c.bf16 %v2402, %v2401
        %s2413 = scalar_lea.vmem [#allocation4], 1
        %v2414 = vld [vmem:[%s2413] sm:$0x1]
        %v2416 = vperm.slane %v2414, 0
        %v2426 = vunpack.c.l.b16 %v2404
        %v2427 = vunpack.c.l.b16 %v2405
        %v2428 = vunpack.c.l.b16 %v2406
        %v2429 = vunpack.c.l.b16 %v2407
        %v2430 = vunpack.c.l.b16 %v2408
        %v2431 = vunpack.c.l.b16 %v2409
        %v2432 = vunpack.c.l.b16 %v2410
        %v2433 = vunpack.c.l.b16 %v2411
        %v2434 = vpack.c.b16 %v2427, %v2426
        %v2435 = vpack.c.b16 %v2429, %v2428
        %v2436 = vpack.c.b16 %v2431, %v2430
        %v2437 = vpack.c.b16 %v2433, %v2432
        %v2443 = vsel %vm1607, %v2412, 0
        %2445 = vmatpush.bf16.msra.mxu0 0
        %2446 = vmatpush.bf16.msra.mxu0 0
        %2447 = vmatpush.bf16.msra.mxu0 0
        %2448 = vmatpush.bf16.msra.mxu0 0
        %2449 = vmatpush.bf16.msra.mxu0 %v2437
        %2450 = vmatpush.bf16.msra.mxu0 %v2436
        %2451 = vmatpush.bf16.msra.mxu0 %v2435
        %2452 = vmatpush.bf16.msra.mxu0 %v2434
        %2453 = vmatmul.bf16.gmra.mxu0 %v2443
        %v2454 = vpop.f32.mrf.mxu0
        %v2455 = vadd.f32 %v2416, %v2454
        %v2456 = vpop.f32.mrf.mxu0
        %v2457 = vadd.f32 %v2416, %v2456
        %2458 = vdwg.mxu0
        %v2459 = vadd.f32 %v2359, %v2455
        %v2460 = vadd.f32 %v2360, %v2457
        %s2461 = scalar_lea.vmem [#allocation9], 1
        %v2462 = vld [vmem:[%s2461] sm:$0x1]
        %s2463 = scalar_lea.vmem [#allocation10], 1
        %v2464 = vld [vmem:[%s2463] sm:$0x1]
        %v2465 = vsel %vm861, %v2459, 0.0
        %2466 = vadd.xlane.f32.xlu0 %v2465
        %v2467 = vpop.xlane.xlu0 %2466
        %v2468 = vsel %vm861, %v2460, 0.0
        %2469 = vadd.xlane.f32.xlu0 %v2468
        %v2470 = vpop.xlane.xlu0 %2469
        %v2471 = vmul.f32 %v2467, %v1481
        %v2472 = vmul.f32 %v2470, %v1481
        %v2473 = vsub.f32 %v2459, %v2471
        %v2474 = vsub.f32 %v2460, %v2472
        %v2475 = vmul.f32 %v2473, %v2473
        %v2476 = vmul.f32 %v2474, %v2474
        %v2477 = vsel %vm861, %v2475, 0.0
        %2478 = vadd.xlane.f32.xlu0 %v2477
        %v2479 = vpop.xlane.xlu0 %2478
        %v2480 = vsel %vm861, %v2476, 0.0
        %2481 = vadd.xlane.f32.xlu0 %v2480
        %v2482 = vpop.xlane.xlu0 %2481
        %v2483 = vmul.f32 %v2479, %v1481
        %v2484 = vmul.f32 %v2482, %v1481
        %v2485 = vadd.f32 %v2483, 1e-05
        %v2486 = vadd.f32 %v2484, 1e-05
        %v2487 = vrsqrt.pop %v2485
        %v2488 = vmul.f32 %v2487, %v2485
        %v2489 = vmul.f32 %v2488, %v2487
        %v2490 = vmul.f32 0.5, %v2489
        %v2491 = vsub.f32 1.5, %v2490
        %v2492 = vmul.f32 %v2487, %v2491
        %vm2493 = vweird.f32 %v2485
        %vm2494 = vweird.f32 %v2487
        %vm2495 = vmor %vm2493, %vm2494
        %v2496 = vsel %vm2495, %v2487, %v2492
        %v2497 = vrsqrt.pop %v2486
        %v2498 = vmul.f32 %v2497, %v2486
        %v2499 = vmul.f32 %v2498, %v2497
        %v2500 = vmul.f32 0.5, %v2499
        %v2501 = vsub.f32 1.5, %v2500
        %v2502 = vmul.f32 %v2497, %v2501
        %vm2503 = vweird.f32 %v2486
        %vm2504 = vweird.f32 %v2497
        %vm2505 = vmor %vm2503, %vm2504
        %v2506 = vsel %vm2505, %v2497, %v2502
        %v2507 = vmul.f32 %v2473, %v2496
        %v2508 = vmul.f32 %v2474, %v2506
        %v2510 = vperm.slane %v2462, 0
        %v2512 = vmul.f32 %v2507, %v2510
        %v2513 = vmul.f32 %v2508, %v2510
        %v2515 = vperm.slane %v2464, 0
        %v2517 = vadd.f32 %v2512, %v2515
        %v2518 = vadd.f32 %v2513, %v2515
        %v2519 = vld [vmem:[%s16] sm:$0xf]
        %v2520 = vld [vmem:[%s16 + $0x4] sm:$0xf]
        %v2521 = vld [vmem:[%s16 + $0x8] sm:$0xf]
        %v2522 = vld [vmem:[%s16 + $0xc] sm:$0xf]
        %v2523 = vpack.c.bf16 %v2518, %v2517
        %v2524 = vld [vmem:[#allocation12] sm:$0x1]
        %v2526 = vperm.slane %v2524, 0
        %v2532 = vunpack.c.l.b16 %v2519
        %v2533 = vunpack.c.l.b16 %v2520
        %v2534 = vunpack.c.l.b16 %v2521
        %v2535 = vunpack.c.l.b16 %v2522
        %v2536 = vpack.c.b16 %v2533, %v2532
        %v2537 = vpack.c.b16 %v2535, %v2534
        %v2541 = vsel %vm861, %v2523, 0
        %2543 = vmatpush.bf16.msra.mxu0 0
        %2544 = vmatpush.bf16.msra.mxu0 0
        %2545 = vmatpush.bf16.msra.mxu0 0
        %2546 = vmatpush.bf16.msra.mxu0 0
        %2547 = vmatpush.bf16.msra.mxu0 0
        %2548 = vmatpush.bf16.msra.mxu0 0
        %2549 = vmatpush.bf16.msra.mxu0 %v2537
        %2550 = vmatpush.bf16.msra.mxu0 %v2536
        %2551 = vmatmul.bf16.gmra.mxu0 %v2541
        %v2552 = vpop.f32.mrf.mxu0
        %v2553 = vadd.f32 %v2526, %v2552
        %v2554 = vpop.f32.mrf.mxu0
        %v2555 = vadd.f32 %v2526, %v2554
        %2556 = vdwg.mxu0
        %v2557 = vmax.f32 %v2553, 0.0
        %v2558 = vmax.f32 %v2555, 0.0
        %v2559 = vld [vmem:[%s18] sm:$0xf]
        %v2560 = vld [vmem:[%s18 + $0x4] sm:$0xf]
        %v2561 = vld [vmem:[%s18 + $0x8] sm:$0xf]
        %v2562 = vld [vmem:[%s18 + $0xc] sm:$0xf]
        %v2563 = vpack.c.bf16 %v2558, %v2557
        %v2564 = vld [vmem:[#allocation13] sm:$0x1]
        %v2566 = vperm.slane %v2564, 0
        %v2572 = vunpack.c.l.b16 %v2559
        %v2573 = vunpack.c.l.b16 %v2560
        %v2574 = vunpack.c.l.b16 %v2561
        %v2575 = vunpack.c.l.b16 %v2562
        %v2576 = vpack.c.b16 %v2573, %v2572
        %v2577 = vpack.c.b16 %v2575, %v2574
        %v2581 = vsel %vm861, %v2563, 0
        %2583 = vmatpush.bf16.msra.mxu0 0
        %2584 = vmatpush.bf16.msra.mxu0 0
        %2585 = vmatpush.bf16.msra.mxu0 0
        %2586 = vmatpush.bf16.msra.mxu0 0
        %2587 = vmatpush.bf16.msra.mxu0 0
        %2588 = vmatpush.bf16.msra.mxu0 0
        %2589 = vmatpush.bf16.msra.mxu0 %v2577
        %2590 = vmatpush.bf16.msra.mxu0 %v2576
        %2591 = vmatmul.bf16.gmra.mxu0 %v2581
        %v2592 = vpop.f32.mrf.mxu0
        %v2593 = vadd.f32 %v2566, %v2592
        %v2594 = vpop.f32.mrf.mxu0
        %v2595 = vadd.f32 %v2566, %v2594
        %2596 = vdwg.mxu0
        %v2597 = vpack.c.bf16 %v2593, %v2593
        %v2598 = vpack.c.bf16 %v2595, %v2595
        %2599 = vst [vmem:[%s801] sm:$0xf] %v2597
        %2600 = vst [vmem:[%s801 + $0x4] sm:$0xf] %v2598
        %s2601 = smul.u32 2, %s36
        %p2602 = scmp.lt.s32.totalorder %s2601, 3
        %s2603 = scalar_select %p2602, %s2601, 3
        %s2604 = smul.addr %s2603, 4
        %s2605 = scalar_lea.vmem %s20, %s2604
        // Predicated region
        $region133: #{_forward_core.1} parent=99 // pred_check
          %p2606 = pneg %p489
        $region134: #{_forward_core.1} parent=99 // pred_check_branch
          %2608 = sbr.rel (%p2606) target = $region136
        $region135: #{_forward_core.1} parent=99 // pred_region
          %s2609 = smul.u32 2, %s36
        $region136: #{_forward_core.1} parent=99 // pred_fallthru
          _
      $region100: #{_forward_core.1} parent=5 // pred_fallthru
        _
      %p2610 = scmp.le.s32.totalorder 2, %s31
      // Predicated region
      $region137: #{_forward_core.1} parent=5 // pred_check
        %p2611 = pneg %p2610
      $region138: #{_forward_core.1} parent=5 // pred_check_branch
        %2613 = sbr.rel (%p2611) target = $region140
      $region139: #{_forward_core.1} parent=5 // pred_region
        %s2614 = ssub.s32 %s31, 2
        // Predicated region
        $region141: #{_forward_core.1} parent=139 // pred_check
          %p2615 = pneg %p495
        $region142: #{_forward_core.1} parent=139 // pred_check_branch
          %2617 = sbr.rel (%p2615) target = $region144
        $region143: #{_forward_core.1} parent=139 // pred_region
          %s2618 = smul.u32 2, %s37
          %p2619 = scmp.lt.s32.totalorder %s2618, 3
          %s2620 = scalar_select %p2619, %s2618, 3
          %s2621 = smul.addr %s2620, 4
          %s2622 = scalar_lea.vmem %s20, %s2621
        $region144: #{_forward_core.1} parent=139 // pred_fallthru
          _
      $region140: #{_forward_core.1} parent=5 // pred_fallthru
        _
    $region6: #{_forward_core.1} parent=1 // loop_footer
      %s35 = sadd.s32 1, %s31
    $region7: #{_forward_core.1} parent=1 // loop_footer_branch
      %30 = sbr.rel target = $region3
    $region8: #{_forward_core.1} parent=1 // loop_exit
      _
    %2623 = vsyncpa [#allocation3], 1
    %s2624 = scalar_lea.sflag [#allocation3], 1
    %2625 = vsyncpa %s2624, 1
    %2626 = vsyncpa [#allocation5], 1
    %2627 = vsyncpa [#allocation8], 1
    %2628 = vsyncpa [#allocation11], 1
    %2629 = vsyncpa [#allocation14], 1

</llo_original>
